<compile_context>
chip_gen: v7x
topology: tpu7x:2x2x1
jax: 0.10.0
libtpu: 0.0.40
codegen_flags: <defaults>
</compile_context>

<pallas_src>
import jax
import jax.numpy as jnp
from jax import lax
from jax.experimental import pallas as pl
from jax.experimental.pallas import tpu as pltpu

# ---- small, module-consistent sizes ----
SEQ_LEN = 4
BATCH = 8
SRC_LEN = 10
WVEC = 16          # opt.word_vec_size
RNN = 32           # opt.rnn_size
NUM_LAYERS = 2     # opt.layers
VOCAB = 50
PAD = 0            # lb.Constants.PAD
INPUT_FEED = True  # opt.input_feed
IN_SIZE = WVEC + RNN if INPUT_FEED else WVEC


def _gate_act(gates, c_prev):
    """PyTorch LSTMCell gate order i, f, g, o.

    Full-vreg sigmoid + tanh over the (B, 4*RNN)=(8,128) pre-activations
    (2 EUP passes instead of 4 quarter-lane passes), then lane slices.
    """
    sg = jax.nn.sigmoid(gates)
    th = jnp.tanh(gates)
    i_g = sg[:, 0 * RNN:1 * RNN]
    f_g = sg[:, 1 * RNN:2 * RNN]
    g_g = th[:, 2 * RNN:3 * RNN]
    o_g = sg[:, 3 * RNN:4 * RNN]
    c_new = f_g * c_prev + i_g * g_g
    h_new = o_g * jnp.tanh(c_new)
    return h_new, c_new


def decoder_kernel(emb_ref, out0_ref, h0_ref, c0_ref, ctx_ref, ctxlin_ref,
                   w0_ref, b0_ref, w1_ref, b1_ref, wout_ref,
                   out_ref):
    seq_len = emb_ref.shape[0]

    # Hoist weight / context loads out of the time loop (loaded once).
    w0 = w0_ref[...]          # (WVEC + 2*RNN, 4*RNN)  fused [Wih0.T ; Whh0.T]
    b0 = b0_ref[...]          # (1, 4*RNN)             b_ih0 + b_hh0
    w1 = w1_ref[...]          # (2*RNN, 4*RNN)         fused [Wih1.T ; Whh1.T]
    b1 = b1_ref[...]          # (1, 4*RNN)
    wout = wout_ref[...]      # (2*RNN, RNN)           linear_out.T
    ctx = ctx_ref[...]        # (B, S, RNN)
    ctx_lin = ctxlin_ref[...]  # (B, S, RNN) = context @ W_in   (linear_in hoisted)

    init = (out0_ref[...],    # input-feed output
            h0_ref[0], c0_ref[0],   # layer 0 state
            h0_ref[1], c0_ref[1])   # layer 1 state

    def step(t, carry):
        prev_out, h_l0, c_l0, h_l1, c_l1 = carry
        emb = emb_ref[t]                                        # (B, WVEC)

        # ---- StackedLSTM, layer 0 (fused single matmul per layer) ----
        # input feed: x = cat([emb, prev_output]); fused with recurrent term.
        x0 = jnp.concatenate([emb, prev_out, h_l0], axis=1)     # (B, WVEC+2*RNN)
        g0 = jnp.dot(x0, w0, preferred_element_type=jnp.float32) + b0
        h_l0, c_l0 = _gate_act(g0, c_l0)

        # ---- layer 1 (inter-layer dropout = identity in eval mode) ----
        x1 = jnp.concatenate([h_l0, h_l1], axis=1)              # (B, 2*RNN)
        g1 = jnp.dot(x1, w1, preferred_element_type=jnp.float32) + b1
        h_l1, c_l1 = _gate_act(g1, c_l1)
        rnn_out = h_l1                                          # (B, RNN)

        # ---- GlobalAttention (Luong); linear_in hoisted into ctx_lin ----
        scores = jnp.sum(ctx_lin * rnn_out[:, None, :], axis=2)  # (B, S)
        scores = scores - jnp.max(scores, axis=1, keepdims=True)
        e = jnp.exp(scores)
        attn = e * pl.reciprocal(jnp.sum(e, axis=1, keepdims=True), approx=True)
        wctx = jnp.sum(attn[:, :, None] * ctx, axis=1)           # (B, RNN)
        combined = jnp.concatenate([wctx, rnn_out], axis=1)      # (B, 2*RNN)
        new_out = jnp.tanh(jnp.dot(combined, wout,
                                   preferred_element_type=jnp.float32))
        # TODO(synk): dropout layers are identity here (eval mode); no RNG-matched dropout.

        out_ref[t] = new_out                                     # (B, RNN) store
        return (new_out, h_l0, c_l0, h_l1, c_l1)

    lax.fori_loop(0, seq_len, step, init, unroll=True)


def decoder_forward(tokens, emb0, out0, h0, c0, context, params):
    (word_lut, W_ih0, W_hh0, b_ih0, b_hh0,
     W_ih1, W_hh1, b_ih1, b_hh1, W_in, W_out) = params

    seq_len, batch = tokens.shape

    # glue: embedding gather + time shift (step 0 uses init emb, step i uses embs[i-1])
    embs = word_lut[tokens]                                     # (S, B, WVEC)
    emb_seq = jnp.concatenate([emb0[None], embs[:-1]], axis=0)

    # fuse the two per-layer gate matmuls: [x | h] @ [Wih.T ; Whh.T] + (b_ih + b_hh)
    w0 = jnp.concatenate([W_ih0.T, W_hh0.T], axis=0)            # (WVEC+2*RNN, 4*RNN)
    b0 = (b_ih0 + b_hh0).reshape(1, -1)
    w1 = jnp.concatenate([W_ih1.T, W_hh1.T], axis=0)            # (2*RNN, 4*RNN)
    b1 = (b_ih1 + b_hh1).reshape(1, -1)
    wout = W_out.T                                              # (2*RNN, RNN)

    # hoist attention linear_in out of the per-step loop:
    #   <ctx[b,s], rnn_out @ W_in.T>  ==  <ctx[b,s] @ W_in, rnn_out>
    ctx_lin = context @ W_in                                    # (B, S, RNN)

    inputs = (emb_seq, out0, h0, c0, context, ctx_lin,
              w0, b0, w1, b1, wout)

    def full_spec(a):
        return pl.BlockSpec(a.shape, lambda i, nd=a.ndim: (0,) * nd)

    return pl.pallas_call(
        decoder_kernel,
        out_shape=jax.ShapeDtypeStruct((seq_len, batch, RNN), jnp.float32),
        grid_spec=pltpu.PrefetchScalarGridSpec(
            num_scalar_prefetch=0,
            grid=(1,),                                # single invocation; time loop in-kernel
            in_specs=[full_spec(a) for a in inputs],
            out_specs=pl.BlockSpec((seq_len, batch, RNN), lambda i: (0, 0, 0)),
        ),
        compiler_params=pltpu.CompilerParams(
            dimension_semantics=("arbitrary",)),
    )(*inputs)


# ------------------ pure-JAX reference (for correctness check) ------------------
def decoder_reference(tokens, emb0, out0, h0, c0, context, params):
    (word_lut, W_ih0, W_hh0, b_ih0, b_hh0,
     W_ih1, W_hh1, b_ih1, b_hh1, W_in, W_out) = params
    embs = word_lut[tokens]
    emb, output, h, c = emb0, out0, h0, c0

    def cell(x, h_, c_, Wih, Whh, bih, bhh):
        g = x @ Wih.T + bih + h_ @ Whh.T + bhh
        i_g, f_g, g_g, o_g = jnp.split(g, 4, axis=1)
        c_new = jax.nn.sigmoid(f_g) * c_ + jax.nn.sigmoid(i_g) * jnp.tanh(g_g)
        h_new = jax.nn.sigmoid(o_g) * jnp.tanh(c_new)
        return h_new, c_new

    outs = []
    for i in range(tokens.shape[0]):
        x = jnp.concatenate([emb, output], axis=1)
        h0n, c0n = cell(x, h[0], c[0], W_ih0, W_hh0, b_ih0, b_hh0)
        h1n, c1n = cell(h0n, h[1], c[1], W_ih1, W_hh1, b_ih1, b_hh1)
        h = jnp.stack([h0n, h1n]); c = jnp.stack([c0n, c1n])
        rnn_out = h1n
        target = rnn_out @ W_in.T
        scores = jnp.einsum('bsd,bd->bs', context, target)
        attn = jax.nn.softmax(scores, axis=1)
        wctx = jnp.einsum('bs,bsd->bd', attn, context)
        output = jnp.tanh(jnp.concatenate([wctx, rnn_out], axis=1) @ W_out.T)
        outs.append(output)
        emb = embs[i]
    return jnp.stack(outs)


if __name__ == "__main__":
    key = jax.random.PRNGKey(0)
    ks = jax.random.split(key, 20)

    def rnd(k, shape, scale=0.1):
        return scale * jax.random.normal(k, shape, dtype=jnp.float32)

    # deterministic parameter init (shapes from Decoder.__init__ / nn.LSTMCell / GlobalAttention)
    word_lut = rnd(ks[0], (VOCAB, WVEC)).at[PAD].set(0.0)
    W_ih0 = rnd(ks[1], (4 * RNN, IN_SIZE)); W_hh0 = rnd(ks[2], (4 * RNN, RNN))
    b_ih0 = rnd(ks[3], (4 * RNN,));         b_hh0 = rnd(ks[4], (4 * RNN,))
    W_ih1 = rnd(ks[5], (4 * RNN, RNN));     W_hh1 = rnd(ks[6], (4 * RNN, RNN))
    b_ih1 = rnd(ks[7], (4 * RNN,));         b_hh1 = rnd(ks[8], (4 * RNN,))
    W_in  = rnd(ks[9], (RNN, RNN))          # attn.linear_in (no bias)
    W_out = rnd(ks[10], (RNN, 2 * RNN))     # attn.linear_out (no bias)
    params = (word_lut, W_ih0, W_hh0, b_ih0, b_hh0,
              W_ih1, W_hh1, b_ih1, b_hh1, W_in, W_out)

    # example inputs / init_states
    tokens  = jax.random.randint(ks[11], (SEQ_LEN, BATCH), 1, VOCAB, dtype=jnp.int32)
    emb0    = rnd(ks[12], (BATCH, WVEC))
    out0    = rnd(ks[13], (BATCH, RNN))
    h0      = rnd(ks[14], (NUM_LAYERS, BATCH, RNN))
    c0      = rnd(ks[15], (NUM_LAYERS, BATCH, RNN))
    context = rnd(ks[16], (BATCH, SRC_LEN, RNN))

    out = decoder_forward(tokens, emb0, out0, h0, c0, context, params)
    out = jax.block_until_ready(out)

    ref = decoder_reference(tokens, emb0, out0, h0, c0, context, params)
    assert out.shape == (SEQ_LEN, BATCH, RNN)
    max_err = float(jnp.max(jnp.abs(out - ref)))
    # tolerance loosened (approx reciprocal in softmax denom), per review
    assert jnp.allclose(out, ref, rtol=2e-3, atol=2e-3), max_err

    print("KERNEL_OK")
</pallas_src>

<mosaic_0001>
module attributes {stable_mosaic.version = 11 : i64} {
  func.func @decoder_kernel(%arg0: i32, %arg1: memref<4x8x16xf32, #tpu.memory_space<vmem>>, %arg2: memref<8x32xf32, #tpu.memory_space<vmem>>, %arg3: memref<2x8x32xf32, #tpu.memory_space<vmem>>, %arg4: memref<2x8x32xf32, #tpu.memory_space<vmem>>, %arg5: memref<8x10x32xf32, #tpu.memory_space<vmem>>, %arg6: memref<8x10x32xf32, #tpu.memory_space<vmem>>, %arg7: memref<80x128xf32, #tpu.memory_space<vmem>>, %arg8: memref<1x128xf32, #tpu.memory_space<vmem>>, %arg9: memref<64x128xf32, #tpu.memory_space<vmem>>, %arg10: memref<1x128xf32, #tpu.memory_space<vmem>>, %arg11: memref<64x32xf32, #tpu.memory_space<vmem>>, %arg12: memref<4x8x32xf32, #tpu.memory_space<vmem>>) attributes {dimension_semantics = [#tpu.dimension_semantics<arbitrary>], iteration_bounds = array<i64: 1>, scalar_prefetch = 0 : i64, scratch_operands = 0 : i64, tpu.core_type = #tpu.core_type<tc>, window_params = [{pipeline_mode = #tpu.pipeline_mode<synchronous>, transform_indices = @transform_0, window_bounds = array<i64: 4, 8, 16>}, {pipeline_mode = #tpu.pipeline_mode<synchronous>, transform_indices = @transform_1, window_bounds = array<i64: 8, 32>}, {pipeline_mode = #tpu.pipeline_mode<synchronous>, transform_indices = @transform_2, window_bounds = array<i64: 2, 8, 32>}, {pipeline_mode = #tpu.pipeline_mode<synchronous>, transform_indices = @transform_3, window_bounds = array<i64: 2, 8, 32>}, {pipeline_mode = #tpu.pipeline_mode<synchronous>, transform_indices = @transform_4, window_bounds = array<i64: 8, 10, 32>}, {pipeline_mode = #tpu.pipeline_mode<synchronous>, transform_indices = @transform_5, window_bounds = array<i64: 8, 10, 32>}, {pipeline_mode = #tpu.pipeline_mode<synchronous>, transform_indices = @transform_6, window_bounds = array<i64: 80, 128>}, {pipeline_mode = #tpu.pipeline_mode<synchronous>, transform_indices = @transform_7, window_bounds = array<i64: 1, 128>}, {pipeline_mode = #tpu.pipeline_mode<synchronous>, transform_indices = @transform_8, window_bounds = array<i64: 64, 128>}, {pipeline_mode = #tpu.pipeline_mode<synchronous>, transform_indices = @transform_9, window_bounds = array<i64: 1, 128>}, {pipeline_mode = #tpu.pipeline_mode<synchronous>, transform_indices = @transform_10, window_bounds = array<i64: 64, 32>}, {pipeline_mode = #tpu.pipeline_mode<synchronous>, transform_indices = @transform_11, window_bounds = array<i64: 4, 8, 32>}]} {
    %c0 = arith.constant 0 : index
    %c0_0 = arith.constant 0 : index
    %0 = vector.load %arg7[%c0, %c0_0] : memref<80x128xf32, #tpu.memory_space<vmem>>, vector<80x128xf32>
    %c0_1 = arith.constant 0 : index
    %c0_2 = arith.constant 0 : index
    %1 = vector.load %arg8[%c0_1, %c0_2] : memref<1x128xf32, #tpu.memory_space<vmem>>, vector<1x128xf32>
    %c0_3 = arith.constant 0 : index
    %c0_4 = arith.constant 0 : index
    %2 = vector.load %arg9[%c0_3, %c0_4] : memref<64x128xf32, #tpu.memory_space<vmem>>, vector<64x128xf32>
    %c0_5 = arith.constant 0 : index
    %c0_6 = arith.constant 0 : index
    %3 = vector.load %arg10[%c0_5, %c0_6] : memref<1x128xf32, #tpu.memory_space<vmem>>, vector<1x128xf32>
    %c0_7 = arith.constant 0 : index
    %c0_8 = arith.constant 0 : index
    %4 = vector.load %arg11[%c0_7, %c0_8] : memref<64x32xf32, #tpu.memory_space<vmem>>, vector<64x32xf32>
    %c0_9 = arith.constant 0 : index
    %c0_10 = arith.constant 0 : index
    %c0_11 = arith.constant 0 : index
    %5 = vector.load %arg5[%c0_9, %c0_10, %c0_11] : memref<8x10x32xf32, #tpu.memory_space<vmem>>, vector<8x10x32xf32>
    %c0_12 = arith.constant 0 : index
    %c0_13 = arith.constant 0 : index
    %c0_14 = arith.constant 0 : index
    %6 = vector.load %arg6[%c0_12, %c0_13, %c0_14] : memref<8x10x32xf32, #tpu.memory_space<vmem>>, vector<8x10x32xf32>
    %c0_15 = arith.constant 0 : index
    %c0_16 = arith.constant 0 : index
    %7 = vector.load %arg2[%c0_15, %c0_16] : memref<8x32xf32, #tpu.memory_space<vmem>>, vector<8x32xf32>
    %c0_17 = arith.constant 0 : index
    %c0_18 = arith.constant 0 : index
    %c0_19 = arith.constant 0 : index
    %8 = vector.load %arg3[%c0_17, %c0_18, %c0_19] : memref<2x8x32xf32, #tpu.memory_space<vmem>>, vector<1x8x32xf32>
    %9 = vector.shape_cast %8 : vector<1x8x32xf32> to vector<8x32xf32>
    %c0_20 = arith.constant 0 : index
    %c0_21 = arith.constant 0 : index
    %c0_22 = arith.constant 0 : index
    %10 = vector.load %arg4[%c0_20, %c0_21, %c0_22] : memref<2x8x32xf32, #tpu.memory_space<vmem>>, vector<1x8x32xf32>
    %11 = vector.shape_cast %10 : vector<1x8x32xf32> to vector<8x32xf32>
    %c1 = arith.constant 1 : index
    %c0_23 = arith.constant 0 : index
    %c0_24 = arith.constant 0 : index
    %12 = vector.load %arg3[%c1, %c0_23, %c0_24] : memref<2x8x32xf32, #tpu.memory_space<vmem>>, vector<1x8x32xf32>
    %13 = vector.shape_cast %12 : vector<1x8x32xf32> to vector<8x32xf32>
    %c1_25 = arith.constant 1 : index
    %c0_26 = arith.constant 0 : index
    %c0_27 = arith.constant 0 : index
    %14 = vector.load %arg4[%c1_25, %c0_26, %c0_27] : memref<2x8x32xf32, #tpu.memory_space<vmem>>, vector<1x8x32xf32>
    %15 = vector.shape_cast %14 : vector<1x8x32xf32> to vector<8x32xf32>
    %c0_i32 = arith.constant 0 : i32
    %16 = arith.index_cast %c0_i32 : i32 to index
    %c0_28 = arith.constant 0 : index
    %c0_29 = arith.constant 0 : index
    %17 = vector.load %arg1[%16, %c0_28, %c0_29] : memref<4x8x16xf32, #tpu.memory_space<vmem>>, vector<1x8x16xf32>
    %18 = vector.shape_cast %17 : vector<1x8x16xf32> to vector<8x16xf32>
    %19 = tpu.concatenate %18, %7, %9 in 1 : vector<8x16xf32>, vector<8x32xf32>, vector<8x32xf32> -> vector<8x80xf32>
    %cst = arith.constant dense<0.000000e+00> : vector<8x128xf32>
    %20 = tpu.matmul %19, %0, %cst {dimension_numbers = #tpu.dot_dimension_numbers<[1], [0], [0], [1], [0, 0, 1, 1], [], []>} : vector<8x80xf32>, vector<80x128xf32>, vector<8x128xf32> -> vector<8x128xf32>
    %21 = vector.broadcast %1 : vector<1x128xf32> to vector<8x128xf32>
    %22 = arith.addf %20, %21 : vector<8x128xf32>
    %23 = arith.negf %22 : vector<8x128xf32>
    %24 = math.exp %23 : vector<8x128xf32>
    %cst_30 = arith.constant 1.000000e+00 : f32
    %25 = vector.broadcast %cst_30 : f32 to vector<8x128xf32>
    %26 = arith.addf %25, %24 : vector<8x128xf32>
    %27 = arith.divf %25, %26 : vector<8x128xf32>
    %28 = math.tanh %22 : vector<8x128xf32>
    %29 = vector.extract_strided_slice %27 {offsets = [0, 0], sizes = [8, 32], strides = [1, 1]} : vector<8x128xf32> to vector<8x32xf32>
    %30 = vector.extract_strided_slice %27 {offsets = [0, 32], sizes = [8, 32], strides = [1, 1]} : vector<8x128xf32> to vector<8x32xf32>
    %31 = vector.extract_strided_slice %28 {offsets = [0, 64], sizes = [8, 32], strides = [1, 1]} : vector<8x128xf32> to vector<8x32xf32>
    %32 = vector.extract_strided_slice %27 {offsets = [0, 96], sizes = [8, 32], strides = [1, 1]} : vector<8x128xf32> to vector<8x32xf32>
    %33 = arith.mulf %30, %11 : vector<8x32xf32>
    %34 = arith.mulf %29, %31 : vector<8x32xf32>
    %35 = arith.addf %33, %34 : vector<8x32xf32>
    %36 = math.tanh %35 : vector<8x32xf32>
    %37 = arith.mulf %32, %36 : vector<8x32xf32>
    %38 = tpu.concatenate %37, %13 in 1 : vector<8x32xf32>, vector<8x32xf32> -> vector<8x64xf32>
    %cst_31 = arith.constant dense<0.000000e+00> : vector<8x128xf32>
    %39 = tpu.matmul %38, %2, %cst_31 {dimension_numbers = #tpu.dot_dimension_numbers<[1], [0], [0], [1], [0, 0, 1, 1], [], []>} : vector<8x64xf32>, vector<64x128xf32>, vector<8x128xf32> -> vector<8x128xf32>
    %40 = vector.broadcast %3 : vector<1x128xf32> to vector<8x128xf32>
    %41 = arith.addf %39, %40 : vector<8x128xf32>
    %42 = arith.negf %41 : vector<8x128xf32>
    %43 = math.exp %42 : vector<8x128xf32>
    %cst_32 = arith.constant 1.000000e+00 : f32
    %44 = vector.broadcast %cst_32 : f32 to vector<8x128xf32>
    %45 = arith.addf %44, %43 : vector<8x128xf32>
    %46 = arith.divf %44, %45 : vector<8x128xf32>
    %47 = math.tanh %41 : vector<8x128xf32>
    %48 = vector.extract_strided_slice %46 {offsets = [0, 0], sizes = [8, 32], strides = [1, 1]} : vector<8x128xf32> to vector<8x32xf32>
    %49 = vector.extract_strided_slice %46 {offsets = [0, 32], sizes = [8, 32], strides = [1, 1]} : vector<8x128xf32> to vector<8x32xf32>
    %50 = vector.extract_strided_slice %47 {offsets = [0, 64], sizes = [8, 32], strides = [1, 1]} : vector<8x128xf32> to vector<8x32xf32>
    %51 = vector.extract_strided_slice %46 {offsets = [0, 96], sizes = [8, 32], strides = [1, 1]} : vector<8x128xf32> to vector<8x32xf32>
    %52 = arith.mulf %49, %15 : vector<8x32xf32>
    %53 = arith.mulf %48, %50 : vector<8x32xf32>
    %54 = arith.addf %52, %53 : vector<8x32xf32>
    %55 = math.tanh %54 : vector<8x32xf32>
    %56 = arith.mulf %51, %55 : vector<8x32xf32>
    %57 = vector.shape_cast %56 : vector<8x32xf32> to vector<8x1x32xf32>
    %58 = vector.broadcast %57 : vector<8x1x32xf32> to vector<8x10x32xf32>
    %59 = arith.mulf %6, %58 : vector<8x10x32xf32>
    %cst_33 = arith.constant dense<0.000000e+00> : vector<8x10xf32>
    %60 = vector.multi_reduction <add>, %59, %cst_33 [2] : vector<8x10x32xf32> to vector<8x10xf32>
    %cst_34 = arith.constant dense<0xFF800000> : vector<8xf32>
    %61 = vector.multi_reduction <maximumf>, %60, %cst_34 [1] : vector<8x10xf32> to vector<8xf32>
    %62 = vector.shape_cast %61 : vector<8xf32> to vector<8x1xf32>
    %63 = vector.broadcast %62 : vector<8x1xf32> to vector<8x10xf32>
    %64 = arith.subf %60, %63 : vector<8x10xf32>
    %65 = math.exp %64 : vector<8x10xf32>
    %cst_35 = arith.constant dense<0.000000e+00> : vector<8xf32>
    %66 = vector.multi_reduction <add>, %65, %cst_35 [1] : vector<8x10xf32> to vector<8xf32>
    %67 = vector.shape_cast %66 : vector<8xf32> to vector<8x1xf32>
    %68 = tpu.reciprocal %67 {approx = true} : vector<8x1xf32> -> vector<8x1xf32>
    %69 = vector.broadcast %68 : vector<8x1xf32> to vector<8x10xf32>
    %70 = arith.mulf %65, %69 : vector<8x10xf32>
    %71 = vector.shape_cast %70 : vector<8x10xf32> to vector<8x10x1xf32>
    %72 = vector.broadcast %71 : vector<8x10x1xf32> to vector<8x10x32xf32>
    %73 = arith.mulf %72, %5 : vector<8x10x32xf32>
    %cst_36 = arith.constant dense<0.000000e+00> : vector<8x32xf32>
    %74 = vector.multi_reduction <add>, %73, %cst_36 [1] : vector<8x10x32xf32> to vector<8x32xf32>
    %75 = tpu.concatenate %74, %56 in 1 : vector<8x32xf32>, vector<8x32xf32> -> vector<8x64xf32>
    %cst_37 = arith.constant dense<0.000000e+00> : vector<8x32xf32>
    %76 = tpu.matmul %75, %4, %cst_37 {dimension_numbers = #tpu.dot_dimension_numbers<[1], [0], [0], [1], [0, 0, 1, 1], [], []>} : vector<8x64xf32>, vector<64x32xf32>, vector<8x32xf32> -> vector<8x32xf32>
    %77 = math.tanh %76 : vector<8x32xf32>
    %78 = arith.index_cast %c0_i32 : i32 to index
    %c0_38 = arith.constant 0 : index
    %c0_39 = arith.constant 0 : index
    %79 = vector.load %arg12[%78, %c0_38, %c0_39] : memref<4x8x32xf32, #tpu.memory_space<vmem>>, vector<1x8x32xf32>
    %80 = vector.shape_cast %79 : vector<1x8x32xf32> to vector<8x32xf32>
    %81 = vector.shape_cast %77 : vector<8x32xf32> to vector<1x8x32xf32>
    tpu.vector_store %arg12[%78, %c0_38, %c0_39], %81 {strides = array<i32>} : memref<4x8x32xf32, #tpu.memory_space<vmem>>, vector<1x8x32xf32>,
    %c1_i32 = arith.constant 1 : i32
    %82 = arith.index_cast %c1_i32 : i32 to index
    %c0_40 = arith.constant 0 : index
    %c0_41 = arith.constant 0 : index
    %83 = vector.load %arg1[%82, %c0_40, %c0_41] : memref<4x8x16xf32, #tpu.memory_space<vmem>>, vector<1x8x16xf32>
    %84 = vector.shape_cast %83 : vector<1x8x16xf32> to vector<8x16xf32>
    %85 = tpu.concatenate %84, %77, %37 in 1 : vector<8x16xf32>, vector<8x32xf32>, vector<8x32xf32> -> vector<8x80xf32>
    %cst_42 = arith.constant dense<0.000000e+00> : vector<8x128xf32>
    %86 = tpu.matmul %85, %0, %cst_42 {dimension_numbers = #tpu.dot_dimension_numbers<[1], [0], [0], [1], [0, 0, 1, 1], [], []>} : vector<8x80xf32>, vector<80x128xf32>, vector<8x128xf32> -> vector<8x128xf32>
    %87 = vector.broadcast %1 : vector<1x128xf32> to vector<8x128xf32>
    %88 = arith.addf %86, %87 : vector<8x128xf32>
    %89 = arith.negf %88 : vector<8x128xf32>
    %90 = math.exp %89 : vector<8x128xf32>
    %cst_43 = arith.constant 1.000000e+00 : f32
    %91 = vector.broadcast %cst_43 : f32 to vector<8x128xf32>
    %92 = arith.addf %91, %90 : vector<8x128xf32>
    %93 = arith.divf %91, %92 : vector<8x128xf32>
    %94 = math.tanh %88 : vector<8x128xf32>
    %95 = vector.extract_strided_slice %93 {offsets = [0, 0], sizes = [8, 32], strides = [1, 1]} : vector<8x128xf32> to vector<8x32xf32>
    %96 = vector.extract_strided_slice %93 {offsets = [0, 32], sizes = [8, 32], strides = [1, 1]} : vector<8x128xf32> to vector<8x32xf32>
    %97 = vector.extract_strided_slice %94 {offsets = [0, 64], sizes = [8, 32], strides = [1, 1]} : vector<8x128xf32> to vector<8x32xf32>
    %98 = vector.extract_strided_slice %93 {offsets = [0, 96], sizes = [8, 32], strides = [1, 1]} : vector<8x128xf32> to vector<8x32xf32>
    %99 = arith.mulf %96, %35 : vector<8x32xf32>
    %100 = arith.mulf %95, %97 : vector<8x32xf32>
    %101 = arith.addf %99, %100 : vector<8x32xf32>
    %102 = math.tanh %101 : vector<8x32xf32>
    %103 = arith.mulf %98, %102 : vector<8x32xf32>
    %104 = tpu.concatenate %103, %56 in 1 : vector<8x32xf32>, vector<8x32xf32> -> vector<8x64xf32>
    %cst_44 = arith.constant dense<0.000000e+00> : vector<8x128xf32>
    %105 = tpu.matmul %104, %2, %cst_44 {dimension_numbers = #tpu.dot_dimension_numbers<[1], [0], [0], [1], [0, 0, 1, 1], [], []>} : vector<8x64xf32>, vector<64x128xf32>, vector<8x128xf32> -> vector<8x128xf32>
    %106 = vector.broadcast %3 : vector<1x128xf32> to vector<8x128xf32>
    %107 = arith.addf %105, %106 : vector<8x128xf32>
    %108 = arith.negf %107 : vector<8x128xf32>
    %109 = math.exp %108 : vector<8x128xf32>
    %cst_45 = arith.constant 1.000000e+00 : f32
    %110 = vector.broadcast %cst_45 : f32 to vector<8x128xf32>
    %111 = arith.addf %110, %109 : vector<8x128xf32>
    %112 = arith.divf %110, %111 : vector<8x128xf32>
    %113 = math.tanh %107 : vector<8x128xf32>
    %114 = vector.extract_strided_slice %112 {offsets = [0, 0], sizes = [8, 32], strides = [1, 1]} : vector<8x128xf32> to vector<8x32xf32>
    %115 = vector.extract_strided_slice %112 {offsets = [0, 32], sizes = [8, 32], strides = [1, 1]} : vector<8x128xf32> to vector<8x32xf32>
    %116 = vector.extract_strided_slice %113 {offsets = [0, 64], sizes = [8, 32], strides = [1, 1]} : vector<8x128xf32> to vector<8x32xf32>
    %117 = vector.extract_strided_slice %112 {offsets = [0, 96], sizes = [8, 32], strides = [1, 1]} : vector<8x128xf32> to vector<8x32xf32>
    %118 = arith.mulf %115, %54 : vector<8x32xf32>
    %119 = arith.mulf %114, %116 : vector<8x32xf32>
    %120 = arith.addf %118, %119 : vector<8x32xf32>
    %121 = math.tanh %120 : vector<8x32xf32>
    %122 = arith.mulf %117, %121 : vector<8x32xf32>
    %123 = vector.shape_cast %122 : vector<8x32xf32> to vector<8x1x32xf32>
    %124 = vector.broadcast %123 : vector<8x1x32xf32> to vector<8x10x32xf32>
    %125 = arith.mulf %6, %124 : vector<8x10x32xf32>
    %cst_46 = arith.constant dense<0.000000e+00> : vector<8x10xf32>
    %126 = vector.multi_reduction <add>, %125, %cst_46 [2] : vector<8x10x32xf32> to vector<8x10xf32>
    %cst_47 = arith.constant dense<0xFF800000> : vector<8xf32>
    %127 = vector.multi_reduction <maximumf>, %126, %cst_47 [1] : vector<8x10xf32> to vector<8xf32>
    %128 = vector.shape_cast %127 : vector<8xf32> to vector<8x1xf32>
    %129 = vector.broadcast %128 : vector<8x1xf32> to vector<8x10xf32>
    %130 = arith.subf %126, %129 : vector<8x10xf32>
    %131 = math.exp %130 : vector<8x10xf32>
    %cst_48 = arith.constant dense<0.000000e+00> : vector<8xf32>
    %132 = vector.multi_reduction <add>, %131, %cst_48 [1] : vector<8x10xf32> to vector<8xf32>
    %133 = vector.shape_cast %132 : vector<8xf32> to vector<8x1xf32>
    %134 = tpu.reciprocal %133 {approx = true} : vector<8x1xf32> -> vector<8x1xf32>
    %135 = vector.broadcast %134 : vector<8x1xf32> to vector<8x10xf32>
    %136 = arith.mulf %131, %135 : vector<8x10xf32>
    %137 = vector.shape_cast %136 : vector<8x10xf32> to vector<8x10x1xf32>
    %138 = vector.broadcast %137 : vector<8x10x1xf32> to vector<8x10x32xf32>
    %139 = arith.mulf %138, %5 : vector<8x10x32xf32>
    %cst_49 = arith.constant dense<0.000000e+00> : vector<8x32xf32>
    %140 = vector.multi_reduction <add>, %139, %cst_49 [1] : vector<8x10x32xf32> to vector<8x32xf32>
    %141 = tpu.concatenate %140, %122 in 1 : vector<8x32xf32>, vector<8x32xf32> -> vector<8x64xf32>
    %cst_50 = arith.constant dense<0.000000e+00> : vector<8x32xf32>
    %142 = tpu.matmul %141, %4, %cst_50 {dimension_numbers = #tpu.dot_dimension_numbers<[1], [0], [0], [1], [0, 0, 1, 1], [], []>} : vector<8x64xf32>, vector<64x32xf32>, vector<8x32xf32> -> vector<8x32xf32>
    %143 = math.tanh %142 : vector<8x32xf32>
    %144 = arith.index_cast %c1_i32 : i32 to index
    %c0_51 = arith.constant 0 : index
    %c0_52 = arith.constant 0 : index
    %145 = vector.load %arg12[%144, %c0_51, %c0_52] : memref<4x8x32xf32, #tpu.memory_space<vmem>>, vector<1x8x32xf32>
    %146 = vector.shape_cast %145 : vector<1x8x32xf32> to vector<8x32xf32>
    %147 = vector.shape_cast %143 : vector<8x32xf32> to vector<1x8x32xf32>
    tpu.vector_store %arg12[%144, %c0_51, %c0_52], %147 {strides = array<i32>} : memref<4x8x32xf32, #tpu.memory_space<vmem>>, vector<1x8x32xf32>,
    %c2_i32 = arith.constant 2 : i32
    %148 = arith.index_cast %c2_i32 : i32 to index
    %c0_53 = arith.constant 0 : index
    %c0_54 = arith.constant 0 : index
    %149 = vector.load %arg1[%148, %c0_53, %c0_54] : memref<4x8x16xf32, #tpu.memory_space<vmem>>, vector<1x8x16xf32>
    %150 = vector.shape_cast %149 : vector<1x8x16xf32> to vector<8x16xf32>
    %151 = tpu.concatenate %150, %143, %103 in 1 : vector<8x16xf32>, vector<8x32xf32>, vector<8x32xf32> -> vector<8x80xf32>
    %cst_55 = arith.constant dense<0.000000e+00> : vector<8x128xf32>
    %152 = tpu.matmul %151, %0, %cst_55 {dimension_numbers = #tpu.dot_dimension_numbers<[1], [0], [0], [1], [0, 0, 1, 1], [], []>} : vector<8x80xf32>, vector<80x128xf32>, vector<8x128xf32> -> vector<8x128xf32>
    %153 = vector.broadcast %1 : vector<1x128xf32> to vector<8x128xf32>
    %154 = arith.addf %152, %153 : vector<8x128xf32>
    %155 = arith.negf %154 : vector<8x128xf32>
    %156 = math.exp %155 : vector<8x128xf32>
    %cst_56 = arith.constant 1.000000e+00 : f32
    %157 = vector.broadcast %cst_56 : f32 to vector<8x128xf32>
    %158 = arith.addf %157, %156 : vector<8x128xf32>
    %159 = arith.divf %157, %158 : vector<8x128xf32>
    %160 = math.tanh %154 : vector<8x128xf32>
    %161 = vector.extract_strided_slice %159 {offsets = [0, 0], sizes = [8, 32], strides = [1, 1]} : vector<8x128xf32> to vector<8x32xf32>
    %162 = vector.extract_strided_slice %159 {offsets = [0, 32], sizes = [8, 32], strides = [1, 1]} : vector<8x128xf32> to vector<8x32xf32>
    %163 = vector.extract_strided_slice %160 {offsets = [0, 64], sizes = [8, 32], strides = [1, 1]} : vector<8x128xf32> to vector<8x32xf32>
    %164 = vector.extract_strided_slice %159 {offsets = [0, 96], sizes = [8, 32], strides = [1, 1]} : vector<8x128xf32> to vector<8x32xf32>
    %165 = arith.mulf %162, %101 : vector<8x32xf32>
    %166 = arith.mulf %161, %163 : vector<8x32xf32>
    %167 = arith.addf %165, %166 : vector<8x32xf32>
    %168 = math.tanh %167 : vector<8x32xf32>
    %169 = arith.mulf %164, %168 : vector<8x32xf32>
    %170 = tpu.concatenate %169, %122 in 1 : vector<8x32xf32>, vector<8x32xf32> -> vector<8x64xf32>
    %cst_57 = arith.constant dense<0.000000e+00> : vector<8x128xf32>
    %171 = tpu.matmul %170, %2, %cst_57 {dimension_numbers = #tpu.dot_dimension_numbers<[1], [0], [0], [1], [0, 0, 1, 1], [], []>} : vector<8x64xf32>, vector<64x128xf32>, vector<8x128xf32> -> vector<8x128xf32>
    %172 = vector.broadcast %3 : vector<1x128xf32> to vector<8x128xf32>
    %173 = arith.addf %171, %172 : vector<8x128xf32>
    %174 = arith.negf %173 : vector<8x128xf32>
    %175 = math.exp %174 : vector<8x128xf32>
    %cst_58 = arith.constant 1.000000e+00 : f32
    %176 = vector.broadcast %cst_58 : f32 to vector<8x128xf32>
    %177 = arith.addf %176, %175 : vector<8x128xf32>
    %178 = arith.divf %176, %177 : vector<8x128xf32>
    %179 = math.tanh %173 : vector<8x128xf32>
    %180 = vector.extract_strided_slice %178 {offsets = [0, 0], sizes = [8, 32], strides = [1, 1]} : vector<8x128xf32> to vector<8x32xf32>
    %181 = vector.extract_strided_slice %178 {offsets = [0, 32], sizes = [8, 32], strides = [1, 1]} : vector<8x128xf32> to vector<8x32xf32>
    %182 = vector.extract_strided_slice %179 {offsets = [0, 64], sizes = [8, 32], strides = [1, 1]} : vector<8x128xf32> to vector<8x32xf32>
    %183 = vector.extract_strided_slice %178 {offsets = [0, 96], sizes = [8, 32], strides = [1, 1]} : vector<8x128xf32> to vector<8x32xf32>
    %184 = arith.mulf %181, %120 : vector<8x32xf32>
    %185 = arith.mulf %180, %182 : vector<8x32xf32>
    %186 = arith.addf %184, %185 : vector<8x32xf32>
    %187 = math.tanh %186 : vector<8x32xf32>
    %188 = arith.mulf %183, %187 : vector<8x32xf32>
    %189 = vector.shape_cast %188 : vector<8x32xf32> to vector<8x1x32xf32>
    %190 = vector.broadcast %189 : vector<8x1x32xf32> to vector<8x10x32xf32>
    %191 = arith.mulf %6, %190 : vector<8x10x32xf32>
    %cst_59 = arith.constant dense<0.000000e+00> : vector<8x10xf32>
    %192 = vector.multi_reduction <add>, %191, %cst_59 [2] : vector<8x10x32xf32> to vector<8x10xf32>
    %cst_60 = arith.constant dense<0xFF800000> : vector<8xf32>
    %193 = vector.multi_reduction <maximumf>, %192, %cst_60 [1] : vector<8x10xf32> to vector<8xf32>
    %194 = vector.shape_cast %193 : vector<8xf32> to vector<8x1xf32>
    %195 = vector.broadcast %194 : vector<8x1xf32> to vector<8x10xf32>
    %196 = arith.subf %192, %195 : vector<8x10xf32>
    %197 = math.exp %196 : vector<8x10xf32>
    %cst_61 = arith.constant dense<0.000000e+00> : vector<8xf32>
    %198 = vector.multi_reduction <add>, %197, %cst_61 [1] : vector<8x10xf32> to vector<8xf32>
    %199 = vector.shape_cast %198 : vector<8xf32> to vector<8x1xf32>
    %200 = tpu.reciprocal %199 {approx = true} : vector<8x1xf32> -> vector<8x1xf32>
    %201 = vector.broadcast %200 : vector<8x1xf32> to vector<8x10xf32>
    %202 = arith.mulf %197, %201 : vector<8x10xf32>
    %203 = vector.shape_cast %202 : vector<8x10xf32> to vector<8x10x1xf32>
    %204 = vector.broadcast %203 : vector<8x10x1xf32> to vector<8x10x32xf32>
    %205 = arith.mulf %204, %5 : vector<8x10x32xf32>
    %cst_62 = arith.constant dense<0.000000e+00> : vector<8x32xf32>
    %206 = vector.multi_reduction <add>, %205, %cst_62 [1] : vector<8x10x32xf32> to vector<8x32xf32>
    %207 = tpu.concatenate %206, %188 in 1 : vector<8x32xf32>, vector<8x32xf32> -> vector<8x64xf32>
    %cst_63 = arith.constant dense<0.000000e+00> : vector<8x32xf32>
    %208 = tpu.matmul %207, %4, %cst_63 {dimension_numbers = #tpu.dot_dimension_numbers<[1], [0], [0], [1], [0, 0, 1, 1], [], []>} : vector<8x64xf32>, vector<64x32xf32>, vector<8x32xf32> -> vector<8x32xf32>
    %209 = math.tanh %208 : vector<8x32xf32>
    %210 = arith.index_cast %c2_i32 : i32 to index
    %c0_64 = arith.constant 0 : index
    %c0_65 = arith.constant 0 : index
    %211 = vector.load %arg12[%210, %c0_64, %c0_65] : memref<4x8x32xf32, #tpu.memory_space<vmem>>, vector<1x8x32xf32>
    %212 = vector.shape_cast %211 : vector<1x8x32xf32> to vector<8x32xf32>
    %213 = vector.shape_cast %209 : vector<8x32xf32> to vector<1x8x32xf32>
    tpu.vector_store %arg12[%210, %c0_64, %c0_65], %213 {strides = array<i32>} : memref<4x8x32xf32, #tpu.memory_space<vmem>>, vector<1x8x32xf32>,
    %c3_i32 = arith.constant 3 : i32
    %214 = arith.index_cast %c3_i32 : i32 to index
    %c0_66 = arith.constant 0 : index
    %c0_67 = arith.constant 0 : index
    %215 = vector.load %arg1[%214, %c0_66, %c0_67] : memref<4x8x16xf32, #tpu.memory_space<vmem>>, vector<1x8x16xf32>
    %216 = vector.shape_cast %215 : vector<1x8x16xf32> to vector<8x16xf32>
    %217 = tpu.concatenate %216, %209, %169 in 1 : vector<8x16xf32>, vector<8x32xf32>, vector<8x32xf32> -> vector<8x80xf32>
    %cst_68 = arith.constant dense<0.000000e+00> : vector<8x128xf32>
    %218 = tpu.matmul %217, %0, %cst_68 {dimension_numbers = #tpu.dot_dimension_numbers<[1], [0], [0], [1], [0, 0, 1, 1], [], []>} : vector<8x80xf32>, vector<80x128xf32>, vector<8x128xf32> -> vector<8x128xf32>
    %219 = vector.broadcast %1 : vector<1x128xf32> to vector<8x128xf32>
    %220 = arith.addf %218, %219 : vector<8x128xf32>
    %221 = arith.negf %220 : vector<8x128xf32>
    %222 = math.exp %221 : vector<8x128xf32>
    %cst_69 = arith.constant 1.000000e+00 : f32
    %223 = vector.broadcast %cst_69 : f32 to vector<8x128xf32>
    %224 = arith.addf %223, %222 : vector<8x128xf32>
    %225 = arith.divf %223, %224 : vector<8x128xf32>
    %226 = math.tanh %220 : vector<8x128xf32>
    %227 = vector.extract_strided_slice %225 {offsets = [0, 0], sizes = [8, 32], strides = [1, 1]} : vector<8x128xf32> to vector<8x32xf32>
    %228 = vector.extract_strided_slice %225 {offsets = [0, 32], sizes = [8, 32], strides = [1, 1]} : vector<8x128xf32> to vector<8x32xf32>
    %229 = vector.extract_strided_slice %226 {offsets = [0, 64], sizes = [8, 32], strides = [1, 1]} : vector<8x128xf32> to vector<8x32xf32>
    %230 = vector.extract_strided_slice %225 {offsets = [0, 96], sizes = [8, 32], strides = [1, 1]} : vector<8x128xf32> to vector<8x32xf32>
    %231 = arith.mulf %228, %167 : vector<8x32xf32>
    %232 = arith.mulf %227, %229 : vector<8x32xf32>
    %233 = arith.addf %231, %232 : vector<8x32xf32>
    %234 = math.tanh %233 : vector<8x32xf32>
    %235 = arith.mulf %230, %234 : vector<8x32xf32>
    %236 = tpu.concatenate %235, %188 in 1 : vector<8x32xf32>, vector<8x32xf32> -> vector<8x64xf32>
    %cst_70 = arith.constant dense<0.000000e+00> : vector<8x128xf32>
    %237 = tpu.matmul %236, %2, %cst_70 {dimension_numbers = #tpu.dot_dimension_numbers<[1], [0], [0], [1], [0, 0, 1, 1], [], []>} : vector<8x64xf32>, vector<64x128xf32>, vector<8x128xf32> -> vector<8x128xf32>
    %238 = vector.broadcast %3 : vector<1x128xf32> to vector<8x128xf32>
    %239 = arith.addf %237, %238 : vector<8x128xf32>
    %240 = arith.negf %239 : vector<8x128xf32>
    %241 = math.exp %240 : vector<8x128xf32>
    %cst_71 = arith.constant 1.000000e+00 : f32
    %242 = vector.broadcast %cst_71 : f32 to vector<8x128xf32>
    %243 = arith.addf %242, %241 : vector<8x128xf32>
    %244 = arith.divf %242, %243 : vector<8x128xf32>
    %245 = math.tanh %239 : vector<8x128xf32>
    %246 = vector.extract_strided_slice %244 {offsets = [0, 0], sizes = [8, 32], strides = [1, 1]} : vector<8x128xf32> to vector<8x32xf32>
    %247 = vector.extract_strided_slice %244 {offsets = [0, 32], sizes = [8, 32], strides = [1, 1]} : vector<8x128xf32> to vector<8x32xf32>
    %248 = vector.extract_strided_slice %245 {offsets = [0, 64], sizes = [8, 32], strides = [1, 1]} : vector<8x128xf32> to vector<8x32xf32>
    %249 = vector.extract_strided_slice %244 {offsets = [0, 96], sizes = [8, 32], strides = [1, 1]} : vector<8x128xf32> to vector<8x32xf32>
    %250 = arith.mulf %247, %186 : vector<8x32xf32>
    %251 = arith.mulf %246, %248 : vector<8x32xf32>
    %252 = arith.addf %250, %251 : vector<8x32xf32>
    %253 = math.tanh %252 : vector<8x32xf32>
    %254 = arith.mulf %249, %253 : vector<8x32xf32>
    %255 = vector.shape_cast %254 : vector<8x32xf32> to vector<8x1x32xf32>
    %256 = vector.broadcast %255 : vector<8x1x32xf32> to vector<8x10x32xf32>
    %257 = arith.mulf %6, %256 : vector<8x10x32xf32>
    %cst_72 = arith.constant dense<0.000000e+00> : vector<8x10xf32>
    %258 = vector.multi_reduction <add>, %257, %cst_72 [2] : vector<8x10x32xf32> to vector<8x10xf32>
    %cst_73 = arith.constant dense<0xFF800000> : vector<8xf32>
    %259 = vector.multi_reduction <maximumf>, %258, %cst_73 [1] : vector<8x10xf32> to vector<8xf32>
    %260 = vector.shape_cast %259 : vector<8xf32> to vector<8x1xf32>
    %261 = vector.broadcast %260 : vector<8x1xf32> to vector<8x10xf32>
    %262 = arith.subf %258, %261 : vector<8x10xf32>
    %263 = math.exp %262 : vector<8x10xf32>
    %cst_74 = arith.constant dense<0.000000e+00> : vector<8xf32>
    %264 = vector.multi_reduction <add>, %263, %cst_74 [1] : vector<8x10xf32> to vector<8xf32>
    %265 = vector.shape_cast %264 : vector<8xf32> to vector<8x1xf32>
    %266 = tpu.reciprocal %265 {approx = true} : vector<8x1xf32> -> vector<8x1xf32>
    %267 = vector.broadcast %266 : vector<8x1xf32> to vector<8x10xf32>
    %268 = arith.mulf %263, %267 : vector<8x10xf32>
    %269 = vector.shape_cast %268 : vector<8x10xf32> to vector<8x10x1xf32>
    %270 = vector.broadcast %269 : vector<8x10x1xf32> to vector<8x10x32xf32>
    %271 = arith.mulf %270, %5 : vector<8x10x32xf32>
    %cst_75 = arith.constant dense<0.000000e+00> : vector<8x32xf32>
    %272 = vector.multi_reduction <add>, %271, %cst_75 [1] : vector<8x10x32xf32> to vector<8x32xf32>
    %273 = tpu.concatenate %272, %254 in 1 : vector<8x32xf32>, vector<8x32xf32> -> vector<8x64xf32>
    %cst_76 = arith.constant dense<0.000000e+00> : vector<8x32xf32>
    %274 = tpu.matmul %273, %4, %cst_76 {dimension_numbers = #tpu.dot_dimension_numbers<[1], [0], [0], [1], [0, 0, 1, 1], [], []>} : vector<8x64xf32>, vector<64x32xf32>, vector<8x32xf32> -> vector<8x32xf32>
    %275 = math.tanh %274 : vector<8x32xf32>
    %276 = arith.index_cast %c3_i32 : i32 to index
    %c0_77 = arith.constant 0 : index
    %c0_78 = arith.constant 0 : index
    %277 = vector.load %arg12[%276, %c0_77, %c0_78] : memref<4x8x32xf32, #tpu.memory_space<vmem>>, vector<1x8x32xf32>
    %278 = vector.shape_cast %277 : vector<1x8x32xf32> to vector<8x32xf32>
    %279 = vector.shape_cast %275 : vector<8x32xf32> to vector<1x8x32xf32>
    tpu.vector_store %arg12[%276, %c0_77, %c0_78], %279 {strides = array<i32>} : memref<4x8x32xf32, #tpu.memory_space<vmem>>, vector<1x8x32xf32>,
    %c4_i32 = arith.constant 4 : i32
    return
  }
  func.func @transform_0(%arg0: i32) -> (i32, i32, i32) {
    %c0_i32 = arith.constant 0 : i32
    %c0_i32_0 = arith.constant 0 : i32
    %c0_i32_1 = arith.constant 0 : i32
    %c0_i32_2 = arith.constant 0 : i32
    return %c0_i32, %c0_i32_0, %c0_i32_1 : i32, i32, i32
  }
  func.func @transform_1(%arg0: i32) -> (i32, i32) {
    %c0_i32 = arith.constant 0 : i32
    %c0_i32_0 = arith.constant 0 : i32
    %c0_i32_1 = arith.constant 0 : i32
    return %c0_i32, %c0_i32_0 : i32, i32
  }
  func.func @transform_2(%arg0: i32) -> (i32, i32, i32) {
    %c0_i32 = arith.constant 0 : i32
    %c0_i32_0 = arith.constant 0 : i32
    %c0_i32_1 = arith.constant 0 : i32
    %c0_i32_2 = arith.constant 0 : i32
    return %c0_i32, %c0_i32_0, %c0_i32_1 : i32, i32, i32
  }
  func.func @transform_3(%arg0: i32) -> (i32, i32, i32) {
    %c0_i32 = arith.constant 0 : i32
    %c0_i32_0 = arith.constant 0 : i32
    %c0_i32_1 = arith.constant 0 : i32
    %c0_i32_2 = arith.constant 0 : i32
    return %c0_i32, %c0_i32_0, %c0_i32_1 : i32, i32, i32
  }
  func.func @transform_4(%arg0: i32) -> (i32, i32, i32) {
    %c0_i32 = arith.constant 0 : i32
    %c0_i32_0 = arith.constant 0 : i32
    %c0_i32_1 = arith.constant 0 : i32
    %c0_i32_2 = arith.constant 0 : i32
    return %c0_i32, %c0_i32_0, %c0_i32_1 : i32, i32, i32
  }
  func.func @transform_5(%arg0: i32) -> (i32, i32, i32) {
    %c0_i32 = arith.constant 0 : i32
    %c0_i32_0 = arith.constant 0 : i32
    %c0_i32_1 = arith.constant 0 : i32
    %c0_i32_2 = arith.constant 0 : i32
    return %c0_i32, %c0_i32_0, %c0_i32_1 : i32, i32, i32
  }
  func.func @transform_6(%arg0: i32) -> (i32, i32) {
    %c0_i32 = arith.constant 0 : i32
    %c0_i32_0 = arith.constant 0 : i32
    %c0_i32_1 = arith.constant 0 : i32
    return %c0_i32, %c0_i32_0 : i32, i32
  }
  func.func @transform_7(%arg0: i32) -> (i32, i32) {
    %c0_i32 = arith.constant 0 : i32
    %c0_i32_0 = arith.constant 0 : i32
    %c0_i32_1 = arith.constant 0 : i32
    return %c0_i32, %c0_i32_0 : i32, i32
  }
  func.func @transform_8(%arg0: i32) -> (i32, i32) {
    %c0_i32 = arith.constant 0 : i32
    %c0_i32_0 = arith.constant 0 : i32
    %c0_i32_1 = arith.constant 0 : i32
    return %c0_i32, %c0_i32_0 : i32, i32
  }
  func.func @transform_9(%arg0: i32) -> (i32, i32) {
    %c0_i32 = arith.constant 0 : i32
    %c0_i32_0 = arith.constant 0 : i32
    %c0_i32_1 = arith.constant 0 : i32
    return %c0_i32, %c0_i32_0 : i32, i32
  }
  func.func @transform_10(%arg0: i32) -> (i32, i32) {
    %c0_i32 = arith.constant 0 : i32
    %c0_i32_0 = arith.constant 0 : i32
    %c0_i32_1 = arith.constant 0 : i32
    return %c0_i32, %c0_i32_0 : i32, i32
  }
  func.func @transform_11(%arg0: i32) -> (i32, i32, i32) {
    %c0_i32 = arith.constant 0 : i32
    %c0_i32_0 = arith.constant 0 : i32
    %c0_i32_1 = arith.constant 0 : i32
    %c0_i32_2 = arith.constant 0 : i32
    return %c0_i32, %c0_i32_0, %c0_i32_1 : i32, i32, i32
  }
}

</mosaic_0001>

<llo_original>
// kernel: tpu_custom_call.1
$region0: #{tpu_custom_call.1}
  #allocation0 [shape = 'u32[]', space=smem, size = 0x4, offset = 0x4, fixed_abs, tag = 'smem constant byte address 0x4 - core index']
  #allocation1 [shape = 'u32[144,128]{1,0:T(1,128)}', space=vmem, size = 0x12000, scoped, tag = 'internal scratch']
  %s0 = inlined_call_operand.vmem [shape: f32[4,8,16], index: 0, kind: input, shape index: {}]
  %s1 = inlined_call_operand.vmem [shape: f32[8,32], index: 1, kind: input, shape index: {}]
  %s2 = inlined_call_operand.vmem [shape: f32[2,8,32], index: 2, kind: input, shape index: {}]
  %s3 = inlined_call_operand.vmem [shape: f32[2,8,32], index: 3, kind: input, shape index: {}]
  %s4 = inlined_call_operand.vmem [shape: f32[8,10,32], index: 4, kind: input, shape index: {}]
  %s5 = inlined_call_operand.vmem [shape: f32[8,10,32], index: 5, kind: input, shape index: {}]
  %s6 = inlined_call_operand.vmem [shape: f32[80,128], index: 6, kind: input, shape index: {}]
  %s7 = inlined_call_operand.vmem [shape: f32[1,128], index: 7, kind: input, shape index: {}]
  %s8 = inlined_call_operand.vmem [shape: f32[64,128], index: 8, kind: input, shape index: {}]
  %s9 = inlined_call_operand.vmem [shape: f32[1,128], index: 9, kind: input, shape index: {}]
  %s10 = inlined_call_operand.vmem [shape: f32[64,32], index: 10, kind: input, shape index: {}]
  %s11 = inlined_call_operand.hbm [shape: f32[4,8,32], index: 11, kind: output, shape index: {}]
  %s12 = sld [smem:[#allocation0]]
  $region54: #{tpu_custom_call.1} parent=0
    _
  %s14 = ssub.s32 1, %s12
  %s15 = scalar_select 0, %s14, %s12
  $region1: #{tpu_custom_call.1} parent=0
    #allocation2 [shape = 'u8[16384]{0}', space=vmem, size = 0x4000, scoped, tag = 'output window, operand 0, single buffered']
    #allocation3 [shape = 's32[1]{0}', space=sflag, size = 0x4, scoped, tag = 'scoped memory for tpu_custom_call.1']
    %16 = vsyncpa [#allocation3], 0
    // Predicated region
    $region2: #{tpu_custom_call.1} parent=1 // pred_check
      _
    $region3: #{tpu_custom_call.1} parent=1 // pred_check_branch
      %18 = sbr.rel (0) target = $region5
    $region4: #{tpu_custom_call.1} parent=1 // pred_region
      _
    $region5: #{tpu_custom_call.1} parent=1 // pred_fallthru
      _
    // Predicated region
    $region6: #{tpu_custom_call.1} parent=1 // pred_check
      _
    $region7: #{tpu_custom_call.1} parent=1 // pred_check_branch
      %20 = sbr.rel (0) target = $region9
    $region8: #{tpu_custom_call.1} parent=1 // pred_region
      _
    $region9: #{tpu_custom_call.1} parent=1 // pred_fallthru
      _
    // Predicated region
    $region10: #{tpu_custom_call.1} parent=1 // pred_check
      _
    $region11: #{tpu_custom_call.1} parent=1 // pred_check_branch
      %22 = sbr.rel (0) target = $region13
    $region12: #{tpu_custom_call.1} parent=1 // pred_region
      _
    $region13: #{tpu_custom_call.1} parent=1 // pred_fallthru
      _
    // Predicated region
    $region14: #{tpu_custom_call.1} parent=1 // pred_check
      _
    $region15: #{tpu_custom_call.1} parent=1 // pred_check_branch
      %24 = sbr.rel (0) target = $region17
    $region16: #{tpu_custom_call.1} parent=1 // pred_region
      _
    $region17: #{tpu_custom_call.1} parent=1 // pred_fallthru
      _
    // Predicated region
    $region18: #{tpu_custom_call.1} parent=1 // pred_check
      _
    $region19: #{tpu_custom_call.1} parent=1 // pred_check_branch
      %26 = sbr.rel (0) target = $region21
    $region20: #{tpu_custom_call.1} parent=1 // pred_region
      _
    $region21: #{tpu_custom_call.1} parent=1 // pred_fallthru
      _
    // Predicated region
    $region22: #{tpu_custom_call.1} parent=1 // pred_check
      _
    $region23: #{tpu_custom_call.1} parent=1 // pred_check_branch
      %28 = sbr.rel (0) target = $region25
    $region24: #{tpu_custom_call.1} parent=1 // pred_region
      _
    $region25: #{tpu_custom_call.1} parent=1 // pred_fallthru
      _
    // Predicated region
    $region26: #{tpu_custom_call.1} parent=1 // pred_check
      _
    $region27: #{tpu_custom_call.1} parent=1 // pred_check_branch
      %30 = sbr.rel (0) target = $region29
    $region28: #{tpu_custom_call.1} parent=1 // pred_region
      _
    $region29: #{tpu_custom_call.1} parent=1 // pred_fallthru
      _
    // Predicated region
    $region30: #{tpu_custom_call.1} parent=1 // pred_check
      _
    $region31: #{tpu_custom_call.1} parent=1 // pred_check_branch
      %32 = sbr.rel (0) target = $region33
    $region32: #{tpu_custom_call.1} parent=1 // pred_region
      _
    $region33: #{tpu_custom_call.1} parent=1 // pred_fallthru
      _
    // Predicated region
    $region34: #{tpu_custom_call.1} parent=1 // pred_check
      _
    $region35: #{tpu_custom_call.1} parent=1 // pred_check_branch
      %34 = sbr.rel (0) target = $region37
    $region36: #{tpu_custom_call.1} parent=1 // pred_region
      _
    $region37: #{tpu_custom_call.1} parent=1 // pred_fallthru
      _
    // Predicated region
    $region38: #{tpu_custom_call.1} parent=1 // pred_check
      _
    $region39: #{tpu_custom_call.1} parent=1 // pred_check_branch
      %36 = sbr.rel (0) target = $region41
    $region40: #{tpu_custom_call.1} parent=1 // pred_region
      _
    $region41: #{tpu_custom_call.1} parent=1 // pred_fallthru
      _
    // Predicated region
    $region42: #{tpu_custom_call.1} parent=1 // pred_check
      _
    $region43: #{tpu_custom_call.1} parent=1 // pred_check_branch
      %38 = sbr.rel (0) target = $region45
    $region44: #{tpu_custom_call.1} parent=1 // pred_region
      _
    $region45: #{tpu_custom_call.1} parent=1 // pred_fallthru
      _
    %v39 = vld [vmem:[%s6] sm:$0xff]
    %v40 = vld [vmem:[%s6 + $0x8] sm:$0xff]
    %v41 = vld [vmem:[%s6 + $0x10] sm:$0xff]
    %v42 = vld [vmem:[%s6 + $0x18] sm:$0xff]
    %v43 = vld [vmem:[%s6 + $0x20] sm:$0xff]
    %v44 = vld [vmem:[%s6 + $0x28] sm:$0xff]
    %v45 = vld [vmem:[%s6 + $0x30] sm:$0xff]
    %v46 = vld [vmem:[%s6 + $0x38] sm:$0xff]
    %v47 = vld [vmem:[%s6 + $0x40] sm:$0xff]
    %v48 = vld [vmem:[%s6 + $0x48] sm:$0xff]
    %v49 = vld [vmem:[%s7] sm:$0x1]
    %v50 = vld [vmem:[%s8] sm:$0xff]
    %v51 = vld [vmem:[%s8 + $0x8] sm:$0xff]
    %v52 = vld [vmem:[%s8 + $0x10] sm:$0xff]
    %v53 = vld [vmem:[%s8 + $0x18] sm:$0xff]
    %v54 = vld [vmem:[%s8 + $0x20] sm:$0xff]
    %v55 = vld [vmem:[%s8 + $0x28] sm:$0xff]
    %v56 = vld [vmem:[%s8 + $0x30] sm:$0xff]
    %v57 = vld [vmem:[%s8 + $0x38] sm:$0xff]
    %v58 = vld [vmem:[%s9] sm:$0x1]
    %v59 = vld [vmem:[%s10] sm:$0xff]
    %v60 = vld [vmem:[%s10 + $0x8] sm:$0xff]
    %v61 = vld [vmem:[%s10 + $0x10] sm:$0xff]
    %v62 = vld [vmem:[%s10 + $0x18] sm:$0xff]
    %v63 = vld [vmem:[%s10 + $0x20] sm:$0xff]
    %v64 = vld [vmem:[%s10 + $0x28] sm:$0xff]
    %v65 = vld [vmem:[%s10 + $0x30] sm:$0xff]
    %v66 = vld [vmem:[%s10 + $0x38] sm:$0xff]
    %v67 = vld [vmem:[%s4] sm:$0xff]
    %v68 = vld [vmem:[%s4 + $0x8] sm:$0x3]
    %v69 = vld [vmem:[%s4 + $0x10] sm:$0xff]
    %v70 = vld [vmem:[%s4 + $0x18] sm:$0x3]
    %v71 = vld [vmem:[%s4 + $0x20] sm:$0xff]
    %v72 = vld [vmem:[%s4 + $0x28] sm:$0x3]
    %v73 = vld [vmem:[%s4 + $0x30] sm:$0xff]
    %v74 = vld [vmem:[%s4 + $0x38] sm:$0x3]
    %v75 = vld [vmem:[%s4 + $0x40] sm:$0xff]
    %v76 = vld [vmem:[%s4 + $0x48] sm:$0x3]
    %v77 = vld [vmem:[%s4 + $0x50] sm:$0xff]
    %v78 = vld [vmem:[%s4 + $0x58] sm:$0x3]
    %v79 = vld [vmem:[%s4 + $0x60] sm:$0xff]
    %v80 = vld [vmem:[%s4 + $0x68] sm:$0x3]
    %v81 = vld [vmem:[%s4 + $0x70] sm:$0xff]
    %v82 = vld [vmem:[%s4 + $0x78] sm:$0x3]
    %v83 = vld [vmem:[%s5] sm:$0xff]
    %v84 = vld [vmem:[%s5 + $0x8] sm:$0x3]
    %v85 = vld [vmem:[%s5 + $0x10] sm:$0xff]
    %v86 = vld [vmem:[%s5 + $0x18] sm:$0x3]
    %v87 = vld [vmem:[%s5 + $0x20] sm:$0xff]
    %v88 = vld [vmem:[%s5 + $0x28] sm:$0x3]
    %v89 = vld [vmem:[%s5 + $0x30] sm:$0xff]
    %v90 = vld [vmem:[%s5 + $0x38] sm:$0x3]
    %v91 = vld [vmem:[%s5 + $0x40] sm:$0xff]
    %v92 = vld [vmem:[%s5 + $0x48] sm:$0x3]
    %v93 = vld [vmem:[%s5 + $0x50] sm:$0xff]
    %v94 = vld [vmem:[%s5 + $0x58] sm:$0x3]
    %v95 = vld [vmem:[%s5 + $0x60] sm:$0xff]
    %v96 = vld [vmem:[%s5 + $0x68] sm:$0x3]
    %v97 = vld [vmem:[%s5 + $0x70] sm:$0xff]
    %v98 = vld [vmem:[%s5 + $0x78] sm:$0x3]
    %v99 = vld [vmem:[%s1] sm:$0xff]
    %v100 = vld [vmem:[%s2] sm:$0xff]
    %v101 = vld [vmem:[%s3] sm:$0xff]
    %s102 = scalar_lea.vmem %s2, 8
    %v103 = vld [vmem:[%s102] sm:$0xff]
    %s104 = scalar_lea.vmem %s3, 8
    %v105 = vld [vmem:[%s104] sm:$0xff]
    %v106 = vld [vmem:[%s0] sm:$0xff]
    %108 = vrot.lane.b32.xlu0 %v99, 16
    %v109 = vpop.permute.xlu0 %108
    %112 = vrot.lane.b32.xlu0 %v100, 48
    %v113 = vpop.permute.xlu0 %112
    %vm115 = vcmask 130048
    %v116 = vsel %vm115, %v106, %v109
    %vm117 = vcmask 392192
    %v118 = vsel %vm117, %v116, %v113
    %v120 = vlaneseq
    %v121 = vshrl.u32 %v120, 7
    %v122 = vsub.s32 0, %v121
    %v123 = vrot.slane %v49, %v122
    %vm125 = vcmask 654336
    %v127 = vsel %vm125, %v118, 0
    %129 = vmatprep.subr.mxu0 0.0
    %130 = vmatpush1.msra.mxu0 %v39
    %131 = vmatprep.subr.mxu0 0.0
    %132 = vmatpush1.msra.mxu0 %v40
    %133 = vmatprep.subr.mxu0 0.0
    %134 = vmatpush1.msra.mxu0 %v41
    %135 = vmatprep.subr.mxu0 0.0
    %136 = vmatpush1.msra.mxu0 %v42
    %137 = vmatprep.subr.mxu0 0.0
    %138 = vmatpush1.msra.mxu0 %v43
    %139 = vmatprep.subr.mxu0 0.0
    %140 = vmatpush1.msra.mxu0 %v44
    %141 = vmatprep.subr.mxu0 0.0
    %142 = vmatpush1.msra.mxu0 %v45
    %143 = vmatprep.subr.mxu0 0.0
    %144 = vmatpush1.msra.mxu0 %v46
    %145 = vmatprep.subr.mxu0 0.0
    %146 = vmatpush1.msra.mxu0 %v47
    %147 = vmatprep.subr.mxu0 0.0
    %148 = vmatpush1.msra.mxu0 %v48
    %149 = vmatprep.subr.mxu0 0.0
    %150 = vmatpush1.msra.mxu0 0.0
    %151 = vmatprep.subr.mxu0 0.0
    %152 = vmatpush1.msra.mxu0 0.0
    %153 = vmatprep.subr.mxu0 0.0
    %154 = vmatpush1.msra.mxu0 0.0
    %155 = vmatprep.subr.mxu0 0.0
    %156 = vmatpush1.msra.mxu0 0.0
    %157 = vmatprep.subr.mxu0 0.0
    %158 = vmatpush1.msra.mxu0 0.0
    %159 = vmatprep.subr.mxu0 0.0
    %160 = vmatpush1.msra.mxu0 0.0
    %161 = vmatprep.subr.mxu0 0.0
    %162 = vmatpush1.msra.mxu0 0.0
    %163 = vmatprep.subr.mxu0 0.0
    %164 = vmatpush1.msra.mxu0 0.0
    %165 = vmatprep.subr.mxu0 0.0
    %166 = vmatpush1.msra.mxu0 0.0
    %167 = vmatprep.subr.mxu0 0.0
    %168 = vmatpush1.msra.mxu0 0.0
    %169 = vmatprep.subr.mxu0 0.0
    %170 = vmatpush1.msra.mxu0 0.0
    %171 = vmatprep.subr.mxu0 0.0
    %172 = vmatpush1.msra.mxu0 0.0
    %173 = vmatprep.subr.mxu0 0.0
    %174 = vmatpush1.msra.mxu0 0.0
    %175 = vmatprep.subr.mxu0 0.0
    %176 = vmatpush1.msra.mxu0 0.0
    %177 = vmatprep.subr.mxu0 0.0
    %178 = vmatpush1.msra.mxu0 0.0
    %179 = vmatprep.subr.mxu0 0.0
    %180 = vmatpush1.msra.mxu0 0.0
    %181 = vmatprep.subr.mxu0 0.0
    %182 = vmatpush1.msra.mxu0 0.0
    %183 = vmatprep.subr.mxu0 0.0
    %184 = vmatpush1.msra.mxu0 0.0
    %185 = vmatprep.subr.mxu0 0.0
    %186 = vmatpush1.msra.mxu0 0.0
    %187 = vmatprep.subr.mxu0 0.0
    %188 = vmatpush1.msra.mxu0 0.0
    %189 = vmatprep.subr.mxu0 0.0
    %190 = vmatpush1.msra.mxu0 0.0
    %191 = vmatprep.subr.mxu0 0.0
    %192 = vmatpush1.msra.mxu0 0.0
    %193 = vmatprep.mubr.f32.mxu0 0.0
    %194 = vmatmul.mubr.f32.gmra.mrb[0].mxu0 %v127
    %v195 = vpop.f32.mrb[0].mxu0
    %v196 = vadd.f32 %v123, %v195
    %v197 = vpop.f32.mrb[0].mxu0
    %198 = vdwg.mxu0
    %v199 = vxor.u32 %v196, 2147483648
    %v200 = vmul.f32 %v199, 1.442695
    %v201 = vpow.pop %v200
    %v202 = vadd.f32 %v201, 1.0
    %v203 = vrcp.pop %v202
    %v204 = vmul.f32 1.0, %v203
    %v205 = vtanh.pop %v196
    %207 = vrot.lane.b32.xlu0 %v101, 32
    %v208 = vpop.permute.xlu0 %207
    %v210 = vmul.f32 %v204, %v208
    %212 = vrot.lane.b32.xlu0 %v205, 64
    %v213 = vpop.permute.xlu0 %212
    %v215 = vmul.f32 %v204, %v213
    %217 = vrot.lane.b32.xlu0 %v215, 32
    %v218 = vpop.permute.xlu0 %217
    %v220 = vadd.f32 %v210, %v218
    %v221 = vtanh.pop %v220
    %223 = vrot.lane.b32.xlu0 %v221, 64
    %v224 = vpop.permute.xlu0 %223
    %v226 = vmul.f32 %v204, %v224
    %228 = vrot.lane.b32.xlu0 %v226, 32
    %v229 = vpop.permute.xlu0 %228
    %232 = vrot.lane.b32.xlu0 %v103, 32
    %v233 = vpop.permute.xlu0 %232
    %vm235 = vcmask 261120
    %v236 = vsel %vm235, %v229, %v233
    %v238 = vlaneseq
    %v239 = vshrl.u32 %v238, 7
    %v240 = vsub.s32 0, %v239
    %v241 = vrot.slane %v58, %v240
    %vm243 = vcmask 523264
    %v245 = vsel %vm243, %v236, 0
    %247 = vmatprep.subr.mxu0 0.0
    %248 = vmatpush1.msra.mxu0 %v50
    %249 = vmatprep.subr.mxu0 0.0
    %250 = vmatpush1.msra.mxu0 %v51
    %251 = vmatprep.subr.mxu0 0.0
    %252 = vmatpush1.msra.mxu0 %v52
    %253 = vmatprep.subr.mxu0 0.0
    %254 = vmatpush1.msra.mxu0 %v53
    %255 = vmatprep.subr.mxu0 0.0
    %256 = vmatpush1.msra.mxu0 %v54
    %257 = vmatprep.subr.mxu0 0.0
    %258 = vmatpush1.msra.mxu0 %v55
    %259 = vmatprep.subr.mxu0 0.0
    %260 = vmatpush1.msra.mxu0 %v56
    %261 = vmatprep.subr.mxu0 0.0
    %262 = vmatpush1.msra.mxu0 %v57
    %263 = vmatprep.subr.mxu0 0.0
    %264 = vmatpush1.msra.mxu0 0.0
    %265 = vmatprep.subr.mxu0 0.0
    %266 = vmatpush1.msra.mxu0 0.0
    %267 = vmatprep.subr.mxu0 0.0
    %268 = vmatpush1.msra.mxu0 0.0
    %269 = vmatprep.subr.mxu0 0.0
    %270 = vmatpush1.msra.mxu0 0.0
    %271 = vmatprep.subr.mxu0 0.0
    %272 = vmatpush1.msra.mxu0 0.0
    %273 = vmatprep.subr.mxu0 0.0
    %274 = vmatpush1.msra.mxu0 0.0
    %275 = vmatprep.subr.mxu0 0.0
    %276 = vmatpush1.msra.mxu0 0.0
    %277 = vmatprep.subr.mxu0 0.0
    %278 = vmatpush1.msra.mxu0 0.0
    %279 = vmatprep.subr.mxu0 0.0
    %280 = vmatpush1.msra.mxu0 0.0
    %281 = vmatprep.subr.mxu0 0.0
    %282 = vmatpush1.msra.mxu0 0.0
    %283 = vmatprep.subr.mxu0 0.0
    %284 = vmatpush1.msra.mxu0 0.0
    %285 = vmatprep.subr.mxu0 0.0
    %286 = vmatpush1.msra.mxu0 0.0
    %287 = vmatprep.subr.mxu0 0.0
    %288 = vmatpush1.msra.mxu0 0.0
    %289 = vmatprep.subr.mxu0 0.0
    %290 = vmatpush1.msra.mxu0 0.0
    %291 = vmatprep.subr.mxu0 0.0
    %292 = vmatpush1.msra.mxu0 0.0
    %293 = vmatprep.subr.mxu0 0.0
    %294 = vmatpush1.msra.mxu0 0.0
    %295 = vmatprep.subr.mxu0 0.0
    %296 = vmatpush1.msra.mxu0 0.0
    %297 = vmatprep.subr.mxu0 0.0
    %298 = vmatpush1.msra.mxu0 0.0
    %299 = vmatprep.subr.mxu0 0.0
    %300 = vmatpush1.msra.mxu0 0.0
    %301 = vmatprep.subr.mxu0 0.0
    %302 = vmatpush1.msra.mxu0 0.0
    %303 = vmatprep.subr.mxu0 0.0
    %304 = vmatpush1.msra.mxu0 0.0
    %305 = vmatprep.subr.mxu0 0.0
    %306 = vmatpush1.msra.mxu0 0.0
    %307 = vmatprep.subr.mxu0 0.0
    %308 = vmatpush1.msra.mxu0 0.0
    %309 = vmatprep.subr.mxu0 0.0
    %310 = vmatpush1.msra.mxu0 0.0
    %311 = vmatprep.mubr.f32.mxu0 0.0
    %312 = vmatmul.mubr.f32.gmra.mrb[0].mxu0 %v245
    %v313 = vpop.f32.mrb[0].mxu0
    %v314 = vadd.f32 %v241, %v313
    %v315 = vpop.f32.mrb[0].mxu0
    %316 = vdwg.mxu0
    %v317 = vxor.u32 %v314, 2147483648
    %v318 = vmul.f32 %v317, 1.442695
    %v319 = vpow.pop %v318
    %v320 = vadd.f32 %v319, 1.0
    %v321 = vrcp.pop %v320
    %v322 = vmul.f32 1.0, %v321
    %v323 = vtanh.pop %v314
    %325 = vrot.lane.b32.xlu0 %v105, 32
    %v326 = vpop.permute.xlu0 %325
    %v328 = vmul.f32 %v322, %v326
    %330 = vrot.lane.b32.xlu0 %v323, 64
    %v331 = vpop.permute.xlu0 %330
    %v333 = vmul.f32 %v322, %v331
    %335 = vrot.lane.b32.xlu0 %v333, 32
    %v336 = vpop.permute.xlu0 %335
    %v338 = vadd.f32 %v328, %v336
    %v339 = vtanh.pop %v338
    %341 = vrot.lane.b32.xlu0 %v339, 64
    %v342 = vpop.permute.xlu0 %341
    %v344 = vmul.f32 %v322, %v342
    %v346 = vcombine.high %v344, %v344
    %v348 = vunpack.c.l.s4 1966171168
    %v349 = vunpack.c.0.s8 %v348
    %v350 = vlaneseq
    %v351 = vshrl.u32 %v350, 7
    %v352 = vsub.s32 %v349, %v351
    %v353 = vrot.slane %v344, %v352
    %v355 = vunpack.c.l.s4 1966171168
    %v356 = vunpack.c.0.s8 %v355
    %v357 = vlaneseq
    %v358 = vshrl.u32 %v357, 7
    %v359 = vsub.s32 %v356, %v358
    %v360 = vrot.slane %v346, %v359
    %v361 = vcombine.high %v353, %v353
    %v362 = vcombine.high %v360, %v360
    %v364 = vunpack.c.l.s4 1966171168
    %v365 = vunpack.c.0.s8 %v364
    %v366 = vlaneseq
    %v367 = vshrl.u32 %v366, 7
    %v368 = vsub.s32 %v365, %v367
    %v369 = vrot.slane %v353, %v368
    %v371 = vunpack.c.l.s4 1966171168
    %v372 = vunpack.c.0.s8 %v371
    %v373 = vlaneseq
    %v374 = vshrl.u32 %v373, 7
    %v375 = vsub.s32 %v372, %v374
    %v376 = vrot.slane %v360, %v375
    %v378 = vunpack.c.l.s4 1966171168
    %v379 = vunpack.c.0.s8 %v378
    %v380 = vlaneseq
    %v381 = vshrl.u32 %v380, 7
    %v382 = vsub.s32 %v379, %v381
    %v383 = vrot.slane %v361, %v382
    %v385 = vunpack.c.l.s4 1966171168
    %v386 = vunpack.c.0.s8 %v385
    %v387 = vlaneseq
    %v388 = vshrl.u32 %v387, 7
    %v389 = vsub.s32 %v386, %v388
    %v390 = vrot.slane %v362, %v389
    %v391 = vcombine.high %v369, %v369
    %v392 = vcombine.high %v376, %v376
    %v393 = vcombine.high %v383, %v383
    %v394 = vcombine.high %v390, %v390
    %v395 = vlaneseq
    %v396 = vshrl.u32 %v395, 7
    %v397 = vsub.s32 0, %v396
    %v398 = vrot.slane %v369, %v397
    %v399 = vlaneseq
    %v400 = vshrl.u32 %v399, 7
    %v401 = vsub.s32 0, %v400
    %v402 = vrot.slane %v383, %v401
    %v403 = vlaneseq
    %v404 = vshrl.u32 %v403, 7
    %v405 = vsub.s32 0, %v404
    %v406 = vrot.slane %v391, %v405
    %v407 = vlaneseq
    %v408 = vshrl.u32 %v407, 7
    %v409 = vsub.s32 0, %v408
    %v410 = vrot.slane %v393, %v409
    %v411 = vlaneseq
    %v412 = vshrl.u32 %v411, 7
    %v413 = vsub.s32 0, %v412
    %v414 = vrot.slane %v376, %v413
    %v415 = vlaneseq
    %v416 = vshrl.u32 %v415, 7
    %v417 = vsub.s32 0, %v416
    %v418 = vrot.slane %v390, %v417
    %v419 = vlaneseq
    %v420 = vshrl.u32 %v419, 7
    %v421 = vsub.s32 0, %v420
    %v422 = vrot.slane %v392, %v421
    %v423 = vlaneseq
    %v424 = vshrl.u32 %v423, 7
    %v425 = vsub.s32 0, %v424
    %v426 = vrot.slane %v394, %v425
    %427 = vrot.lane.b32.xlu0 %v398, 32
    %v428 = vpop.permute.xlu0 %427
    %429 = vrot.lane.b32.xlu0 %v402, 32
    %v430 = vpop.permute.xlu0 %429
    %431 = vrot.lane.b32.xlu0 %v406, 32
    %v432 = vpop.permute.xlu0 %431
    %433 = vrot.lane.b32.xlu0 %v410, 32
    %v434 = vpop.permute.xlu0 %433
    %435 = vrot.lane.b32.xlu0 %v414, 32
    %v436 = vpop.permute.xlu0 %435
    %437 = vrot.lane.b32.xlu0 %v418, 32
    %v438 = vpop.permute.xlu0 %437
    %439 = vrot.lane.b32.xlu0 %v422, 32
    %v440 = vpop.permute.xlu0 %439
    %441 = vrot.lane.b32.xlu0 %v426, 32
    %v442 = vpop.permute.xlu0 %441
    %v451 = vmul.f32 %v83, %v428
    %v452 = vmul.f32 %v84, %v428
    %v453 = vmul.f32 %v85, %v430
    %v454 = vmul.f32 %v86, %v430
    %v455 = vmul.f32 %v87, %v432
    %v456 = vmul.f32 %v88, %v432
    %v457 = vmul.f32 %v89, %v434
    %v458 = vmul.f32 %v90, %v434
    %v459 = vmul.f32 %v91, %v436
    %v460 = vmul.f32 %v92, %v436
    %v461 = vmul.f32 %v93, %v438
    %v462 = vmul.f32 %v94, %v438
    %v463 = vmul.f32 %v95, %v440
    %v464 = vmul.f32 %v96, %v440
    %v465 = vmul.f32 %v97, %v442
    %v466 = vmul.f32 %v98, %v442
    %v467 = vsel %vm235, %v451, 0.0
    %468 = vadd.xlane.f32.xlu0 %v467
    %v469 = vpop.xlane.xlu0 %468
    %vm470 = vcmask 254976
    %v471 = vsel %vm470, %v452, 0.0
    %472 = vadd.xlane.f32.xlu0 %v471
    %v473 = vpop.xlane.xlu0 %472
    %v474 = vsel %vm235, %v453, 0.0
    %475 = vadd.xlane.f32.xlu0 %v474
    %v476 = vpop.xlane.xlu0 %475
    %v477 = vsel %vm470, %v454, 0.0
    %478 = vadd.xlane.f32.xlu0 %v477
    %v479 = vpop.xlane.xlu0 %478
    %v480 = vsel %vm235, %v455, 0.0
    %481 = vadd.xlane.f32.xlu0 %v480
    %v482 = vpop.xlane.xlu0 %481
    %v483 = vsel %vm470, %v456, 0.0
    %484 = vadd.xlane.f32.xlu0 %v483
    %v485 = vpop.xlane.xlu0 %484
    %v486 = vsel %vm235, %v457, 0.0
    %487 = vadd.xlane.f32.xlu0 %v486
    %v488 = vpop.xlane.xlu0 %487
    %v489 = vsel %vm470, %v458, 0.0
    %490 = vadd.xlane.f32.xlu0 %v489
    %v491 = vpop.xlane.xlu0 %490
    %v492 = vsel %vm235, %v459, 0.0
    %493 = vadd.xlane.f32.xlu0 %v492
    %v494 = vpop.xlane.xlu0 %493
    %v495 = vsel %vm470, %v460, 0.0
    %496 = vadd.xlane.f32.xlu0 %v495
    %v497 = vpop.xlane.xlu0 %496
    %v498 = vsel %vm235, %v461, 0.0
    %499 = vadd.xlane.f32.xlu0 %v498
    %v500 = vpop.xlane.xlu0 %499
    %v501 = vsel %vm470, %v462, 0.0
    %502 = vadd.xlane.f32.xlu0 %v501
    %v503 = vpop.xlane.xlu0 %502
    %v504 = vsel %vm235, %v463, 0.0
    %505 = vadd.xlane.f32.xlu0 %v504
    %v506 = vpop.xlane.xlu0 %505
    %v507 = vsel %vm470, %v464, 0.0
    %508 = vadd.xlane.f32.xlu0 %v507
    %v509 = vpop.xlane.xlu0 %508
    %v510 = vsel %vm235, %v465, 0.0
    %511 = vadd.xlane.f32.xlu0 %v510
    %v512 = vpop.xlane.xlu0 %511
    %v513 = vsel %vm470, %v466, 0.0
    %514 = vadd.xlane.f32.xlu0 %v513
    %v515 = vpop.xlane.xlu0 %514
    %v532 = vlaneseq
    %v533 = vand.u32 %v532, 127
    %v534 = vlaneseq
    %v535 = vshrl.u32 %v534, 7
    %v536 = vsub.s32 %v533, %v535
    %v537 = vrot.slane %v469, %v536
    %v538 = vadd.s32 %v533, 4294967288
    %v539 = vlaneseq
    %v540 = vshrl.u32 %v539, 7
    %v541 = vsub.s32 %v538, %v540
    %v542 = vrot.slane %v473, %v541
    %vm543 = vcmask 130112
    %v544 = vsel %vm543, %v542, %v537
    %v545 = vlaneseq
    %v546 = vshrl.u32 %v545, 7
    %v547 = vsub.s32 %v533, %v546
    %v548 = vrot.slane %v476, %v547
    %v549 = vlaneseq
    %v550 = vshrl.u32 %v549, 7
    %v551 = vsub.s32 %v538, %v550
    %v552 = vrot.slane %v479, %v551
    %v553 = vsel %vm543, %v552, %v548
    %v554 = vlaneseq
    %v555 = vshrl.u32 %v554, 7
    %v556 = vsub.s32 %v533, %v555
    %v557 = vrot.slane %v482, %v556
    %v558 = vlaneseq
    %v559 = vshrl.u32 %v558, 7
    %v560 = vsub.s32 %v538, %v559
    %v561 = vrot.slane %v485, %v560
    %v562 = vsel %vm543, %v561, %v557
    %v563 = vlaneseq
    %v564 = vshrl.u32 %v563, 7
    %v565 = vsub.s32 %v533, %v564
    %v566 = vrot.slane %v488, %v565
    %v567 = vlaneseq
    %v568 = vshrl.u32 %v567, 7
    %v569 = vsub.s32 %v538, %v568
    %v570 = vrot.slane %v491, %v569
    %v571 = vsel %vm543, %v570, %v566
    %v572 = vlaneseq
    %v573 = vshrl.u32 %v572, 7
    %v574 = vsub.s32 %v533, %v573
    %v575 = vrot.slane %v494, %v574
    %v576 = vlaneseq
    %v577 = vshrl.u32 %v576, 7
    %v578 = vsub.s32 %v538, %v577
    %v579 = vrot.slane %v497, %v578
    %v580 = vsel %vm543, %v579, %v575
    %v581 = vlaneseq
    %v582 = vshrl.u32 %v581, 7
    %v583 = vsub.s32 %v533, %v582
    %v584 = vrot.slane %v500, %v583
    %v585 = vlaneseq
    %v586 = vshrl.u32 %v585, 7
    %v587 = vsub.s32 %v538, %v586
    %v588 = vrot.slane %v503, %v587
    %v589 = vsel %vm543, %v588, %v584
    %v590 = vlaneseq
    %v591 = vshrl.u32 %v590, 7
    %v592 = vsub.s32 %v533, %v591
    %v593 = vrot.slane %v506, %v592
    %v594 = vlaneseq
    %v595 = vshrl.u32 %v594, 7
    %v596 = vsub.s32 %v538, %v595
    %v597 = vrot.slane %v509, %v596
    %v598 = vsel %vm543, %v597, %v593
    %v599 = vlaneseq
    %v600 = vshrl.u32 %v599, 7
    %v601 = vsub.s32 %v533, %v600
    %v602 = vrot.slane %v512, %v601
    %v603 = vlaneseq
    %v604 = vshrl.u32 %v603, 7
    %v605 = vsub.s32 %v538, %v604
    %v606 = vrot.slane %v515, %v605
    %v607 = vsel %vm543, %v606, %v602
    %vm608 = vcmask 1041409
    %v609 = vsel %vm608, %v553, %v544
    %vm610 = vcmask 1042434
    %v611 = vsel %vm610, %v562, %v609
    %vm612 = vcmask 1043459
    %v613 = vsel %vm612, %v571, %v611
    %vm614 = vcmask 1044484
    %v615 = vsel %vm614, %v580, %v613
    %vm616 = vcmask 1045509
    %v617 = vsel %vm616, %v589, %v615
    %vm618 = vcmask 1046534
    %v619 = vsel %vm618, %v598, %v617
    %vm620 = vcmask 1047559
    %v621 = vsel %vm620, %v607, %v619
    %vm623 = vcmask 80896
    %v624 = vsel %vm623, %v621, -inf
    %625 = vmax.xlane.f32.xlu0 %v624
    %v626 = vpop.xlane.xlu0 %625
    %v628 = vlaneseq
    %v629 = vshrl.u32 %v628, 7
    %v630 = vsub.s32 0, %v629
    %v631 = vrot.slane %v626, %v630
    %v632 = vlaneseq
    %v633 = vshrl.u32 %v632, 7
    %v634 = vsub.s32 1, %v633
    %v635 = vrot.slane %v626, %v634
    %v636 = vlaneseq
    %v637 = vshrl.u32 %v636, 7
    %v638 = vsub.s32 2, %v637
    %v639 = vrot.slane %v626, %v638
    %v640 = vlaneseq
    %v641 = vshrl.u32 %v640, 7
    %v642 = vsub.s32 3, %v641
    %v643 = vrot.slane %v626, %v642
    %v644 = vlaneseq
    %v645 = vshrl.u32 %v644, 7
    %v646 = vsub.s32 4, %v645
    %v647 = vrot.slane %v626, %v646
    %v648 = vlaneseq
    %v649 = vshrl.u32 %v648, 7
    %v650 = vsub.s32 5, %v649
    %v651 = vrot.slane %v626, %v650
    %v652 = vlaneseq
    %v653 = vshrl.u32 %v652, 7
    %v654 = vsub.s32 6, %v653
    %v655 = vrot.slane %v626, %v654
    %v656 = vlaneseq
    %v657 = vshrl.u32 %v656, 7
    %v658 = vsub.s32 7, %v657
    %v659 = vrot.slane %v626, %v658
    %v668 = vsub.f32 %v469, %v631
    %v669 = vsub.f32 %v473, %v631
    %v670 = vsub.f32 %v476, %v635
    %v671 = vsub.f32 %v479, %v635
    %v672 = vsub.f32 %v482, %v639
    %v673 = vsub.f32 %v485, %v639
    %v674 = vsub.f32 %v488, %v643
    %v675 = vsub.f32 %v491, %v643
    %v676 = vsub.f32 %v494, %v647
    %v677 = vsub.f32 %v497, %v647
    %v678 = vsub.f32 %v500, %v651
    %v679 = vsub.f32 %v503, %v651
    %v680 = vsub.f32 %v506, %v655
    %v681 = vsub.f32 %v509, %v655
    %v682 = vsub.f32 %v512, %v659
    %v683 = vsub.f32 %v515, %v659
    %v684 = vmul.f32 %v668, 1.442695
    %v685 = vpow.pop %v684
    %v686 = vmul.f32 %v669, 1.442695
    %v687 = vpow.pop %v686
    %v688 = vmul.f32 %v670, 1.442695
    %v689 = vpow.pop %v688
    %v690 = vmul.f32 %v671, 1.442695
    %v691 = vpow.pop %v690
    %v692 = vmul.f32 %v672, 1.442695
    %v693 = vpow.pop %v692
    %v694 = vmul.f32 %v673, 1.442695
    %v695 = vpow.pop %v694
    %v696 = vmul.f32 %v674, 1.442695
    %v697 = vpow.pop %v696
    %v698 = vmul.f32 %v675, 1.442695
    %v699 = vpow.pop %v698
    %v700 = vmul.f32 %v676, 1.442695
    %v701 = vpow.pop %v700
    %v702 = vmul.f32 %v677, 1.442695
    %v703 = vpow.pop %v702
    %v704 = vmul.f32 %v678, 1.442695
    %v705 = vpow.pop %v704
    %v706 = vmul.f32 %v679, 1.442695
    %v707 = vpow.pop %v706
    %v708 = vmul.f32 %v680, 1.442695
    %v709 = vpow.pop %v708
    %v710 = vmul.f32 %v681, 1.442695
    %v711 = vpow.pop %v710
    %v712 = vmul.f32 %v682, 1.442695
    %v713 = vpow.pop %v712
    %v714 = vmul.f32 %v683, 1.442695
    %v715 = vpow.pop %v714
    %732 = vset.pattern.permute.xlu0 0
    %733 = vperm.xlu0 %732, %v685
    %v734 = vpop.permute.xlu0 %733
    %735 = vset.pattern.permute.xlu0 0
    %736 = vperm.xlu0 %735, %v687
    %v737 = vpop.permute.xlu0 %736
    %738 = vset.pattern.permute.xlu0 0
    %739 = vperm.xlu0 %738, %v689
    %v740 = vpop.permute.xlu0 %739
    %741 = vset.pattern.permute.xlu0 0
    %742 = vperm.xlu0 %741, %v691
    %v743 = vpop.permute.xlu0 %742
    %744 = vset.pattern.permute.xlu0 0
    %745 = vperm.xlu0 %744, %v693
    %v746 = vpop.permute.xlu0 %745
    %747 = vset.pattern.permute.xlu0 0
    %748 = vperm.xlu0 %747, %v695
    %v749 = vpop.permute.xlu0 %748
    %750 = vset.pattern.permute.xlu0 0
    %751 = vperm.xlu0 %750, %v697
    %v752 = vpop.permute.xlu0 %751
    %753 = vset.pattern.permute.xlu0 0
    %754 = vperm.xlu0 %753, %v699
    %v755 = vpop.permute.xlu0 %754
    %756 = vset.pattern.permute.xlu0 0
    %757 = vperm.xlu0 %756, %v701
    %v758 = vpop.permute.xlu0 %757
    %759 = vset.pattern.permute.xlu0 0
    %760 = vperm.xlu0 %759, %v703
    %v761 = vpop.permute.xlu0 %760
    %762 = vset.pattern.permute.xlu0 0
    %763 = vperm.xlu0 %762, %v705
    %v764 = vpop.permute.xlu0 %763
    %765 = vset.pattern.permute.xlu0 0
    %766 = vperm.xlu0 %765, %v707
    %v767 = vpop.permute.xlu0 %766
    %768 = vset.pattern.permute.xlu0 0
    %769 = vperm.xlu0 %768, %v709
    %v770 = vpop.permute.xlu0 %769
    %771 = vset.pattern.permute.xlu0 0
    %772 = vperm.xlu0 %771, %v711
    %v773 = vpop.permute.xlu0 %772
    %774 = vset.pattern.permute.xlu0 0
    %775 = vperm.xlu0 %774, %v713
    %v776 = vpop.permute.xlu0 %775
    %777 = vset.pattern.permute.xlu0 0
    %778 = vperm.xlu0 %777, %v715
    %v779 = vpop.permute.xlu0 %778
    %v780 = vlaneseq
    %v781 = vshrl.u32 %v780, 7
    %v782 = vsub.s32 %v533, %v781
    %v783 = vrot.slane %v734, %v782
    %v784 = vlaneseq
    %v785 = vshrl.u32 %v784, 7
    %v786 = vsub.s32 %v538, %v785
    %v787 = vrot.slane %v737, %v786
    %v788 = vsel %vm543, %v787, %v783
    %v789 = vlaneseq
    %v790 = vshrl.u32 %v789, 7
    %v791 = vsub.s32 %v533, %v790
    %v792 = vrot.slane %v740, %v791
    %v793 = vlaneseq
    %v794 = vshrl.u32 %v793, 7
    %v795 = vsub.s32 %v538, %v794
    %v796 = vrot.slane %v743, %v795
    %v797 = vsel %vm543, %v796, %v792
    %v798 = vlaneseq
    %v799 = vshrl.u32 %v798, 7
    %v800 = vsub.s32 %v533, %v799
    %v801 = vrot.slane %v746, %v800
    %v802 = vlaneseq
    %v803 = vshrl.u32 %v802, 7
    %v804 = vsub.s32 %v538, %v803
    %v805 = vrot.slane %v749, %v804
    %v806 = vsel %vm543, %v805, %v801
    %v807 = vlaneseq
    %v808 = vshrl.u32 %v807, 7
    %v809 = vsub.s32 %v533, %v808
    %v810 = vrot.slane %v752, %v809
    %v811 = vlaneseq
    %v812 = vshrl.u32 %v811, 7
    %v813 = vsub.s32 %v538, %v812
    %v814 = vrot.slane %v755, %v813
    %v815 = vsel %vm543, %v814, %v810
    %v816 = vlaneseq
    %v817 = vshrl.u32 %v816, 7
    %v818 = vsub.s32 %v533, %v817
    %v819 = vrot.slane %v758, %v818
    %v820 = vlaneseq
    %v821 = vshrl.u32 %v820, 7
    %v822 = vsub.s32 %v538, %v821
    %v823 = vrot.slane %v761, %v822
    %v824 = vsel %vm543, %v823, %v819
    %v825 = vlaneseq
    %v826 = vshrl.u32 %v825, 7
    %v827 = vsub.s32 %v533, %v826
    %v828 = vrot.slane %v764, %v827
    %v829 = vlaneseq
    %v830 = vshrl.u32 %v829, 7
    %v831 = vsub.s32 %v538, %v830
    %v832 = vrot.slane %v767, %v831
    %v833 = vsel %vm543, %v832, %v828
    %v834 = vlaneseq
    %v835 = vshrl.u32 %v834, 7
    %v836 = vsub.s32 %v533, %v835
    %v837 = vrot.slane %v770, %v836
    %v838 = vlaneseq
    %v839 = vshrl.u32 %v838, 7
    %v840 = vsub.s32 %v538, %v839
    %v841 = vrot.slane %v773, %v840
    %v842 = vsel %vm543, %v841, %v837
    %v843 = vlaneseq
    %v844 = vshrl.u32 %v843, 7
    %v845 = vsub.s32 %v533, %v844
    %v846 = vrot.slane %v776, %v845
    %v847 = vlaneseq
    %v848 = vshrl.u32 %v847, 7
    %v849 = vsub.s32 %v538, %v848
    %v850 = vrot.slane %v779, %v849
    %v851 = vsel %vm543, %v850, %v846
    %v852 = vsel %vm608, %v797, %v788
    %v853 = vsel %vm610, %v806, %v852
    %v854 = vsel %vm612, %v815, %v853
    %v855 = vsel %vm614, %v824, %v854
    %v856 = vsel %vm616, %v833, %v855
    %v857 = vsel %vm618, %v842, %v856
    %v858 = vsel %vm620, %v851, %v857
    %v860 = vsel %vm623, %v858, 0.0
    %861 = vadd.xlane.f32.xlu0 %v860
    %v862 = vpop.xlane.xlu0 %861
    %v863 = vrcp.pop %v862
    %v865 = vlaneseq
    %v866 = vshrl.u32 %v865, 7
    %v867 = vsub.s32 0, %v866
    %v868 = vrot.slane %v863, %v867
    %v869 = vlaneseq
    %v870 = vshrl.u32 %v869, 7
    %v871 = vsub.s32 1, %v870
    %v872 = vrot.slane %v863, %v871
    %v873 = vlaneseq
    %v874 = vshrl.u32 %v873, 7
    %v875 = vsub.s32 2, %v874
    %v876 = vrot.slane %v863, %v875
    %v877 = vlaneseq
    %v878 = vshrl.u32 %v877, 7
    %v879 = vsub.s32 3, %v878
    %v880 = vrot.slane %v863, %v879
    %v881 = vlaneseq
    %v882 = vshrl.u32 %v881, 7
    %v883 = vsub.s32 4, %v882
    %v884 = vrot.slane %v863, %v883
    %v885 = vlaneseq
    %v886 = vshrl.u32 %v885, 7
    %v887 = vsub.s32 5, %v886
    %v888 = vrot.slane %v863, %v887
    %v889 = vlaneseq
    %v890 = vshrl.u32 %v889, 7
    %v891 = vsub.s32 6, %v890
    %v892 = vrot.slane %v863, %v891
    %v893 = vlaneseq
    %v894 = vshrl.u32 %v893, 7
    %v895 = vsub.s32 7, %v894
    %v896 = vrot.slane %v863, %v895
    %v905 = vmul.f32 %v685, %v868
    %v906 = vmul.f32 %v687, %v868
    %v907 = vmul.f32 %v689, %v872
    %v908 = vmul.f32 %v691, %v872
    %v909 = vmul.f32 %v693, %v876
    %v910 = vmul.f32 %v695, %v876
    %v911 = vmul.f32 %v697, %v880
    %v912 = vmul.f32 %v699, %v880
    %v913 = vmul.f32 %v701, %v884
    %v914 = vmul.f32 %v703, %v884
    %v915 = vmul.f32 %v705, %v888
    %v916 = vmul.f32 %v707, %v888
    %v917 = vmul.f32 %v709, %v892
    %v918 = vmul.f32 %v711, %v892
    %v919 = vmul.f32 %v713, %v896
    %v920 = vmul.f32 %v715, %v896
    %922 = vset.pattern.permute.xlu0 0
    %923 = vperm.xlu0 %922, %v905
    %v924 = vpop.permute.xlu0 %923
    %927 = vset.pattern.permute.xlu0 0
    %928 = vperm.xlu0 %927, %v906
    %v929 = vpop.permute.xlu0 %928
    %932 = vset.pattern.permute.xlu0 0
    %933 = vperm.xlu0 %932, %v907
    %v934 = vpop.permute.xlu0 %933
    %937 = vset.pattern.permute.xlu0 0
    %938 = vperm.xlu0 %937, %v908
    %v939 = vpop.permute.xlu0 %938
    %942 = vset.pattern.permute.xlu0 0
    %943 = vperm.xlu0 %942, %v909
    %v944 = vpop.permute.xlu0 %943
    %947 = vset.pattern.permute.xlu0 0
    %948 = vperm.xlu0 %947, %v910
    %v949 = vpop.permute.xlu0 %948
    %952 = vset.pattern.permute.xlu0 0
    %953 = vperm.xlu0 %952, %v911
    %v954 = vpop.permute.xlu0 %953
    %957 = vset.pattern.permute.xlu0 0
    %958 = vperm.xlu0 %957, %v912
    %v959 = vpop.permute.xlu0 %958
    %962 = vset.pattern.permute.xlu0 0
    %963 = vperm.xlu0 %962, %v913
    %v964 = vpop.permute.xlu0 %963
    %967 = vset.pattern.permute.xlu0 0
    %968 = vperm.xlu0 %967, %v914
    %v969 = vpop.permute.xlu0 %968
    %972 = vset.pattern.permute.xlu0 0
    %973 = vperm.xlu0 %972, %v915
    %v974 = vpop.permute.xlu0 %973
    %977 = vset.pattern.permute.xlu0 0
    %978 = vperm.xlu0 %977, %v916
    %v979 = vpop.permute.xlu0 %978
    %982 = vset.pattern.permute.xlu0 0
    %983 = vperm.xlu0 %982, %v917
    %v984 = vpop.permute.xlu0 %983
    %987 = vset.pattern.permute.xlu0 0
    %988 = vperm.xlu0 %987, %v918
    %v989 = vpop.permute.xlu0 %988
    %992 = vset.pattern.permute.xlu0 0
    %993 = vperm.xlu0 %992, %v919
    %v994 = vpop.permute.xlu0 %993
    %997 = vset.pattern.permute.xlu0 0
    %998 = vperm.xlu0 %997, %v920
    %v999 = vpop.permute.xlu0 %998
    %v1001 = vmul.f32 %v924, %v67
    %v1002 = vmul.f32 %v929, %v68
    %v1003 = vmul.f32 %v934, %v69
    %v1004 = vmul.f32 %v939, %v70
    %v1005 = vmul.f32 %v944, %v71
    %v1006 = vmul.f32 %v949, %v72
    %v1007 = vmul.f32 %v954, %v73
    %v1008 = vmul.f32 %v959, %v74
    %v1009 = vmul.f32 %v964, %v75
    %v1010 = vmul.f32 %v969, %v76
    %v1011 = vmul.f32 %v974, %v77
    %v1012 = vmul.f32 %v979, %v78
    %v1013 = vmul.f32 %v984, %v79
    %v1014 = vmul.f32 %v989, %v80
    %v1015 = vmul.f32 %v994, %v81
    %v1016 = vmul.f32 %v999, %v82
    %v1017 = vsel %vm235, %v1001, 0.0
    %v1018 = vsel %vm470, %v1002, 0.0
    %v1019 = vadd.f32 %v1017, %v1018
    %v1020 = vrot.slane %v1019, 4
    %v1021 = vadd.f32 %v1019, %v1020
    %v1022 = vrot.slane %v1021, 2
    %v1023 = vadd.f32 %v1021, %v1022
    %v1024 = vrot.slane %v1023, 1
    %v1025 = vadd.f32 %v1023, %v1024
    %v1026 = vsel %vm235, %v1003, 0.0
    %v1027 = vsel %vm470, %v1004, 0.0
    %v1028 = vadd.f32 %v1026, %v1027
    %v1029 = vrot.slane %v1028, 4
    %v1030 = vadd.f32 %v1028, %v1029
    %v1031 = vrot.slane %v1030, 2
    %v1032 = vadd.f32 %v1030, %v1031
    %v1033 = vrot.slane %v1032, 1
    %v1034 = vadd.f32 %v1032, %v1033
    %v1035 = vsel %vm235, %v1005, 0.0
    %v1036 = vsel %vm470, %v1006, 0.0
    %v1037 = vadd.f32 %v1035, %v1036
    %v1038 = vrot.slane %v1037, 4
    %v1039 = vadd.f32 %v1037, %v1038
    %v1040 = vrot.slane %v1039, 2
    %v1041 = vadd.f32 %v1039, %v1040
    %v1042 = vrot.slane %v1041, 1
    %v1043 = vadd.f32 %v1041, %v1042
    %v1044 = vsel %vm235, %v1007, 0.0
    %v1045 = vsel %vm470, %v1008, 0.0
    %v1046 = vadd.f32 %v1044, %v1045
    %v1047 = vrot.slane %v1046, 4
    %v1048 = vadd.f32 %v1046, %v1047
    %v1049 = vrot.slane %v1048, 2
    %v1050 = vadd.f32 %v1048, %v1049
    %v1051 = vrot.slane %v1050, 1
    %v1052 = vadd.f32 %v1050, %v1051
    %v1053 = vsel %vm235, %v1009, 0.0
    %v1054 = vsel %vm470, %v1010, 0.0
    %v1055 = vadd.f32 %v1053, %v1054
    %v1056 = vrot.slane %v1055, 4
    %v1057 = vadd.f32 %v1055, %v1056
    %v1058 = vrot.slane %v1057, 2
    %v1059 = vadd.f32 %v1057, %v1058
    %v1060 = vrot.slane %v1059, 1
    %v1061 = vadd.f32 %v1059, %v1060
    %v1062 = vsel %vm235, %v1011, 0.0
    %v1063 = vsel %vm470, %v1012, 0.0
    %v1064 = vadd.f32 %v1062, %v1063
    %v1065 = vrot.slane %v1064, 4
    %v1066 = vadd.f32 %v1064, %v1065
    %v1067 = vrot.slane %v1066, 2
    %v1068 = vadd.f32 %v1066, %v1067
    %v1069 = vrot.slane %v1068, 1
    %v1070 = vadd.f32 %v1068, %v1069
    %v1071 = vsel %vm235, %v1013, 0.0
    %v1072 = vsel %vm470, %v1014, 0.0
    %v1073 = vadd.f32 %v1071, %v1072
    %v1074 = vrot.slane %v1073, 4
    %v1075 = vadd.f32 %v1073, %v1074
    %v1076 = vrot.slane %v1075, 2
    %v1077 = vadd.f32 %v1075, %v1076
    %v1078 = vrot.slane %v1077, 1
    %v1079 = vadd.f32 %v1077, %v1078
    %v1080 = vsel %vm235, %v1015, 0.0
    %v1081 = vsel %vm470, %v1016, 0.0
    %v1082 = vadd.f32 %v1080, %v1081
    %v1083 = vrot.slane %v1082, 4
    %v1084 = vadd.f32 %v1082, %v1083
    %v1085 = vrot.slane %v1084, 2
    %v1086 = vadd.f32 %v1084, %v1085
    %v1087 = vrot.slane %v1086, 1
    %v1088 = vadd.f32 %v1086, %v1087
    %v1097 = vsel %vm608, %v1034, %v1025
    %v1098 = vsel %vm610, %v1043, %v1097
    %v1099 = vsel %vm612, %v1052, %v1098
    %v1100 = vsel %vm614, %v1061, %v1099
    %v1101 = vsel %vm616, %v1070, %v1100
    %v1102 = vsel %vm618, %v1079, %v1101
    %v1103 = vsel %vm620, %v1088, %v1102
    %1105 = vrot.lane.b32.xlu0 %v344, 64
    %v1106 = vpop.permute.xlu0 %1105
    %v1108 = vsel %vm235, %v1103, %v1106
    %v1110 = vsel %vm243, %v1108, 0
    %1112 = vmatprep.subr.mxu0 0.0
    %1113 = vmatpush1.msra.mxu0 %v59
    %1114 = vmatprep.subr.mxu0 0.0
    %1115 = vmatpush1.msra.mxu0 %v60
    %1116 = vmatprep.subr.mxu0 0.0
    %1117 = vmatpush1.msra.mxu0 %v61
    %1118 = vmatprep.subr.mxu0 0.0
    %1119 = vmatpush1.msra.mxu0 %v62
    %1120 = vmatprep.subr.mxu0 0.0
    %1121 = vmatpush1.msra.mxu0 %v63
    %1122 = vmatprep.subr.mxu0 0.0
    %1123 = vmatpush1.msra.mxu0 %v64
    %1124 = vmatprep.subr.mxu0 0.0
    %1125 = vmatpush1.msra.mxu0 %v65
    %1126 = vmatprep.subr.mxu0 0.0
    %1127 = vmatpush1.msra.mxu0 %v66
    %1128 = vmatprep.subr.mxu0 0.0
    %1129 = vmatpush1.msra.mxu0 0.0
    %1130 = vmatprep.subr.mxu0 0.0
    %1131 = vmatpush1.msra.mxu0 0.0
    %1132 = vmatprep.subr.mxu0 0.0
    %1133 = vmatpush1.msra.mxu0 0.0
    %1134 = vmatprep.subr.mxu0 0.0
    %1135 = vmatpush1.msra.mxu0 0.0
    %1136 = vmatprep.subr.mxu0 0.0
    %1137 = vmatpush1.msra.mxu0 0.0
    %1138 = vmatprep.subr.mxu0 0.0
    %1139 = vmatpush1.msra.mxu0 0.0
    %1140 = vmatprep.subr.mxu0 0.0
    %1141 = vmatpush1.msra.mxu0 0.0
    %1142 = vmatprep.subr.mxu0 0.0
    %1143 = vmatpush1.msra.mxu0 0.0
    %1144 = vmatprep.subr.mxu0 0.0
    %1145 = vmatpush1.msra.mxu0 0.0
    %1146 = vmatprep.subr.mxu0 0.0
    %1147 = vmatpush1.msra.mxu0 0.0
    %1148 = vmatprep.subr.mxu0 0.0
    %1149 = vmatpush1.msra.mxu0 0.0
    %1150 = vmatprep.subr.mxu0 0.0
    %1151 = vmatpush1.msra.mxu0 0.0
    %1152 = vmatprep.subr.mxu0 0.0
    %1153 = vmatpush1.msra.mxu0 0.0
    %1154 = vmatprep.subr.mxu0 0.0
    %1155 = vmatpush1.msra.mxu0 0.0
    %1156 = vmatprep.subr.mxu0 0.0
    %1157 = vmatpush1.msra.mxu0 0.0
    %1158 = vmatprep.subr.mxu0 0.0
    %1159 = vmatpush1.msra.mxu0 0.0
    %1160 = vmatprep.subr.mxu0 0.0
    %1161 = vmatpush1.msra.mxu0 0.0
    %1162 = vmatprep.subr.mxu0 0.0
    %1163 = vmatpush1.msra.mxu0 0.0
    %1164 = vmatprep.subr.mxu0 0.0
    %1165 = vmatpush1.msra.mxu0 0.0
    %1166 = vmatprep.subr.mxu0 0.0
    %1167 = vmatpush1.msra.mxu0 0.0
    %1168 = vmatprep.subr.mxu0 0.0
    %1169 = vmatpush1.msra.mxu0 0.0
    %1170 = vmatprep.subr.mxu0 0.0
    %1171 = vmatpush1.msra.mxu0 0.0
    %1172 = vmatprep.subr.mxu0 0.0
    %1173 = vmatpush1.msra.mxu0 0.0
    %1174 = vmatprep.subr.mxu0 0.0
    %1175 = vmatpush1.msra.mxu0 0.0
    %1176 = vmatprep.mubr.f32.mxu0 0.0
    %1177 = vmatmul.mubr.f32.gmra.mrb[0].mxu0 %v1110
    %v1178 = vpop.f32.mrb[0].mxu0
    %v1179 = vadd.f32 0.0, %v1178
    %v1180 = vpop.f32.mrb[0].mxu0
    %1181 = vdwg.mxu0
    %v1182 = vtanh.pop %v1179
    %1183 = vst.msk [vmem:[#allocation2] sm:$0xff] %vm235, %v1182
    %s1184 = scalar_lea.vmem %s0, 8
    %v1185 = vld [vmem:[%s1184] sm:$0xff]
    %1187 = vrot.lane.b32.xlu0 %v1182, 16
    %v1188 = vpop.permute.xlu0 %1187
    %1190 = vrot.lane.b32.xlu0 %v226, 80
    %v1191 = vpop.permute.xlu0 %1190
    %v1193 = vsel %vm115, %v1185, %v1188
    %v1194 = vsel %vm117, %v1193, %v1191
    %v1196 = vsel %vm125, %v1194, 0
    %1198 = vmatprep.subr.mxu0 0.0
    %1199 = vmatpush1.msra.mxu0 %v39
    %1200 = vmatprep.subr.mxu0 0.0
    %1201 = vmatpush1.msra.mxu0 %v40
    %1202 = vmatprep.subr.mxu0 0.0
    %1203 = vmatpush1.msra.mxu0 %v41
    %1204 = vmatprep.subr.mxu0 0.0
    %1205 = vmatpush1.msra.mxu0 %v42
    %1206 = vmatprep.subr.mxu0 0.0
    %1207 = vmatpush1.msra.mxu0 %v43
    %1208 = vmatprep.subr.mxu0 0.0
    %1209 = vmatpush1.msra.mxu0 %v44
    %1210 = vmatprep.subr.mxu0 0.0
    %1211 = vmatpush1.msra.mxu0 %v45
    %1212 = vmatprep.subr.mxu0 0.0
    %1213 = vmatpush1.msra.mxu0 %v46
    %1214 = vmatprep.subr.mxu0 0.0
    %1215 = vmatpush1.msra.mxu0 %v47
    %1216 = vmatprep.subr.mxu0 0.0
    %1217 = vmatpush1.msra.mxu0 %v48
    %1218 = vmatprep.subr.mxu0 0.0
    %1219 = vmatpush1.msra.mxu0 0.0
    %1220 = vmatprep.subr.mxu0 0.0
    %1221 = vmatpush1.msra.mxu0 0.0
    %1222 = vmatprep.subr.mxu0 0.0
    %1223 = vmatpush1.msra.mxu0 0.0
    %1224 = vmatprep.subr.mxu0 0.0
    %1225 = vmatpush1.msra.mxu0 0.0
    %1226 = vmatprep.subr.mxu0 0.0
    %1227 = vmatpush1.msra.mxu0 0.0
    %1228 = vmatprep.subr.mxu0 0.0
    %1229 = vmatpush1.msra.mxu0 0.0
    %1230 = vmatprep.subr.mxu0 0.0
    %1231 = vmatpush1.msra.mxu0 0.0
    %1232 = vmatprep.subr.mxu0 0.0
    %1233 = vmatpush1.msra.mxu0 0.0
    %1234 = vmatprep.subr.mxu0 0.0
    %1235 = vmatpush1.msra.mxu0 0.0
    %1236 = vmatprep.subr.mxu0 0.0
    %1237 = vmatpush1.msra.mxu0 0.0
    %1238 = vmatprep.subr.mxu0 0.0
    %1239 = vmatpush1.msra.mxu0 0.0
    %1240 = vmatprep.subr.mxu0 0.0
    %1241 = vmatpush1.msra.mxu0 0.0
    %1242 = vmatprep.subr.mxu0 0.0
    %1243 = vmatpush1.msra.mxu0 0.0
    %1244 = vmatprep.subr.mxu0 0.0
    %1245 = vmatpush1.msra.mxu0 0.0
    %1246 = vmatprep.subr.mxu0 0.0
    %1247 = vmatpush1.msra.mxu0 0.0
    %1248 = vmatprep.subr.mxu0 0.0
    %1249 = vmatpush1.msra.mxu0 0.0
    %1250 = vmatprep.subr.mxu0 0.0
    %1251 = vmatpush1.msra.mxu0 0.0
    %1252 = vmatprep.subr.mxu0 0.0
    %1253 = vmatpush1.msra.mxu0 0.0
    %1254 = vmatprep.subr.mxu0 0.0
    %1255 = vmatpush1.msra.mxu0 0.0
    %1256 = vmatprep.subr.mxu0 0.0
    %1257 = vmatpush1.msra.mxu0 0.0
    %1258 = vmatprep.subr.mxu0 0.0
    %1259 = vmatpush1.msra.mxu0 0.0
    %1260 = vmatprep.subr.mxu0 0.0
    %1261 = vmatpush1.msra.mxu0 0.0
    %1262 = vmatprep.mubr.f32.mxu0 0.0
    %1263 = vmatmul.mubr.f32.gmra.mrb[0].mxu0 %v1196
    %v1264 = vpop.f32.mrb[0].mxu0
    %v1265 = vadd.f32 %v123, %v1264
    %v1266 = vpop.f32.mrb[0].mxu0
    %1267 = vdwg.mxu0
    %v1268 = vxor.u32 %v1265, 2147483648
    %v1269 = vmul.f32 %v1268, 1.442695
    %v1270 = vpow.pop %v1269
    %v1271 = vadd.f32 %v1270, 1.0
    %v1272 = vrcp.pop %v1271
    %v1273 = vmul.f32 1.0, %v1272
    %v1274 = vtanh.pop %v1265
    %v1275 = vmul.f32 %v1273, %v220
    %1277 = vrot.lane.b32.xlu0 %v1274, 64
    %v1278 = vpop.permute.xlu0 %1277
    %v1280 = vmul.f32 %v1273, %v1278
    %1282 = vrot.lane.b32.xlu0 %v1280, 32
    %v1283 = vpop.permute.xlu0 %1282
    %v1285 = vadd.f32 %v1275, %v1283
    %v1286 = vtanh.pop %v1285
    %1288 = vrot.lane.b32.xlu0 %v1286, 64
    %v1289 = vpop.permute.xlu0 %1288
    %v1291 = vmul.f32 %v1273, %v1289
    %1293 = vrot.lane.b32.xlu0 %v1291, 32
    %v1294 = vpop.permute.xlu0 %1293
    %v1296 = vsel %vm235, %v1294, %v1106
    %v1298 = vsel %vm243, %v1296, 0
    %1300 = vmatprep.subr.mxu0 0.0
    %1301 = vmatpush1.msra.mxu0 %v50
    %1302 = vmatprep.subr.mxu0 0.0
    %1303 = vmatpush1.msra.mxu0 %v51
    %1304 = vmatprep.subr.mxu0 0.0
    %1305 = vmatpush1.msra.mxu0 %v52
    %1306 = vmatprep.subr.mxu0 0.0
    %1307 = vmatpush1.msra.mxu0 %v53
    %1308 = vmatprep.subr.mxu0 0.0
    %1309 = vmatpush1.msra.mxu0 %v54
    %1310 = vmatprep.subr.mxu0 0.0
    %1311 = vmatpush1.msra.mxu0 %v55
    %1312 = vmatprep.subr.mxu0 0.0
    %1313 = vmatpush1.msra.mxu0 %v56
    %1314 = vmatprep.subr.mxu0 0.0
    %1315 = vmatpush1.msra.mxu0 %v57
    %1316 = vmatprep.subr.mxu0 0.0
    %1317 = vmatpush1.msra.mxu0 0.0
    %1318 = vmatprep.subr.mxu0 0.0
    %1319 = vmatpush1.msra.mxu0 0.0
    %1320 = vmatprep.subr.mxu0 0.0
    %1321 = vmatpush1.msra.mxu0 0.0
    %1322 = vmatprep.subr.mxu0 0.0
    %1323 = vmatpush1.msra.mxu0 0.0
    %1324 = vmatprep.subr.mxu0 0.0
    %1325 = vmatpush1.msra.mxu0 0.0
    %1326 = vmatprep.subr.mxu0 0.0
    %1327 = vmatpush1.msra.mxu0 0.0
    %1328 = vmatprep.subr.mxu0 0.0
    %1329 = vmatpush1.msra.mxu0 0.0
    %1330 = vmatprep.subr.mxu0 0.0
    %1331 = vmatpush1.msra.mxu0 0.0
    %1332 = vmatprep.subr.mxu0 0.0
    %1333 = vmatpush1.msra.mxu0 0.0
    %1334 = vmatprep.subr.mxu0 0.0
    %1335 = vmatpush1.msra.mxu0 0.0
    %1336 = vmatprep.subr.mxu0 0.0
    %1337 = vmatpush1.msra.mxu0 0.0
    %1338 = vmatprep.subr.mxu0 0.0
    %1339 = vmatpush1.msra.mxu0 0.0
    %1340 = vmatprep.subr.mxu0 0.0
    %1341 = vmatpush1.msra.mxu0 0.0
    %1342 = vmatprep.subr.mxu0 0.0
    %1343 = vmatpush1.msra.mxu0 0.0
    %1344 = vmatprep.subr.mxu0 0.0
    %1345 = vmatpush1.msra.mxu0 0.0
    %1346 = vmatprep.subr.mxu0 0.0
    %1347 = vmatpush1.msra.mxu0 0.0
    %1348 = vmatprep.subr.mxu0 0.0
    %1349 = vmatpush1.msra.mxu0 0.0
    %1350 = vmatprep.subr.mxu0 0.0
    %1351 = vmatpush1.msra.mxu0 0.0
    %1352 = vmatprep.subr.mxu0 0.0
    %1353 = vmatpush1.msra.mxu0 0.0
    %1354 = vmatprep.subr.mxu0 0.0
    %1355 = vmatpush1.msra.mxu0 0.0
    %1356 = vmatprep.subr.mxu0 0.0
    %1357 = vmatpush1.msra.mxu0 0.0
    %1358 = vmatprep.subr.mxu0 0.0
    %1359 = vmatpush1.msra.mxu0 0.0
    %1360 = vmatprep.subr.mxu0 0.0
    %1361 = vmatpush1.msra.mxu0 0.0
    %1362 = vmatprep.subr.mxu0 0.0
    %1363 = vmatpush1.msra.mxu0 0.0
    %1364 = vmatprep.mubr.f32.mxu0 0.0
    %1365 = vmatmul.mubr.f32.gmra.mrb[0].mxu0 %v1298
    %v1366 = vpop.f32.mrb[0].mxu0
    %v1367 = vadd.f32 %v241, %v1366
    %v1368 = vpop.f32.mrb[0].mxu0
    %1369 = vdwg.mxu0
    %v1370 = vxor.u32 %v1367, 2147483648
    %v1371 = vmul.f32 %v1370, 1.442695
    %v1372 = vpow.pop %v1371
    %v1373 = vadd.f32 %v1372, 1.0
    %v1374 = vrcp.pop %v1373
    %v1375 = vmul.f32 1.0, %v1374
    %v1376 = vtanh.pop %v1367
    %v1377 = vmul.f32 %v1375, %v338
    %1379 = vrot.lane.b32.xlu0 %v1376, 64
    %v1380 = vpop.permute.xlu0 %1379
    %v1382 = vmul.f32 %v1375, %v1380
    %1384 = vrot.lane.b32.xlu0 %v1382, 32
    %v1385 = vpop.permute.xlu0 %1384
    %v1387 = vadd.f32 %v1377, %v1385
    %v1388 = vtanh.pop %v1387
    %1390 = vrot.lane.b32.xlu0 %v1388, 64
    %v1391 = vpop.permute.xlu0 %1390
    %v1393 = vmul.f32 %v1375, %v1391
    %v1395 = vcombine.high %v1393, %v1393
    %v1397 = vunpack.c.l.s4 1966171168
    %v1398 = vunpack.c.0.s8 %v1397
    %v1399 = vlaneseq
    %v1400 = vshrl.u32 %v1399, 7
    %v1401 = vsub.s32 %v1398, %v1400
    %v1402 = vrot.slane %v1393, %v1401
    %v1404 = vunpack.c.l.s4 1966171168
    %v1405 = vunpack.c.0.s8 %v1404
    %v1406 = vlaneseq
    %v1407 = vshrl.u32 %v1406, 7
    %v1408 = vsub.s32 %v1405, %v1407
    %v1409 = vrot.slane %v1395, %v1408
    %v1410 = vcombine.high %v1402, %v1402
    %v1411 = vcombine.high %v1409, %v1409
    %v1413 = vunpack.c.l.s4 1966171168
    %v1414 = vunpack.c.0.s8 %v1413
    %v1415 = vlaneseq
    %v1416 = vshrl.u32 %v1415, 7
    %v1417 = vsub.s32 %v1414, %v1416
    %v1418 = vrot.slane %v1402, %v1417
    %v1420 = vunpack.c.l.s4 1966171168
    %v1421 = vunpack.c.0.s8 %v1420
    %v1422 = vlaneseq
    %v1423 = vshrl.u32 %v1422, 7
    %v1424 = vsub.s32 %v1421, %v1423
    %v1425 = vrot.slane %v1409, %v1424
    %v1427 = vunpack.c.l.s4 1966171168
    %v1428 = vunpack.c.0.s8 %v1427
    %v1429 = vlaneseq
    %v1430 = vshrl.u32 %v1429, 7
    %v1431 = vsub.s32 %v1428, %v1430
    %v1432 = vrot.slane %v1410, %v1431
    %v1434 = vunpack.c.l.s4 1966171168
    %v1435 = vunpack.c.0.s8 %v1434
    %v1436 = vlaneseq
    %v1437 = vshrl.u32 %v1436, 7
    %v1438 = vsub.s32 %v1435, %v1437
    %v1439 = vrot.slane %v1411, %v1438
    %v1440 = vcombine.high %v1418, %v1418
    %v1441 = vcombine.high %v1425, %v1425
    %v1442 = vcombine.high %v1432, %v1432
    %v1443 = vcombine.high %v1439, %v1439
    %v1444 = vlaneseq
    %v1445 = vshrl.u32 %v1444, 7
    %v1446 = vsub.s32 0, %v1445
    %v1447 = vrot.slane %v1418, %v1446
    %v1448 = vlaneseq
    %v1449 = vshrl.u32 %v1448, 7
    %v1450 = vsub.s32 0, %v1449
    %v1451 = vrot.slane %v1432, %v1450
    %v1452 = vlaneseq
    %v1453 = vshrl.u32 %v1452, 7
    %v1454 = vsub.s32 0, %v1453
    %v1455 = vrot.slane %v1440, %v1454
    %v1456 = vlaneseq
    %v1457 = vshrl.u32 %v1456, 7
    %v1458 = vsub.s32 0, %v1457
    %v1459 = vrot.slane %v1442, %v1458
    %v1460 = vlaneseq
    %v1461 = vshrl.u32 %v1460, 7
    %v1462 = vsub.s32 0, %v1461
    %v1463 = vrot.slane %v1425, %v1462
    %v1464 = vlaneseq
    %v1465 = vshrl.u32 %v1464, 7
    %v1466 = vsub.s32 0, %v1465
    %v1467 = vrot.slane %v1439, %v1466
    %v1468 = vlaneseq
    %v1469 = vshrl.u32 %v1468, 7
    %v1470 = vsub.s32 0, %v1469
    %v1471 = vrot.slane %v1441, %v1470
    %v1472 = vlaneseq
    %v1473 = vshrl.u32 %v1472, 7
    %v1474 = vsub.s32 0, %v1473
    %v1475 = vrot.slane %v1443, %v1474
    %1476 = vrot.lane.b32.xlu0 %v1447, 32
    %v1477 = vpop.permute.xlu0 %1476
    %1478 = vrot.lane.b32.xlu0 %v1451, 32
    %v1479 = vpop.permute.xlu0 %1478
    %1480 = vrot.lane.b32.xlu0 %v1455, 32
    %v1481 = vpop.permute.xlu0 %1480
    %1482 = vrot.lane.b32.xlu0 %v1459, 32
    %v1483 = vpop.permute.xlu0 %1482
    %1484 = vrot.lane.b32.xlu0 %v1463, 32
    %v1485 = vpop.permute.xlu0 %1484
    %1486 = vrot.lane.b32.xlu0 %v1467, 32
    %v1487 = vpop.permute.xlu0 %1486
    %1488 = vrot.lane.b32.xlu0 %v1471, 32
    %v1489 = vpop.permute.xlu0 %1488
    %1490 = vrot.lane.b32.xlu0 %v1475, 32
    %v1491 = vpop.permute.xlu0 %1490
    %v1500 = vmul.f32 %v83, %v1477
    %v1501 = vmul.f32 %v84, %v1477
    %v1502 = vmul.f32 %v85, %v1479
    %v1503 = vmul.f32 %v86, %v1479
    %v1504 = vmul.f32 %v87, %v1481
    %v1505 = vmul.f32 %v88, %v1481
    %v1506 = vmul.f32 %v89, %v1483
    %v1507 = vmul.f32 %v90, %v1483
    %v1508 = vmul.f32 %v91, %v1485
    %v1509 = vmul.f32 %v92, %v1485
    %v1510 = vmul.f32 %v93, %v1487
    %v1511 = vmul.f32 %v94, %v1487
    %v1512 = vmul.f32 %v95, %v1489
    %v1513 = vmul.f32 %v96, %v1489
    %v1514 = vmul.f32 %v97, %v1491
    %v1515 = vmul.f32 %v98, %v1491
    %v1516 = vsel %vm235, %v1500, 0.0
    %1517 = vadd.xlane.f32.xlu0 %v1516
    %v1518 = vpop.xlane.xlu0 %1517
    %v1519 = vsel %vm470, %v1501, 0.0
    %1520 = vadd.xlane.f32.xlu0 %v1519
    %v1521 = vpop.xlane.xlu0 %1520
    %v1522 = vsel %vm235, %v1502, 0.0
    %1523 = vadd.xlane.f32.xlu0 %v1522
    %v1524 = vpop.xlane.xlu0 %1523
    %v1525 = vsel %vm470, %v1503, 0.0
    %1526 = vadd.xlane.f32.xlu0 %v1525
    %v1527 = vpop.xlane.xlu0 %1526
    %v1528 = vsel %vm235, %v1504, 0.0
    %1529 = vadd.xlane.f32.xlu0 %v1528
    %v1530 = vpop.xlane.xlu0 %1529
    %v1531 = vsel %vm470, %v1505, 0.0
    %1532 = vadd.xlane.f32.xlu0 %v1531
    %v1533 = vpop.xlane.xlu0 %1532
    %v1534 = vsel %vm235, %v1506, 0.0
    %1535 = vadd.xlane.f32.xlu0 %v1534
    %v1536 = vpop.xlane.xlu0 %1535
    %v1537 = vsel %vm470, %v1507, 0.0
    %1538 = vadd.xlane.f32.xlu0 %v1537
    %v1539 = vpop.xlane.xlu0 %1538
    %v1540 = vsel %vm235, %v1508, 0.0
    %1541 = vadd.xlane.f32.xlu0 %v1540
    %v1542 = vpop.xlane.xlu0 %1541
    %v1543 = vsel %vm470, %v1509, 0.0
    %1544 = vadd.xlane.f32.xlu0 %v1543
    %v1545 = vpop.xlane.xlu0 %1544
    %v1546 = vsel %vm235, %v1510, 0.0
    %1547 = vadd.xlane.f32.xlu0 %v1546
    %v1548 = vpop.xlane.xlu0 %1547
    %v1549 = vsel %vm470, %v1511, 0.0
    %1550 = vadd.xlane.f32.xlu0 %v1549
    %v1551 = vpop.xlane.xlu0 %1550
    %v1552 = vsel %vm235, %v1512, 0.0
    %1553 = vadd.xlane.f32.xlu0 %v1552
    %v1554 = vpop.xlane.xlu0 %1553
    %v1555 = vsel %vm470, %v1513, 0.0
    %1556 = vadd.xlane.f32.xlu0 %v1555
    %v1557 = vpop.xlane.xlu0 %1556
    %v1558 = vsel %vm235, %v1514, 0.0
    %1559 = vadd.xlane.f32.xlu0 %v1558
    %v1560 = vpop.xlane.xlu0 %1559
    %v1561 = vsel %vm470, %v1515, 0.0
    %1562 = vadd.xlane.f32.xlu0 %v1561
    %v1563 = vpop.xlane.xlu0 %1562
    %v1580 = vlaneseq
    %v1581 = vshrl.u32 %v1580, 7
    %v1582 = vsub.s32 %v533, %v1581
    %v1583 = vrot.slane %v1518, %v1582
    %v1584 = vlaneseq
    %v1585 = vshrl.u32 %v1584, 7
    %v1586 = vsub.s32 %v538, %v1585
    %v1587 = vrot.slane %v1521, %v1586
    %v1588 = vsel %vm543, %v1587, %v1583
    %v1589 = vlaneseq
    %v1590 = vshrl.u32 %v1589, 7
    %v1591 = vsub.s32 %v533, %v1590
    %v1592 = vrot.slane %v1524, %v1591
    %v1593 = vlaneseq
    %v1594 = vshrl.u32 %v1593, 7
    %v1595 = vsub.s32 %v538, %v1594
    %v1596 = vrot.slane %v1527, %v1595
    %v1597 = vsel %vm543, %v1596, %v1592
    %v1598 = vlaneseq
    %v1599 = vshrl.u32 %v1598, 7
    %v1600 = vsub.s32 %v533, %v1599
    %v1601 = vrot.slane %v1530, %v1600
    %v1602 = vlaneseq
    %v1603 = vshrl.u32 %v1602, 7
    %v1604 = vsub.s32 %v538, %v1603
    %v1605 = vrot.slane %v1533, %v1604
    %v1606 = vsel %vm543, %v1605, %v1601
    %v1607 = vlaneseq
    %v1608 = vshrl.u32 %v1607, 7
    %v1609 = vsub.s32 %v533, %v1608
    %v1610 = vrot.slane %v1536, %v1609
    %v1611 = vlaneseq
    %v1612 = vshrl.u32 %v1611, 7
    %v1613 = vsub.s32 %v538, %v1612
    %v1614 = vrot.slane %v1539, %v1613
    %v1615 = vsel %vm543, %v1614, %v1610
    %v1616 = vlaneseq
    %v1617 = vshrl.u32 %v1616, 7
    %v1618 = vsub.s32 %v533, %v1617
    %v1619 = vrot.slane %v1542, %v1618
    %v1620 = vlaneseq
    %v1621 = vshrl.u32 %v1620, 7
    %v1622 = vsub.s32 %v538, %v1621
    %v1623 = vrot.slane %v1545, %v1622
    %v1624 = vsel %vm543, %v1623, %v1619
    %v1625 = vlaneseq
    %v1626 = vshrl.u32 %v1625, 7
    %v1627 = vsub.s32 %v533, %v1626
    %v1628 = vrot.slane %v1548, %v1627
    %v1629 = vlaneseq
    %v1630 = vshrl.u32 %v1629, 7
    %v1631 = vsub.s32 %v538, %v1630
    %v1632 = vrot.slane %v1551, %v1631
    %v1633 = vsel %vm543, %v1632, %v1628
    %v1634 = vlaneseq
    %v1635 = vshrl.u32 %v1634, 7
    %v1636 = vsub.s32 %v533, %v1635
    %v1637 = vrot.slane %v1554, %v1636
    %v1638 = vlaneseq
    %v1639 = vshrl.u32 %v1638, 7
    %v1640 = vsub.s32 %v538, %v1639
    %v1641 = vrot.slane %v1557, %v1640
    %v1642 = vsel %vm543, %v1641, %v1637
    %v1643 = vlaneseq
    %v1644 = vshrl.u32 %v1643, 7
    %v1645 = vsub.s32 %v533, %v1644
    %v1646 = vrot.slane %v1560, %v1645
    %v1647 = vlaneseq
    %v1648 = vshrl.u32 %v1647, 7
    %v1649 = vsub.s32 %v538, %v1648
    %v1650 = vrot.slane %v1563, %v1649
    %v1651 = vsel %vm543, %v1650, %v1646
    %v1652 = vsel %vm608, %v1597, %v1588
    %v1653 = vsel %vm610, %v1606, %v1652
    %v1654 = vsel %vm612, %v1615, %v1653
    %v1655 = vsel %vm614, %v1624, %v1654
    %v1656 = vsel %vm616, %v1633, %v1655
    %v1657 = vsel %vm618, %v1642, %v1656
    %v1658 = vsel %vm620, %v1651, %v1657
    %v1660 = vsel %vm623, %v1658, -inf
    %1661 = vmax.xlane.f32.xlu0 %v1660
    %v1662 = vpop.xlane.xlu0 %1661
    %v1664 = vlaneseq
    %v1665 = vshrl.u32 %v1664, 7
    %v1666 = vsub.s32 0, %v1665
    %v1667 = vrot.slane %v1662, %v1666
    %v1668 = vlaneseq
    %v1669 = vshrl.u32 %v1668, 7
    %v1670 = vsub.s32 1, %v1669
    %v1671 = vrot.slane %v1662, %v1670
    %v1672 = vlaneseq
    %v1673 = vshrl.u32 %v1672, 7
    %v1674 = vsub.s32 2, %v1673
    %v1675 = vrot.slane %v1662, %v1674
    %v1676 = vlaneseq
    %v1677 = vshrl.u32 %v1676, 7
    %v1678 = vsub.s32 3, %v1677
    %v1679 = vrot.slane %v1662, %v1678
    %v1680 = vlaneseq
    %v1681 = vshrl.u32 %v1680, 7
    %v1682 = vsub.s32 4, %v1681
    %v1683 = vrot.slane %v1662, %v1682
    %v1684 = vlaneseq
    %v1685 = vshrl.u32 %v1684, 7
    %v1686 = vsub.s32 5, %v1685
    %v1687 = vrot.slane %v1662, %v1686
    %v1688 = vlaneseq
    %v1689 = vshrl.u32 %v1688, 7
    %v1690 = vsub.s32 6, %v1689
    %v1691 = vrot.slane %v1662, %v1690
    %v1692 = vlaneseq
    %v1693 = vshrl.u32 %v1692, 7
    %v1694 = vsub.s32 7, %v1693
    %v1695 = vrot.slane %v1662, %v1694
    %v1704 = vsub.f32 %v1518, %v1667
    %v1705 = vsub.f32 %v1521, %v1667
    %v1706 = vsub.f32 %v1524, %v1671
    %v1707 = vsub.f32 %v1527, %v1671
    %v1708 = vsub.f32 %v1530, %v1675
    %v1709 = vsub.f32 %v1533, %v1675
    %v1710 = vsub.f32 %v1536, %v1679
    %v1711 = vsub.f32 %v1539, %v1679
    %v1712 = vsub.f32 %v1542, %v1683
    %v1713 = vsub.f32 %v1545, %v1683
    %v1714 = vsub.f32 %v1548, %v1687
    %v1715 = vsub.f32 %v1551, %v1687
    %v1716 = vsub.f32 %v1554, %v1691
    %v1717 = vsub.f32 %v1557, %v1691
    %v1718 = vsub.f32 %v1560, %v1695
    %v1719 = vsub.f32 %v1563, %v1695
    %v1720 = vmul.f32 %v1704, 1.442695
    %v1721 = vpow.pop %v1720
    %v1722 = vmul.f32 %v1705, 1.442695
    %v1723 = vpow.pop %v1722
    %v1724 = vmul.f32 %v1706, 1.442695
    %v1725 = vpow.pop %v1724
    %v1726 = vmul.f32 %v1707, 1.442695
    %v1727 = vpow.pop %v1726
    %v1728 = vmul.f32 %v1708, 1.442695
    %v1729 = vpow.pop %v1728
    %v1730 = vmul.f32 %v1709, 1.442695
    %v1731 = vpow.pop %v1730
    %v1732 = vmul.f32 %v1710, 1.442695
    %v1733 = vpow.pop %v1732
    %v1734 = vmul.f32 %v1711, 1.442695
    %v1735 = vpow.pop %v1734
    %v1736 = vmul.f32 %v1712, 1.442695
    %v1737 = vpow.pop %v1736
    %v1738 = vmul.f32 %v1713, 1.442695
    %v1739 = vpow.pop %v1738
    %v1740 = vmul.f32 %v1714, 1.442695
    %v1741 = vpow.pop %v1740
    %v1742 = vmul.f32 %v1715, 1.442695
    %v1743 = vpow.pop %v1742
    %v1744 = vmul.f32 %v1716, 1.442695
    %v1745 = vpow.pop %v1744
    %v1746 = vmul.f32 %v1717, 1.442695
    %v1747 = vpow.pop %v1746
    %v1748 = vmul.f32 %v1718, 1.442695
    %v1749 = vpow.pop %v1748
    %v1750 = vmul.f32 %v1719, 1.442695
    %v1751 = vpow.pop %v1750
    %1768 = vset.pattern.permute.xlu0 0
    %1769 = vperm.xlu0 %1768, %v1721
    %v1770 = vpop.permute.xlu0 %1769
    %1771 = vset.pattern.permute.xlu0 0
    %1772 = vperm.xlu0 %1771, %v1723
    %v1773 = vpop.permute.xlu0 %1772
    %1774 = vset.pattern.permute.xlu0 0
    %1775 = vperm.xlu0 %1774, %v1725
    %v1776 = vpop.permute.xlu0 %1775
    %1777 = vset.pattern.permute.xlu0 0
    %1778 = vperm.xlu0 %1777, %v1727
    %v1779 = vpop.permute.xlu0 %1778
    %1780 = vset.pattern.permute.xlu0 0
    %1781 = vperm.xlu0 %1780, %v1729
    %v1782 = vpop.permute.xlu0 %1781
    %1783 = vset.pattern.permute.xlu0 0
    %1784 = vperm.xlu0 %1783, %v1731
    %v1785 = vpop.permute.xlu0 %1784
    %1786 = vset.pattern.permute.xlu0 0
    %1787 = vperm.xlu0 %1786, %v1733
    %v1788 = vpop.permute.xlu0 %1787
    %1789 = vset.pattern.permute.xlu0 0
    %1790 = vperm.xlu0 %1789, %v1735
    %v1791 = vpop.permute.xlu0 %1790
    %1792 = vset.pattern.permute.xlu0 0
    %1793 = vperm.xlu0 %1792, %v1737
    %v1794 = vpop.permute.xlu0 %1793
    %1795 = vset.pattern.permute.xlu0 0
    %1796 = vperm.xlu0 %1795, %v1739
    %v1797 = vpop.permute.xlu0 %1796
    %1798 = vset.pattern.permute.xlu0 0
    %1799 = vperm.xlu0 %1798, %v1741
    %v1800 = vpop.permute.xlu0 %1799
    %1801 = vset.pattern.permute.xlu0 0
    %1802 = vperm.xlu0 %1801, %v1743
    %v1803 = vpop.permute.xlu0 %1802
    %1804 = vset.pattern.permute.xlu0 0
    %1805 = vperm.xlu0 %1804, %v1745
    %v1806 = vpop.permute.xlu0 %1805
    %1807 = vset.pattern.permute.xlu0 0
    %1808 = vperm.xlu0 %1807, %v1747
    %v1809 = vpop.permute.xlu0 %1808
    %1810 = vset.pattern.permute.xlu0 0
    %1811 = vperm.xlu0 %1810, %v1749
    %v1812 = vpop.permute.xlu0 %1811
    %1813 = vset.pattern.permute.xlu0 0
    %1814 = vperm.xlu0 %1813, %v1751
    %v1815 = vpop.permute.xlu0 %1814
    %v1816 = vlaneseq
    %v1817 = vshrl.u32 %v1816, 7
    %v1818 = vsub.s32 %v533, %v1817
    %v1819 = vrot.slane %v1770, %v1818
    %v1820 = vlaneseq
    %v1821 = vshrl.u32 %v1820, 7
    %v1822 = vsub.s32 %v538, %v1821
    %v1823 = vrot.slane %v1773, %v1822
    %v1824 = vsel %vm543, %v1823, %v1819
    %v1825 = vlaneseq
    %v1826 = vshrl.u32 %v1825, 7
    %v1827 = vsub.s32 %v533, %v1826
    %v1828 = vrot.slane %v1776, %v1827
    %v1829 = vlaneseq
    %v1830 = vshrl.u32 %v1829, 7
    %v1831 = vsub.s32 %v538, %v1830
    %v1832 = vrot.slane %v1779, %v1831
    %v1833 = vsel %vm543, %v1832, %v1828
    %v1834 = vlaneseq
    %v1835 = vshrl.u32 %v1834, 7
    %v1836 = vsub.s32 %v533, %v1835
    %v1837 = vrot.slane %v1782, %v1836
    %v1838 = vlaneseq
    %v1839 = vshrl.u32 %v1838, 7
    %v1840 = vsub.s32 %v538, %v1839
    %v1841 = vrot.slane %v1785, %v1840
    %v1842 = vsel %vm543, %v1841, %v1837
    %v1843 = vlaneseq
    %v1844 = vshrl.u32 %v1843, 7
    %v1845 = vsub.s32 %v533, %v1844
    %v1846 = vrot.slane %v1788, %v1845
    %v1847 = vlaneseq
    %v1848 = vshrl.u32 %v1847, 7
    %v1849 = vsub.s32 %v538, %v1848
    %v1850 = vrot.slane %v1791, %v1849
    %v1851 = vsel %vm543, %v1850, %v1846
    %v1852 = vlaneseq
    %v1853 = vshrl.u32 %v1852, 7
    %v1854 = vsub.s32 %v533, %v1853
    %v1855 = vrot.slane %v1794, %v1854
    %v1856 = vlaneseq
    %v1857 = vshrl.u32 %v1856, 7
    %v1858 = vsub.s32 %v538, %v1857
    %v1859 = vrot.slane %v1797, %v1858
    %v1860 = vsel %vm543, %v1859, %v1855
    %v1861 = vlaneseq
    %v1862 = vshrl.u32 %v1861, 7
    %v1863 = vsub.s32 %v533, %v1862
    %v1864 = vrot.slane %v1800, %v1863
    %v1865 = vlaneseq
    %v1866 = vshrl.u32 %v1865, 7
    %v1867 = vsub.s32 %v538, %v1866
    %v1868 = vrot.slane %v1803, %v1867
    %v1869 = vsel %vm543, %v1868, %v1864
    %v1870 = vlaneseq
    %v1871 = vshrl.u32 %v1870, 7
    %v1872 = vsub.s32 %v533, %v1871
    %v1873 = vrot.slane %v1806, %v1872
    %v1874 = vlaneseq
    %v1875 = vshrl.u32 %v1874, 7
    %v1876 = vsub.s32 %v538, %v1875
    %v1877 = vrot.slane %v1809, %v1876
    %v1878 = vsel %vm543, %v1877, %v1873
    %v1879 = vlaneseq
    %v1880 = vshrl.u32 %v1879, 7
    %v1881 = vsub.s32 %v533, %v1880
    %v1882 = vrot.slane %v1812, %v1881
    %v1883 = vlaneseq
    %v1884 = vshrl.u32 %v1883, 7
    %v1885 = vsub.s32 %v538, %v1884
    %v1886 = vrot.slane %v1815, %v1885
    %v1887 = vsel %vm543, %v1886, %v1882
    %v1888 = vsel %vm608, %v1833, %v1824
    %v1889 = vsel %vm610, %v1842, %v1888
    %v1890 = vsel %vm612, %v1851, %v1889
    %v1891 = vsel %vm614, %v1860, %v1890
    %v1892 = vsel %vm616, %v1869, %v1891
    %v1893 = vsel %vm618, %v1878, %v1892
    %v1894 = vsel %vm620, %v1887, %v1893
    %v1896 = vsel %vm623, %v1894, 0.0
    %1897 = vadd.xlane.f32.xlu0 %v1896
    %v1898 = vpop.xlane.xlu0 %1897
    %v1899 = vrcp.pop %v1898
    %v1901 = vlaneseq
    %v1902 = vshrl.u32 %v1901, 7
    %v1903 = vsub.s32 0, %v1902
    %v1904 = vrot.slane %v1899, %v1903
    %v1905 = vlaneseq
    %v1906 = vshrl.u32 %v1905, 7
    %v1907 = vsub.s32 1, %v1906
    %v1908 = vrot.slane %v1899, %v1907
    %v1909 = vlaneseq
    %v1910 = vshrl.u32 %v1909, 7
    %v1911 = vsub.s32 2, %v1910
    %v1912 = vrot.slane %v1899, %v1911
    %v1913 = vlaneseq
    %v1914 = vshrl.u32 %v1913, 7
    %v1915 = vsub.s32 3, %v1914
    %v1916 = vrot.slane %v1899, %v1915
    %v1917 = vlaneseq
    %v1918 = vshrl.u32 %v1917, 7
    %v1919 = vsub.s32 4, %v1918
    %v1920 = vrot.slane %v1899, %v1919
    %v1921 = vlaneseq
    %v1922 = vshrl.u32 %v1921, 7
    %v1923 = vsub.s32 5, %v1922
    %v1924 = vrot.slane %v1899, %v1923
    %v1925 = vlaneseq
    %v1926 = vshrl.u32 %v1925, 7
    %v1927 = vsub.s32 6, %v1926
    %v1928 = vrot.slane %v1899, %v1927
    %v1929 = vlaneseq
    %v1930 = vshrl.u32 %v1929, 7
    %v1931 = vsub.s32 7, %v1930
    %v1932 = vrot.slane %v1899, %v1931
    %v1941 = vmul.f32 %v1721, %v1904
    %v1942 = vmul.f32 %v1723, %v1904
    %v1943 = vmul.f32 %v1725, %v1908
    %v1944 = vmul.f32 %v1727, %v1908
    %v1945 = vmul.f32 %v1729, %v1912
    %v1946 = vmul.f32 %v1731, %v1912
    %v1947 = vmul.f32 %v1733, %v1916
    %v1948 = vmul.f32 %v1735, %v1916
    %v1949 = vmul.f32 %v1737, %v1920
    %v1950 = vmul.f32 %v1739, %v1920
    %v1951 = vmul.f32 %v1741, %v1924
    %v1952 = vmul.f32 %v1743, %v1924
    %v1953 = vmul.f32 %v1745, %v1928
    %v1954 = vmul.f32 %v1747, %v1928
    %v1955 = vmul.f32 %v1749, %v1932
    %v1956 = vmul.f32 %v1751, %v1932
    %1958 = vset.pattern.permute.xlu0 0
    %1959 = vperm.xlu0 %1958, %v1941
    %v1960 = vpop.permute.xlu0 %1959
    %1963 = vset.pattern.permute.xlu0 0
    %1964 = vperm.xlu0 %1963, %v1942
    %v1965 = vpop.permute.xlu0 %1964
    %1968 = vset.pattern.permute.xlu0 0
    %1969 = vperm.xlu0 %1968, %v1943
    %v1970 = vpop.permute.xlu0 %1969
    %1973 = vset.pattern.permute.xlu0 0
    %1974 = vperm.xlu0 %1973, %v1944
    %v1975 = vpop.permute.xlu0 %1974
    %1978 = vset.pattern.permute.xlu0 0
    %1979 = vperm.xlu0 %1978, %v1945
    %v1980 = vpop.permute.xlu0 %1979
    %1983 = vset.pattern.permute.xlu0 0
    %1984 = vperm.xlu0 %1983, %v1946
    %v1985 = vpop.permute.xlu0 %1984
    %1988 = vset.pattern.permute.xlu0 0
    %1989 = vperm.xlu0 %1988, %v1947
    %v1990 = vpop.permute.xlu0 %1989
    %1993 = vset.pattern.permute.xlu0 0
    %1994 = vperm.xlu0 %1993, %v1948
    %v1995 = vpop.permute.xlu0 %1994
    %1998 = vset.pattern.permute.xlu0 0
    %1999 = vperm.xlu0 %1998, %v1949
    %v2000 = vpop.permute.xlu0 %1999
    %2003 = vset.pattern.permute.xlu0 0
    %2004 = vperm.xlu0 %2003, %v1950
    %v2005 = vpop.permute.xlu0 %2004
    %2008 = vset.pattern.permute.xlu0 0
    %2009 = vperm.xlu0 %2008, %v1951
    %v2010 = vpop.permute.xlu0 %2009
    %2013 = vset.pattern.permute.xlu0 0
    %2014 = vperm.xlu0 %2013, %v1952
    %v2015 = vpop.permute.xlu0 %2014
    %2018 = vset.pattern.permute.xlu0 0
    %2019 = vperm.xlu0 %2018, %v1953
    %v2020 = vpop.permute.xlu0 %2019
    %2023 = vset.pattern.permute.xlu0 0
    %2024 = vperm.xlu0 %2023, %v1954
    %v2025 = vpop.permute.xlu0 %2024
    %2028 = vset.pattern.permute.xlu0 0
    %2029 = vperm.xlu0 %2028, %v1955
    %v2030 = vpop.permute.xlu0 %2029
    %2033 = vset.pattern.permute.xlu0 0
    %2034 = vperm.xlu0 %2033, %v1956
    %v2035 = vpop.permute.xlu0 %2034
    %v2037 = vmul.f32 %v1960, %v67
    %v2038 = vmul.f32 %v1965, %v68
    %v2039 = vmul.f32 %v1970, %v69
    %v2040 = vmul.f32 %v1975, %v70
    %v2041 = vmul.f32 %v1980, %v71
    %v2042 = vmul.f32 %v1985, %v72
    %v2043 = vmul.f32 %v1990, %v73
    %v2044 = vmul.f32 %v1995, %v74
    %v2045 = vmul.f32 %v2000, %v75
    %v2046 = vmul.f32 %v2005, %v76
    %v2047 = vmul.f32 %v2010, %v77
    %v2048 = vmul.f32 %v2015, %v78
    %v2049 = vmul.f32 %v2020, %v79
    %v2050 = vmul.f32 %v2025, %v80
    %v2051 = vmul.f32 %v2030, %v81
    %v2052 = vmul.f32 %v2035, %v82
    %v2053 = vsel %vm235, %v2037, 0.0
    %v2054 = vsel %vm470, %v2038, 0.0
    %v2055 = vadd.f32 %v2053, %v2054
    %v2056 = vrot.slane %v2055, 4
    %v2057 = vadd.f32 %v2055, %v2056
    %v2058 = vrot.slane %v2057, 2
    %v2059 = vadd.f32 %v2057, %v2058
    %v2060 = vrot.slane %v2059, 1
    %v2061 = vadd.f32 %v2059, %v2060
    %v2062 = vsel %vm235, %v2039, 0.0
    %v2063 = vsel %vm470, %v2040, 0.0
    %v2064 = vadd.f32 %v2062, %v2063
    %v2065 = vrot.slane %v2064, 4
    %v2066 = vadd.f32 %v2064, %v2065
    %v2067 = vrot.slane %v2066, 2
    %v2068 = vadd.f32 %v2066, %v2067
    %v2069 = vrot.slane %v2068, 1
    %v2070 = vadd.f32 %v2068, %v2069
    %v2071 = vsel %vm235, %v2041, 0.0
    %v2072 = vsel %vm470, %v2042, 0.0
    %v2073 = vadd.f32 %v2071, %v2072
    %v2074 = vrot.slane %v2073, 4
    %v2075 = vadd.f32 %v2073, %v2074
    %v2076 = vrot.slane %v2075, 2
    %v2077 = vadd.f32 %v2075, %v2076
    %v2078 = vrot.slane %v2077, 1
    %v2079 = vadd.f32 %v2077, %v2078
    %v2080 = vsel %vm235, %v2043, 0.0
    %v2081 = vsel %vm470, %v2044, 0.0
    %v2082 = vadd.f32 %v2080, %v2081
    %v2083 = vrot.slane %v2082, 4
    %v2084 = vadd.f32 %v2082, %v2083
    %v2085 = vrot.slane %v2084, 2
    %v2086 = vadd.f32 %v2084, %v2085
    %v2087 = vrot.slane %v2086, 1
    %v2088 = vadd.f32 %v2086, %v2087
    %v2089 = vsel %vm235, %v2045, 0.0
    %v2090 = vsel %vm470, %v2046, 0.0
    %v2091 = vadd.f32 %v2089, %v2090
    %v2092 = vrot.slane %v2091, 4
    %v2093 = vadd.f32 %v2091, %v2092
    %v2094 = vrot.slane %v2093, 2
    %v2095 = vadd.f32 %v2093, %v2094
    %v2096 = vrot.slane %v2095, 1
    %v2097 = vadd.f32 %v2095, %v2096
    %v2098 = vsel %vm235, %v2047, 0.0
    %v2099 = vsel %vm470, %v2048, 0.0
    %v2100 = vadd.f32 %v2098, %v2099
    %v2101 = vrot.slane %v2100, 4
    %v2102 = vadd.f32 %v2100, %v2101
    %v2103 = vrot.slane %v2102, 2
    %v2104 = vadd.f32 %v2102, %v2103
    %v2105 = vrot.slane %v2104, 1
    %v2106 = vadd.f32 %v2104, %v2105
    %v2107 = vsel %vm235, %v2049, 0.0
    %v2108 = vsel %vm470, %v2050, 0.0
    %v2109 = vadd.f32 %v2107, %v2108
    %v2110 = vrot.slane %v2109, 4
    %v2111 = vadd.f32 %v2109, %v2110
    %v2112 = vrot.slane %v2111, 2
    %v2113 = vadd.f32 %v2111, %v2112
    %v2114 = vrot.slane %v2113, 1
    %v2115 = vadd.f32 %v2113, %v2114
    %v2116 = vsel %vm235, %v2051, 0.0
    %v2117 = vsel %vm470, %v2052, 0.0
    %v2118 = vadd.f32 %v2116, %v2117
    %v2119 = vrot.slane %v2118, 4
    %v2120 = vadd.f32 %v2118, %v2119
    %v2121 = vrot.slane %v2120, 2
    %v2122 = vadd.f32 %v2120, %v2121
    %v2123 = vrot.slane %v2122, 1
    %v2124 = vadd.f32 %v2122, %v2123
    %v2133 = vsel %vm608, %v2070, %v2061
    %v2134 = vsel %vm610, %v2079, %v2133
    %v2135 = vsel %vm612, %v2088, %v2134
    %v2136 = vsel %vm614, %v2097, %v2135
    %v2137 = vsel %vm616, %v2106, %v2136
    %v2138 = vsel %vm618, %v2115, %v2137
    %v2139 = vsel %vm620, %v2124, %v2138
    %2141 = vrot.lane.b32.xlu0 %v1393, 64
    %v2142 = vpop.permute.xlu0 %2141
    %v2144 = vsel %vm235, %v2139, %v2142
    %v2146 = vsel %vm243, %v2144, 0
    %2148 = vmatprep.subr.mxu0 0.0
    %2149 = vmatpush1.msra.mxu0 %v59
    %2150 = vmatprep.subr.mxu0 0.0
    %2151 = vmatpush1.msra.mxu0 %v60
    %2152 = vmatprep.subr.mxu0 0.0
    %2153 = vmatpush1.msra.mxu0 %v61
    %2154 = vmatprep.subr.mxu0 0.0
    %2155 = vmatpush1.msra.mxu0 %v62
    %2156 = vmatprep.subr.mxu0 0.0
    %2157 = vmatpush1.msra.mxu0 %v63
    %2158 = vmatprep.subr.mxu0 0.0
    %2159 = vmatpush1.msra.mxu0 %v64
    %2160 = vmatprep.subr.mxu0 0.0
    %2161 = vmatpush1.msra.mxu0 %v65
    %2162 = vmatprep.subr.mxu0 0.0
    %2163 = vmatpush1.msra.mxu0 %v66
    %2164 = vmatprep.subr.mxu0 0.0
    %2165 = vmatpush1.msra.mxu0 0.0
    %2166 = vmatprep.subr.mxu0 0.0
    %2167 = vmatpush1.msra.mxu0 0.0
    %2168 = vmatprep.subr.mxu0 0.0
    %2169 = vmatpush1.msra.mxu0 0.0
    %2170 = vmatprep.subr.mxu0 0.0
    %2171 = vmatpush1.msra.mxu0 0.0
    %2172 = vmatprep.subr.mxu0 0.0
    %2173 = vmatpush1.msra.mxu0 0.0
    %2174 = vmatprep.subr.mxu0 0.0
    %2175 = vmatpush1.msra.mxu0 0.0
    %2176 = vmatprep.subr.mxu0 0.0
    %2177 = vmatpush1.msra.mxu0 0.0
    %2178 = vmatprep.subr.mxu0 0.0
    %2179 = vmatpush1.msra.mxu0 0.0
    %2180 = vmatprep.subr.mxu0 0.0
    %2181 = vmatpush1.msra.mxu0 0.0
    %2182 = vmatprep.subr.mxu0 0.0
    %2183 = vmatpush1.msra.mxu0 0.0
    %2184 = vmatprep.subr.mxu0 0.0
    %2185 = vmatpush1.msra.mxu0 0.0
    %2186 = vmatprep.subr.mxu0 0.0
    %2187 = vmatpush1.msra.mxu0 0.0
    %2188 = vmatprep.subr.mxu0 0.0
    %2189 = vmatpush1.msra.mxu0 0.0
    %2190 = vmatprep.subr.mxu0 0.0
    %2191 = vmatpush1.msra.mxu0 0.0
    %2192 = vmatprep.subr.mxu0 0.0
    %2193 = vmatpush1.msra.mxu0 0.0
    %2194 = vmatprep.subr.mxu0 0.0
    %2195 = vmatpush1.msra.mxu0 0.0
    %2196 = vmatprep.subr.mxu0 0.0
    %2197 = vmatpush1.msra.mxu0 0.0
    %2198 = vmatprep.subr.mxu0 0.0
    %2199 = vmatpush1.msra.mxu0 0.0
    %2200 = vmatprep.subr.mxu0 0.0
    %2201 = vmatpush1.msra.mxu0 0.0
    %2202 = vmatprep.subr.mxu0 0.0
    %2203 = vmatpush1.msra.mxu0 0.0
    %2204 = vmatprep.subr.mxu0 0.0
    %2205 = vmatpush1.msra.mxu0 0.0
    %2206 = vmatprep.subr.mxu0 0.0
    %2207 = vmatpush1.msra.mxu0 0.0
    %2208 = vmatprep.subr.mxu0 0.0
    %2209 = vmatpush1.msra.mxu0 0.0
    %2210 = vmatprep.subr.mxu0 0.0
    %2211 = vmatpush1.msra.mxu0 0.0
    %2212 = vmatprep.mubr.f32.mxu0 0.0
    %2213 = vmatmul.mubr.f32.gmra.mrb[0].mxu0 %v2146
    %v2214 = vpop.f32.mrb[0].mxu0
    %v2215 = vadd.f32 0.0, %v2214
    %v2216 = vpop.f32.mrb[0].mxu0
    %2217 = vdwg.mxu0
    %v2218 = vtanh.pop %v2215
    %s2219 = scalar_lea.vmem [#allocation2], 8
    %2220 = vst.msk [vmem:[%s2219] sm:$0xff] %vm235, %v2218
    %s2221 = scalar_lea.vmem %s0, 16
    %v2222 = vld [vmem:[%s2221] sm:$0xff]
    %2224 = vrot.lane.b32.xlu0 %v2218, 16
    %v2225 = vpop.permute.xlu0 %2224
    %2227 = vrot.lane.b32.xlu0 %v1291, 80
    %v2228 = vpop.permute.xlu0 %2227
    %v2230 = vsel %vm115, %v2222, %v2225
    %v2231 = vsel %vm117, %v2230, %v2228
    %v2233 = vsel %vm125, %v2231, 0
    %2235 = vmatprep.subr.mxu0 0.0
    %2236 = vmatpush1.msra.mxu0 %v39
    %2237 = vmatprep.subr.mxu0 0.0
    %2238 = vmatpush1.msra.mxu0 %v40
    %2239 = vmatprep.subr.mxu0 0.0
    %2240 = vmatpush1.msra.mxu0 %v41
    %2241 = vmatprep.subr.mxu0 0.0
    %2242 = vmatpush1.msra.mxu0 %v42
    %2243 = vmatprep.subr.mxu0 0.0
    %2244 = vmatpush1.msra.mxu0 %v43
    %2245 = vmatprep.subr.mxu0 0.0
    %2246 = vmatpush1.msra.mxu0 %v44
    %2247 = vmatprep.subr.mxu0 0.0
    %2248 = vmatpush1.msra.mxu0 %v45
    %2249 = vmatprep.subr.mxu0 0.0
    %2250 = vmatpush1.msra.mxu0 %v46
    %2251 = vmatprep.subr.mxu0 0.0
    %2252 = vmatpush1.msra.mxu0 %v47
    %2253 = vmatprep.subr.mxu0 0.0
    %2254 = vmatpush1.msra.mxu0 %v48
    %2255 = vmatprep.subr.mxu0 0.0
    %2256 = vmatpush1.msra.mxu0 0.0
    %2257 = vmatprep.subr.mxu0 0.0
    %2258 = vmatpush1.msra.mxu0 0.0
    %2259 = vmatprep.subr.mxu0 0.0
    %2260 = vmatpush1.msra.mxu0 0.0
    %2261 = vmatprep.subr.mxu0 0.0
    %2262 = vmatpush1.msra.mxu0 0.0
    %2263 = vmatprep.subr.mxu0 0.0
    %2264 = vmatpush1.msra.mxu0 0.0
    %2265 = vmatprep.subr.mxu0 0.0
    %2266 = vmatpush1.msra.mxu0 0.0
    %2267 = vmatprep.subr.mxu0 0.0
    %2268 = vmatpush1.msra.mxu0 0.0
    %2269 = vmatprep.subr.mxu0 0.0
    %2270 = vmatpush1.msra.mxu0 0.0
    %2271 = vmatprep.subr.mxu0 0.0
    %2272 = vmatpush1.msra.mxu0 0.0
    %2273 = vmatprep.subr.mxu0 0.0
    %2274 = vmatpush1.msra.mxu0 0.0
    %2275 = vmatprep.subr.mxu0 0.0
    %2276 = vmatpush1.msra.mxu0 0.0
    %2277 = vmatprep.subr.mxu0 0.0
    %2278 = vmatpush1.msra.mxu0 0.0
    %2279 = vmatprep.subr.mxu0 0.0
    %2280 = vmatpush1.msra.mxu0 0.0
    %2281 = vmatprep.subr.mxu0 0.0
    %2282 = vmatpush1.msra.mxu0 0.0
    %2283 = vmatprep.subr.mxu0 0.0
    %2284 = vmatpush1.msra.mxu0 0.0
    %2285 = vmatprep.subr.mxu0 0.0
    %2286 = vmatpush1.msra.mxu0 0.0
    %2287 = vmatprep.subr.mxu0 0.0
    %2288 = vmatpush1.msra.mxu0 0.0
    %2289 = vmatprep.subr.mxu0 0.0
    %2290 = vmatpush1.msra.mxu0 0.0
    %2291 = vmatprep.subr.mxu0 0.0
    %2292 = vmatpush1.msra.mxu0 0.0
    %2293 = vmatprep.subr.mxu0 0.0
    %2294 = vmatpush1.msra.mxu0 0.0
    %2295 = vmatprep.subr.mxu0 0.0
    %2296 = vmatpush1.msra.mxu0 0.0
    %2297 = vmatprep.subr.mxu0 0.0
    %2298 = vmatpush1.msra.mxu0 0.0
    %2299 = vmatprep.mubr.f32.mxu0 0.0
    %2300 = vmatmul.mubr.f32.gmra.mrb[0].mxu0 %v2233
    %v2301 = vpop.f32.mrb[0].mxu0
    %v2302 = vadd.f32 %v123, %v2301
    %v2303 = vpop.f32.mrb[0].mxu0
    %2304 = vdwg.mxu0
    %v2305 = vxor.u32 %v2302, 2147483648
    %v2306 = vmul.f32 %v2305, 1.442695
    %v2307 = vpow.pop %v2306
    %v2308 = vadd.f32 %v2307, 1.0
    %v2309 = vrcp.pop %v2308
    %v2310 = vmul.f32 1.0, %v2309
    %v2311 = vtanh.pop %v2302
    %v2312 = vmul.f32 %v2310, %v1285
    %2314 = vrot.lane.b32.xlu0 %v2311, 64
    %v2315 = vpop.permute.xlu0 %2314
    %v2317 = vmul.f32 %v2310, %v2315
    %2319 = vrot.lane.b32.xlu0 %v2317, 32
    %v2320 = vpop.permute.xlu0 %2319
    %v2322 = vadd.f32 %v2312, %v2320
    %v2323 = vtanh.pop %v2322
    %2325 = vrot.lane.b32.xlu0 %v2323, 64
    %v2326 = vpop.permute.xlu0 %2325
    %v2328 = vmul.f32 %v2310, %v2326
    %2330 = vrot.lane.b32.xlu0 %v2328, 32
    %v2331 = vpop.permute.xlu0 %2330
    %v2333 = vsel %vm235, %v2331, %v2142
    %v2335 = vsel %vm243, %v2333, 0
    %2337 = vmatprep.subr.mxu0 0.0
    %2338 = vmatpush1.msra.mxu0 %v50
    %2339 = vmatprep.subr.mxu0 0.0
    %2340 = vmatpush1.msra.mxu0 %v51
    %2341 = vmatprep.subr.mxu0 0.0
    %2342 = vmatpush1.msra.mxu0 %v52
    %2343 = vmatprep.subr.mxu0 0.0
    %2344 = vmatpush1.msra.mxu0 %v53
    %2345 = vmatprep.subr.mxu0 0.0
    %2346 = vmatpush1.msra.mxu0 %v54
    %2347 = vmatprep.subr.mxu0 0.0
    %2348 = vmatpush1.msra.mxu0 %v55
    %2349 = vmatprep.subr.mxu0 0.0
    %2350 = vmatpush1.msra.mxu0 %v56
    %2351 = vmatprep.subr.mxu0 0.0
    %2352 = vmatpush1.msra.mxu0 %v57
    %2353 = vmatprep.subr.mxu0 0.0
    %2354 = vmatpush1.msra.mxu0 0.0
    %2355 = vmatprep.subr.mxu0 0.0
    %2356 = vmatpush1.msra.mxu0 0.0
    %2357 = vmatprep.subr.mxu0 0.0
    %2358 = vmatpush1.msra.mxu0 0.0
    %2359 = vmatprep.subr.mxu0 0.0
    %2360 = vmatpush1.msra.mxu0 0.0
    %2361 = vmatprep.subr.mxu0 0.0
    %2362 = vmatpush1.msra.mxu0 0.0
    %2363 = vmatprep.subr.mxu0 0.0
    %2364 = vmatpush1.msra.mxu0 0.0
    %2365 = vmatprep.subr.mxu0 0.0
    %2366 = vmatpush1.msra.mxu0 0.0
    %2367 = vmatprep.subr.mxu0 0.0
    %2368 = vmatpush1.msra.mxu0 0.0
    %2369 = vmatprep.subr.mxu0 0.0
    %2370 = vmatpush1.msra.mxu0 0.0
    %2371 = vmatprep.subr.mxu0 0.0
    %2372 = vmatpush1.msra.mxu0 0.0
    %2373 = vmatprep.subr.mxu0 0.0
    %2374 = vmatpush1.msra.mxu0 0.0
    %2375 = vmatprep.subr.mxu0 0.0
    %2376 = vmatpush1.msra.mxu0 0.0
    %2377 = vmatprep.subr.mxu0 0.0
    %2378 = vmatpush1.msra.mxu0 0.0
    %2379 = vmatprep.subr.mxu0 0.0
    %2380 = vmatpush1.msra.mxu0 0.0
    %2381 = vmatprep.subr.mxu0 0.0
    %2382 = vmatpush1.msra.mxu0 0.0
    %2383 = vmatprep.subr.mxu0 0.0
    %2384 = vmatpush1.msra.mxu0 0.0
    %2385 = vmatprep.subr.mxu0 0.0
    %2386 = vmatpush1.msra.mxu0 0.0
    %2387 = vmatprep.subr.mxu0 0.0
    %2388 = vmatpush1.msra.mxu0 0.0
    %2389 = vmatprep.subr.mxu0 0.0
    %2390 = vmatpush1.msra.mxu0 0.0
    %2391 = vmatprep.subr.mxu0 0.0
    %2392 = vmatpush1.msra.mxu0 0.0
    %2393 = vmatprep.subr.mxu0 0.0
    %2394 = vmatpush1.msra.mxu0 0.0
    %2395 = vmatprep.subr.mxu0 0.0
    %2396 = vmatpush1.msra.mxu0 0.0
    %2397 = vmatprep.subr.mxu0 0.0
    %2398 = vmatpush1.msra.mxu0 0.0
    %2399 = vmatprep.subr.mxu0 0.0
    %2400 = vmatpush1.msra.mxu0 0.0
    %2401 = vmatprep.mubr.f32.mxu0 0.0
    %2402 = vmatmul.mubr.f32.gmra.mrb[0].mxu0 %v2335
    %v2403 = vpop.f32.mrb[0].mxu0
    %v2404 = vadd.f32 %v241, %v2403
    %v2405 = vpop.f32.mrb[0].mxu0
    %2406 = vdwg.mxu0
    %v2407 = vxor.u32 %v2404, 2147483648
    %v2408 = vmul.f32 %v2407, 1.442695
    %v2409 = vpow.pop %v2408
    %v2410 = vadd.f32 %v2409, 1.0
    %v2411 = vrcp.pop %v2410
    %v2412 = vmul.f32 1.0, %v2411
    %v2413 = vtanh.pop %v2404
    %v2414 = vmul.f32 %v2412, %v1387
    %2416 = vrot.lane.b32.xlu0 %v2413, 64
    %v2417 = vpop.permute.xlu0 %2416
    %v2419 = vmul.f32 %v2412, %v2417
    %2421 = vrot.lane.b32.xlu0 %v2419, 32
    %v2422 = vpop.permute.xlu0 %2421
    %v2424 = vadd.f32 %v2414, %v2422
    %v2425 = vtanh.pop %v2424
    %2427 = vrot.lane.b32.xlu0 %v2425, 64
    %v2428 = vpop.permute.xlu0 %2427
    %v2430 = vmul.f32 %v2412, %v2428
    %v2432 = vcombine.high %v2430, %v2430
    %v2434 = vunpack.c.l.s4 1966171168
    %v2435 = vunpack.c.0.s8 %v2434
    %v2436 = vlaneseq
    %v2437 = vshrl.u32 %v2436, 7
    %v2438 = vsub.s32 %v2435, %v2437
    %v2439 = vrot.slane %v2430, %v2438
    %v2441 = vunpack.c.l.s4 1966171168
    %v2442 = vunpack.c.0.s8 %v2441
    %v2443 = vlaneseq
    %v2444 = vshrl.u32 %v2443, 7
    %v2445 = vsub.s32 %v2442, %v2444
    %v2446 = vrot.slane %v2432, %v2445
    %v2447 = vcombine.high %v2439, %v2439
    %v2448 = vcombine.high %v2446, %v2446
    %v2450 = vunpack.c.l.s4 1966171168
    %v2451 = vunpack.c.0.s8 %v2450
    %v2452 = vlaneseq
    %v2453 = vshrl.u32 %v2452, 7
    %v2454 = vsub.s32 %v2451, %v2453
    %v2455 = vrot.slane %v2439, %v2454
    %v2457 = vunpack.c.l.s4 1966171168
    %v2458 = vunpack.c.0.s8 %v2457
    %v2459 = vlaneseq
    %v2460 = vshrl.u32 %v2459, 7
    %v2461 = vsub.s32 %v2458, %v2460
    %v2462 = vrot.slane %v2446, %v2461
    %v2464 = vunpack.c.l.s4 1966171168
    %v2465 = vunpack.c.0.s8 %v2464
    %v2466 = vlaneseq
    %v2467 = vshrl.u32 %v2466, 7
    %v2468 = vsub.s32 %v2465, %v2467
    %v2469 = vrot.slane %v2447, %v2468
    %v2471 = vunpack.c.l.s4 1966171168
    %v2472 = vunpack.c.0.s8 %v2471
    %v2473 = vlaneseq
    %v2474 = vshrl.u32 %v2473, 7
    %v2475 = vsub.s32 %v2472, %v2474
    %v2476 = vrot.slane %v2448, %v2475
    %v2477 = vcombine.high %v2455, %v2455
    %v2478 = vcombine.high %v2462, %v2462
    %v2479 = vcombine.high %v2469, %v2469
    %v2480 = vcombine.high %v2476, %v2476
    %v2481 = vlaneseq
    %v2482 = vshrl.u32 %v2481, 7
    %v2483 = vsub.s32 0, %v2482
    %v2484 = vrot.slane %v2455, %v2483
    %v2485 = vlaneseq
    %v2486 = vshrl.u32 %v2485, 7
    %v2487 = vsub.s32 0, %v2486
    %v2488 = vrot.slane %v2469, %v2487
    %v2489 = vlaneseq
    %v2490 = vshrl.u32 %v2489, 7
    %v2491 = vsub.s32 0, %v2490
    %v2492 = vrot.slane %v2477, %v2491
    %v2493 = vlaneseq
    %v2494 = vshrl.u32 %v2493, 7
    %v2495 = vsub.s32 0, %v2494
    %v2496 = vrot.slane %v2479, %v2495
    %v2497 = vlaneseq
    %v2498 = vshrl.u32 %v2497, 7
    %v2499 = vsub.s32 0, %v2498
    %v2500 = vrot.slane %v2462, %v2499
    %v2501 = vlaneseq
    %v2502 = vshrl.u32 %v2501, 7
    %v2503 = vsub.s32 0, %v2502
    %v2504 = vrot.slane %v2476, %v2503
    %v2505 = vlaneseq
    %v2506 = vshrl.u32 %v2505, 7
    %v2507 = vsub.s32 0, %v2506
    %v2508 = vrot.slane %v2478, %v2507
    %v2509 = vlaneseq
    %v2510 = vshrl.u32 %v2509, 7
    %v2511 = vsub.s32 0, %v2510
    %v2512 = vrot.slane %v2480, %v2511
    %2513 = vrot.lane.b32.xlu0 %v2484, 32
    %v2514 = vpop.permute.xlu0 %2513
    %2515 = vrot.lane.b32.xlu0 %v2488, 32
    %v2516 = vpop.permute.xlu0 %2515
    %2517 = vrot.lane.b32.xlu0 %v2492, 32
    %v2518 = vpop.permute.xlu0 %2517
    %2519 = vrot.lane.b32.xlu0 %v2496, 32
    %v2520 = vpop.permute.xlu0 %2519
    %2521 = vrot.lane.b32.xlu0 %v2500, 32
    %v2522 = vpop.permute.xlu0 %2521
    %2523 = vrot.lane.b32.xlu0 %v2504, 32
    %v2524 = vpop.permute.xlu0 %2523
    %2525 = vrot.lane.b32.xlu0 %v2508, 32
    %v2526 = vpop.permute.xlu0 %2525
    %2527 = vrot.lane.b32.xlu0 %v2512, 32
    %v2528 = vpop.permute.xlu0 %2527
    %v2537 = vmul.f32 %v83, %v2514
    %v2538 = vmul.f32 %v84, %v2514
    %v2539 = vmul.f32 %v85, %v2516
    %v2540 = vmul.f32 %v86, %v2516
    %v2541 = vmul.f32 %v87, %v2518
    %v2542 = vmul.f32 %v88, %v2518
    %v2543 = vmul.f32 %v89, %v2520
    %v2544 = vmul.f32 %v90, %v2520
    %v2545 = vmul.f32 %v91, %v2522
    %v2546 = vmul.f32 %v92, %v2522
    %v2547 = vmul.f32 %v93, %v2524
    %v2548 = vmul.f32 %v94, %v2524
    %v2549 = vmul.f32 %v95, %v2526
    %v2550 = vmul.f32 %v96, %v2526
    %v2551 = vmul.f32 %v97, %v2528
    %v2552 = vmul.f32 %v98, %v2528
    %v2553 = vsel %vm235, %v2537, 0.0
    %2554 = vadd.xlane.f32.xlu0 %v2553
    %v2555 = vpop.xlane.xlu0 %2554
    %v2556 = vsel %vm470, %v2538, 0.0
    %2557 = vadd.xlane.f32.xlu0 %v2556
    %v2558 = vpop.xlane.xlu0 %2557
    %v2559 = vsel %vm235, %v2539, 0.0
    %2560 = vadd.xlane.f32.xlu0 %v2559
    %v2561 = vpop.xlane.xlu0 %2560
    %v2562 = vsel %vm470, %v2540, 0.0
    %2563 = vadd.xlane.f32.xlu0 %v2562
    %v2564 = vpop.xlane.xlu0 %2563
    %v2565 = vsel %vm235, %v2541, 0.0
    %2566 = vadd.xlane.f32.xlu0 %v2565
    %v2567 = vpop.xlane.xlu0 %2566
    %v2568 = vsel %vm470, %v2542, 0.0
    %2569 = vadd.xlane.f32.xlu0 %v2568
    %v2570 = vpop.xlane.xlu0 %2569
    %v2571 = vsel %vm235, %v2543, 0.0
    %2572 = vadd.xlane.f32.xlu0 %v2571
    %v2573 = vpop.xlane.xlu0 %2572
    %v2574 = vsel %vm470, %v2544, 0.0
    %2575 = vadd.xlane.f32.xlu0 %v2574
    %v2576 = vpop.xlane.xlu0 %2575
    %v2577 = vsel %vm235, %v2545, 0.0
    %2578 = vadd.xlane.f32.xlu0 %v2577
    %v2579 = vpop.xlane.xlu0 %2578
    %v2580 = vsel %vm470, %v2546, 0.0
    %2581 = vadd.xlane.f32.xlu0 %v2580
    %v2582 = vpop.xlane.xlu0 %2581
    %v2583 = vsel %vm235, %v2547, 0.0
    %2584 = vadd.xlane.f32.xlu0 %v2583
    %v2585 = vpop.xlane.xlu0 %2584
    %v2586 = vsel %vm470, %v2548, 0.0
    %2587 = vadd.xlane.f32.xlu0 %v2586
    %v2588 = vpop.xlane.xlu0 %2587
    %v2589 = vsel %vm235, %v2549, 0.0
    %2590 = vadd.xlane.f32.xlu0 %v2589
    %v2591 = vpop.xlane.xlu0 %2590
    %v2592 = vsel %vm470, %v2550, 0.0
    %2593 = vadd.xlane.f32.xlu0 %v2592
    %v2594 = vpop.xlane.xlu0 %2593
    %v2595 = vsel %vm235, %v2551, 0.0
    %2596 = vadd.xlane.f32.xlu0 %v2595
    %v2597 = vpop.xlane.xlu0 %2596
    %v2598 = vsel %vm470, %v2552, 0.0
    %2599 = vadd.xlane.f32.xlu0 %v2598
    %v2600 = vpop.xlane.xlu0 %2599
    %v2617 = vlaneseq
    %v2618 = vshrl.u32 %v2617, 7
    %v2619 = vsub.s32 %v533, %v2618
    %v2620 = vrot.slane %v2555, %v2619
    %v2621 = vlaneseq
    %v2622 = vshrl.u32 %v2621, 7
    %v2623 = vsub.s32 %v538, %v2622
    %v2624 = vrot.slane %v2558, %v2623
    %v2625 = vsel %vm543, %v2624, %v2620
    %v2626 = vlaneseq
    %v2627 = vshrl.u32 %v2626, 7
    %v2628 = vsub.s32 %v533, %v2627
    %v2629 = vrot.slane %v2561, %v2628
    %v2630 = vlaneseq
    %v2631 = vshrl.u32 %v2630, 7
    %v2632 = vsub.s32 %v538, %v2631
    %v2633 = vrot.slane %v2564, %v2632
    %v2634 = vsel %vm543, %v2633, %v2629
    %v2635 = vlaneseq
    %v2636 = vshrl.u32 %v2635, 7
    %v2637 = vsub.s32 %v533, %v2636
    %v2638 = vrot.slane %v2567, %v2637
    %v2639 = vlaneseq
    %v2640 = vshrl.u32 %v2639, 7
    %v2641 = vsub.s32 %v538, %v2640
    %v2642 = vrot.slane %v2570, %v2641
    %v2643 = vsel %vm543, %v2642, %v2638
    %v2644 = vlaneseq
    %v2645 = vshrl.u32 %v2644, 7
    %v2646 = vsub.s32 %v533, %v2645
    %v2647 = vrot.slane %v2573, %v2646
    %v2648 = vlaneseq
    %v2649 = vshrl.u32 %v2648, 7
    %v2650 = vsub.s32 %v538, %v2649
    %v2651 = vrot.slane %v2576, %v2650
    %v2652 = vsel %vm543, %v2651, %v2647
    %v2653 = vlaneseq
    %v2654 = vshrl.u32 %v2653, 7
    %v2655 = vsub.s32 %v533, %v2654
    %v2656 = vrot.slane %v2579, %v2655
    %v2657 = vlaneseq
    %v2658 = vshrl.u32 %v2657, 7
    %v2659 = vsub.s32 %v538, %v2658
    %v2660 = vrot.slane %v2582, %v2659
    %v2661 = vsel %vm543, %v2660, %v2656
    %v2662 = vlaneseq
    %v2663 = vshrl.u32 %v2662, 7
    %v2664 = vsub.s32 %v533, %v2663
    %v2665 = vrot.slane %v2585, %v2664
    %v2666 = vlaneseq
    %v2667 = vshrl.u32 %v2666, 7
    %v2668 = vsub.s32 %v538, %v2667
    %v2669 = vrot.slane %v2588, %v2668
    %v2670 = vsel %vm543, %v2669, %v2665
    %v2671 = vlaneseq
    %v2672 = vshrl.u32 %v2671, 7
    %v2673 = vsub.s32 %v533, %v2672
    %v2674 = vrot.slane %v2591, %v2673
    %v2675 = vlaneseq
    %v2676 = vshrl.u32 %v2675, 7
    %v2677 = vsub.s32 %v538, %v2676
    %v2678 = vrot.slane %v2594, %v2677
    %v2679 = vsel %vm543, %v2678, %v2674
    %v2680 = vlaneseq
    %v2681 = vshrl.u32 %v2680, 7
    %v2682 = vsub.s32 %v533, %v2681
    %v2683 = vrot.slane %v2597, %v2682
    %v2684 = vlaneseq
    %v2685 = vshrl.u32 %v2684, 7
    %v2686 = vsub.s32 %v538, %v2685
    %v2687 = vrot.slane %v2600, %v2686
    %v2688 = vsel %vm543, %v2687, %v2683
    %v2689 = vsel %vm608, %v2634, %v2625
    %v2690 = vsel %vm610, %v2643, %v2689
    %v2691 = vsel %vm612, %v2652, %v2690
    %v2692 = vsel %vm614, %v2661, %v2691
    %v2693 = vsel %vm616, %v2670, %v2692
    %v2694 = vsel %vm618, %v2679, %v2693
    %v2695 = vsel %vm620, %v2688, %v2694
    %v2697 = vsel %vm623, %v2695, -inf
    %2698 = vmax.xlane.f32.xlu0 %v2697
    %v2699 = vpop.xlane.xlu0 %2698
    %v2701 = vlaneseq
    %v2702 = vshrl.u32 %v2701, 7
    %v2703 = vsub.s32 0, %v2702
    %v2704 = vrot.slane %v2699, %v2703
    %v2705 = vlaneseq
    %v2706 = vshrl.u32 %v2705, 7
    %v2707 = vsub.s32 1, %v2706
    %v2708 = vrot.slane %v2699, %v2707
    %v2709 = vlaneseq
    %v2710 = vshrl.u32 %v2709, 7
    %v2711 = vsub.s32 2, %v2710
    %v2712 = vrot.slane %v2699, %v2711
    %v2713 = vlaneseq
    %v2714 = vshrl.u32 %v2713, 7
    %v2715 = vsub.s32 3, %v2714
    %v2716 = vrot.slane %v2699, %v2715
    %v2717 = vlaneseq
    %v2718 = vshrl.u32 %v2717, 7
    %v2719 = vsub.s32 4, %v2718
    %v2720 = vrot.slane %v2699, %v2719
    %v2721 = vlaneseq
    %v2722 = vshrl.u32 %v2721, 7
    %v2723 = vsub.s32 5, %v2722
    %v2724 = vrot.slane %v2699, %v2723
    %v2725 = vlaneseq
    %v2726 = vshrl.u32 %v2725, 7
    %v2727 = vsub.s32 6, %v2726
    %v2728 = vrot.slane %v2699, %v2727
    %v2729 = vlaneseq
    %v2730 = vshrl.u32 %v2729, 7
    %v2731 = vsub.s32 7, %v2730
    %v2732 = vrot.slane %v2699, %v2731
    %v2741 = vsub.f32 %v2555, %v2704
    %v2742 = vsub.f32 %v2558, %v2704
    %v2743 = vsub.f32 %v2561, %v2708
    %v2744 = vsub.f32 %v2564, %v2708
    %v2745 = vsub.f32 %v2567, %v2712
    %v2746 = vsub.f32 %v2570, %v2712
    %v2747 = vsub.f32 %v2573, %v2716
    %v2748 = vsub.f32 %v2576, %v2716
    %v2749 = vsub.f32 %v2579, %v2720
    %v2750 = vsub.f32 %v2582, %v2720
    %v2751 = vsub.f32 %v2585, %v2724
    %v2752 = vsub.f32 %v2588, %v2724
    %v2753 = vsub.f32 %v2591, %v2728
    %v2754 = vsub.f32 %v2594, %v2728
    %v2755 = vsub.f32 %v2597, %v2732
    %v2756 = vsub.f32 %v2600, %v2732
    %v2757 = vmul.f32 %v2741, 1.442695
    %v2758 = vpow.pop %v2757
    %v2759 = vmul.f32 %v2742, 1.442695
    %v2760 = vpow.pop %v2759
    %v2761 = vmul.f32 %v2743, 1.442695
    %v2762 = vpow.pop %v2761
    %v2763 = vmul.f32 %v2744, 1.442695
    %v2764 = vpow.pop %v2763
    %v2765 = vmul.f32 %v2745, 1.442695
    %v2766 = vpow.pop %v2765
    %v2767 = vmul.f32 %v2746, 1.442695
    %v2768 = vpow.pop %v2767
    %v2769 = vmul.f32 %v2747, 1.442695
    %v2770 = vpow.pop %v2769
    %v2771 = vmul.f32 %v2748, 1.442695
    %v2772 = vpow.pop %v2771
    %v2773 = vmul.f32 %v2749, 1.442695
    %v2774 = vpow.pop %v2773
    %v2775 = vmul.f32 %v2750, 1.442695
    %v2776 = vpow.pop %v2775
    %v2777 = vmul.f32 %v2751, 1.442695
    %v2778 = vpow.pop %v2777
    %v2779 = vmul.f32 %v2752, 1.442695
    %v2780 = vpow.pop %v2779
    %v2781 = vmul.f32 %v2753, 1.442695
    %v2782 = vpow.pop %v2781
    %v2783 = vmul.f32 %v2754, 1.442695
    %v2784 = vpow.pop %v2783
    %v2785 = vmul.f32 %v2755, 1.442695
    %v2786 = vpow.pop %v2785
    %v2787 = vmul.f32 %v2756, 1.442695
    %v2788 = vpow.pop %v2787
    %2805 = vset.pattern.permute.xlu0 0
    %2806 = vperm.xlu0 %2805, %v2758
    %v2807 = vpop.permute.xlu0 %2806
    %2808 = vset.pattern.permute.xlu0 0
    %2809 = vperm.xlu0 %2808, %v2760
    %v2810 = vpop.permute.xlu0 %2809
    %2811 = vset.pattern.permute.xlu0 0
    %2812 = vperm.xlu0 %2811, %v2762
    %v2813 = vpop.permute.xlu0 %2812
    %2814 = vset.pattern.permute.xlu0 0
    %2815 = vperm.xlu0 %2814, %v2764
    %v2816 = vpop.permute.xlu0 %2815
    %2817 = vset.pattern.permute.xlu0 0
    %2818 = vperm.xlu0 %2817, %v2766
    %v2819 = vpop.permute.xlu0 %2818
    %2820 = vset.pattern.permute.xlu0 0
    %2821 = vperm.xlu0 %2820, %v2768
    %v2822 = vpop.permute.xlu0 %2821
    %2823 = vset.pattern.permute.xlu0 0
    %2824 = vperm.xlu0 %2823, %v2770
    %v2825 = vpop.permute.xlu0 %2824
    %2826 = vset.pattern.permute.xlu0 0
    %2827 = vperm.xlu0 %2826, %v2772
    %v2828 = vpop.permute.xlu0 %2827
    %2829 = vset.pattern.permute.xlu0 0
    %2830 = vperm.xlu0 %2829, %v2774
    %v2831 = vpop.permute.xlu0 %2830
    %2832 = vset.pattern.permute.xlu0 0
    %2833 = vperm.xlu0 %2832, %v2776
    %v2834 = vpop.permute.xlu0 %2833
    %2835 = vset.pattern.permute.xlu0 0
    %2836 = vperm.xlu0 %2835, %v2778
    %v2837 = vpop.permute.xlu0 %2836
    %2838 = vset.pattern.permute.xlu0 0
    %2839 = vperm.xlu0 %2838, %v2780
    %v2840 = vpop.permute.xlu0 %2839
    %2841 = vset.pattern.permute.xlu0 0
    %2842 = vperm.xlu0 %2841, %v2782
    %v2843 = vpop.permute.xlu0 %2842
    %2844 = vset.pattern.permute.xlu0 0
    %2845 = vperm.xlu0 %2844, %v2784
    %v2846 = vpop.permute.xlu0 %2845
    %2847 = vset.pattern.permute.xlu0 0
    %2848 = vperm.xlu0 %2847, %v2786
    %v2849 = vpop.permute.xlu0 %2848
    %2850 = vset.pattern.permute.xlu0 0
    %2851 = vperm.xlu0 %2850, %v2788
    %v2852 = vpop.permute.xlu0 %2851
    %v2853 = vlaneseq
    %v2854 = vshrl.u32 %v2853, 7
    %v2855 = vsub.s32 %v533, %v2854
    %v2856 = vrot.slane %v2807, %v2855
    %v2857 = vlaneseq
    %v2858 = vshrl.u32 %v2857, 7
    %v2859 = vsub.s32 %v538, %v2858
    %v2860 = vrot.slane %v2810, %v2859
    %v2861 = vsel %vm543, %v2860, %v2856
    %v2862 = vlaneseq
    %v2863 = vshrl.u32 %v2862, 7
    %v2864 = vsub.s32 %v533, %v2863
    %v2865 = vrot.slane %v2813, %v2864
    %v2866 = vlaneseq
    %v2867 = vshrl.u32 %v2866, 7
    %v2868 = vsub.s32 %v538, %v2867
    %v2869 = vrot.slane %v2816, %v2868
    %v2870 = vsel %vm543, %v2869, %v2865
    %v2871 = vlaneseq
    %v2872 = vshrl.u32 %v2871, 7
    %v2873 = vsub.s32 %v533, %v2872
    %v2874 = vrot.slane %v2819, %v2873
    %v2875 = vlaneseq
    %v2876 = vshrl.u32 %v2875, 7
    %v2877 = vsub.s32 %v538, %v2876
    %v2878 = vrot.slane %v2822, %v2877
    %v2879 = vsel %vm543, %v2878, %v2874
    %v2880 = vlaneseq
    %v2881 = vshrl.u32 %v2880, 7
    %v2882 = vsub.s32 %v533, %v2881
    %v2883 = vrot.slane %v2825, %v2882
    %v2884 = vlaneseq
    %v2885 = vshrl.u32 %v2884, 7
    %v2886 = vsub.s32 %v538, %v2885
    %v2887 = vrot.slane %v2828, %v2886
    %v2888 = vsel %vm543, %v2887, %v2883
    %v2889 = vlaneseq
    %v2890 = vshrl.u32 %v2889, 7
    %v2891 = vsub.s32 %v533, %v2890
    %v2892 = vrot.slane %v2831, %v2891
    %v2893 = vlaneseq
    %v2894 = vshrl.u32 %v2893, 7
    %v2895 = vsub.s32 %v538, %v2894
    %v2896 = vrot.slane %v2834, %v2895
    %v2897 = vsel %vm543, %v2896, %v2892
    %v2898 = vlaneseq
    %v2899 = vshrl.u32 %v2898, 7
    %v2900 = vsub.s32 %v533, %v2899
    %v2901 = vrot.slane %v2837, %v2900
    %v2902 = vlaneseq
    %v2903 = vshrl.u32 %v2902, 7
    %v2904 = vsub.s32 %v538, %v2903
    %v2905 = vrot.slane %v2840, %v2904
    %v2906 = vsel %vm543, %v2905, %v2901
    %v2907 = vlaneseq
    %v2908 = vshrl.u32 %v2907, 7
    %v2909 = vsub.s32 %v533, %v2908
    %v2910 = vrot.slane %v2843, %v2909
    %v2911 = vlaneseq
    %v2912 = vshrl.u32 %v2911, 7
    %v2913 = vsub.s32 %v538, %v2912
    %v2914 = vrot.slane %v2846, %v2913
    %v2915 = vsel %vm543, %v2914, %v2910
    %v2916 = vlaneseq
    %v2917 = vshrl.u32 %v2916, 7
    %v2918 = vsub.s32 %v533, %v2917
    %v2919 = vrot.slane %v2849, %v2918
    %v2920 = vlaneseq
    %v2921 = vshrl.u32 %v2920, 7
    %v2922 = vsub.s32 %v538, %v2921
    %v2923 = vrot.slane %v2852, %v2922
    %v2924 = vsel %vm543, %v2923, %v2919
    %v2925 = vsel %vm608, %v2870, %v2861
    %v2926 = vsel %vm610, %v2879, %v2925
    %v2927 = vsel %vm612, %v2888, %v2926
    %v2928 = vsel %vm614, %v2897, %v2927
    %v2929 = vsel %vm616, %v2906, %v2928
    %v2930 = vsel %vm618, %v2915, %v2929
    %v2931 = vsel %vm620, %v2924, %v2930
    %v2933 = vsel %vm623, %v2931, 0.0
    %2934 = vadd.xlane.f32.xlu0 %v2933
    %v2935 = vpop.xlane.xlu0 %2934
    %v2936 = vrcp.pop %v2935
    %v2938 = vlaneseq
    %v2939 = vshrl.u32 %v2938, 7
    %v2940 = vsub.s32 0, %v2939
    %v2941 = vrot.slane %v2936, %v2940
    %v2942 = vlaneseq
    %v2943 = vshrl.u32 %v2942, 7
    %v2944 = vsub.s32 1, %v2943
    %v2945 = vrot.slane %v2936, %v2944
    %v2946 = vlaneseq
    %v2947 = vshrl.u32 %v2946, 7
    %v2948 = vsub.s32 2, %v2947
    %v2949 = vrot.slane %v2936, %v2948
    %v2950 = vlaneseq
    %v2951 = vshrl.u32 %v2950, 7
    %v2952 = vsub.s32 3, %v2951
    %v2953 = vrot.slane %v2936, %v2952
    %v2954 = vlaneseq
    %v2955 = vshrl.u32 %v2954, 7
    %v2956 = vsub.s32 4, %v2955
    %v2957 = vrot.slane %v2936, %v2956
    %v2958 = vlaneseq
    %v2959 = vshrl.u32 %v2958, 7
    %v2960 = vsub.s32 5, %v2959
    %v2961 = vrot.slane %v2936, %v2960
    %v2962 = vlaneseq
    %v2963 = vshrl.u32 %v2962, 7
    %v2964 = vsub.s32 6, %v2963
    %v2965 = vrot.slane %v2936, %v2964
    %v2966 = vlaneseq
    %v2967 = vshrl.u32 %v2966, 7
    %v2968 = vsub.s32 7, %v2967
    %v2969 = vrot.slane %v2936, %v2968
    %v2978 = vmul.f32 %v2758, %v2941
    %v2979 = vmul.f32 %v2760, %v2941
    %v2980 = vmul.f32 %v2762, %v2945
    %v2981 = vmul.f32 %v2764, %v2945
    %v2982 = vmul.f32 %v2766, %v2949
    %v2983 = vmul.f32 %v2768, %v2949
    %v2984 = vmul.f32 %v2770, %v2953
    %v2985 = vmul.f32 %v2772, %v2953
    %v2986 = vmul.f32 %v2774, %v2957
    %v2987 = vmul.f32 %v2776, %v2957
    %v2988 = vmul.f32 %v2778, %v2961
    %v2989 = vmul.f32 %v2780, %v2961
    %v2990 = vmul.f32 %v2782, %v2965
    %v2991 = vmul.f32 %v2784, %v2965
    %v2992 = vmul.f32 %v2786, %v2969
    %v2993 = vmul.f32 %v2788, %v2969
    %2995 = vset.pattern.permute.xlu0 0
    %2996 = vperm.xlu0 %2995, %v2978
    %v2997 = vpop.permute.xlu0 %2996
    %3000 = vset.pattern.permute.xlu0 0
    %3001 = vperm.xlu0 %3000, %v2979
    %v3002 = vpop.permute.xlu0 %3001
    %3005 = vset.pattern.permute.xlu0 0
    %3006 = vperm.xlu0 %3005, %v2980
    %v3007 = vpop.permute.xlu0 %3006
    %3010 = vset.pattern.permute.xlu0 0
    %3011 = vperm.xlu0 %3010, %v2981
    %v3012 = vpop.permute.xlu0 %3011
    %3015 = vset.pattern.permute.xlu0 0
    %3016 = vperm.xlu0 %3015, %v2982
    %v3017 = vpop.permute.xlu0 %3016
    %3020 = vset.pattern.permute.xlu0 0
    %3021 = vperm.xlu0 %3020, %v2983
    %v3022 = vpop.permute.xlu0 %3021
    %3025 = vset.pattern.permute.xlu0 0
    %3026 = vperm.xlu0 %3025, %v2984
    %v3027 = vpop.permute.xlu0 %3026
    %3030 = vset.pattern.permute.xlu0 0
    %3031 = vperm.xlu0 %3030, %v2985
    %v3032 = vpop.permute.xlu0 %3031
    %3035 = vset.pattern.permute.xlu0 0
    %3036 = vperm.xlu0 %3035, %v2986
    %v3037 = vpop.permute.xlu0 %3036
    %3040 = vset.pattern.permute.xlu0 0
    %3041 = vperm.xlu0 %3040, %v2987
    %v3042 = vpop.permute.xlu0 %3041
    %3045 = vset.pattern.permute.xlu0 0
    %3046 = vperm.xlu0 %3045, %v2988
    %v3047 = vpop.permute.xlu0 %3046
    %3050 = vset.pattern.permute.xlu0 0
    %3051 = vperm.xlu0 %3050, %v2989
    %v3052 = vpop.permute.xlu0 %3051
    %3055 = vset.pattern.permute.xlu0 0
    %3056 = vperm.xlu0 %3055, %v2990
    %v3057 = vpop.permute.xlu0 %3056
    %3060 = vset.pattern.permute.xlu0 0
    %3061 = vperm.xlu0 %3060, %v2991
    %v3062 = vpop.permute.xlu0 %3061
    %3065 = vset.pattern.permute.xlu0 0
    %3066 = vperm.xlu0 %3065, %v2992
    %v3067 = vpop.permute.xlu0 %3066
    %3070 = vset.pattern.permute.xlu0 0
    %3071 = vperm.xlu0 %3070, %v2993
    %v3072 = vpop.permute.xlu0 %3071
    %v3074 = vmul.f32 %v2997, %v67
    %v3075 = vmul.f32 %v3002, %v68
    %v3076 = vmul.f32 %v3007, %v69
    %v3077 = vmul.f32 %v3012, %v70
    %v3078 = vmul.f32 %v3017, %v71
    %v3079 = vmul.f32 %v3022, %v72
    %v3080 = vmul.f32 %v3027, %v73
    %v3081 = vmul.f32 %v3032, %v74
    %v3082 = vmul.f32 %v3037, %v75
    %v3083 = vmul.f32 %v3042, %v76
    %v3084 = vmul.f32 %v3047, %v77
    %v3085 = vmul.f32 %v3052, %v78
    %v3086 = vmul.f32 %v3057, %v79
    %v3087 = vmul.f32 %v3062, %v80
    %v3088 = vmul.f32 %v3067, %v81
    %v3089 = vmul.f32 %v3072, %v82
    %v3090 = vsel %vm235, %v3074, 0.0
    %v3091 = vsel %vm470, %v3075, 0.0
    %v3092 = vadd.f32 %v3090, %v3091
    %v3093 = vrot.slane %v3092, 4
    %v3094 = vadd.f32 %v3092, %v3093
    %v3095 = vrot.slane %v3094, 2
    %v3096 = vadd.f32 %v3094, %v3095
    %v3097 = vrot.slane %v3096, 1
    %v3098 = vadd.f32 %v3096, %v3097
    %v3099 = vsel %vm235, %v3076, 0.0
    %v3100 = vsel %vm470, %v3077, 0.0
    %v3101 = vadd.f32 %v3099, %v3100
    %v3102 = vrot.slane %v3101, 4
    %v3103 = vadd.f32 %v3101, %v3102
    %v3104 = vrot.slane %v3103, 2
    %v3105 = vadd.f32 %v3103, %v3104
    %v3106 = vrot.slane %v3105, 1
    %v3107 = vadd.f32 %v3105, %v3106
    %v3108 = vsel %vm235, %v3078, 0.0
    %v3109 = vsel %vm470, %v3079, 0.0
    %v3110 = vadd.f32 %v3108, %v3109
    %v3111 = vrot.slane %v3110, 4
    %v3112 = vadd.f32 %v3110, %v3111
    %v3113 = vrot.slane %v3112, 2
    %v3114 = vadd.f32 %v3112, %v3113
    %v3115 = vrot.slane %v3114, 1
    %v3116 = vadd.f32 %v3114, %v3115
    %v3117 = vsel %vm235, %v3080, 0.0
    %v3118 = vsel %vm470, %v3081, 0.0
    %v3119 = vadd.f32 %v3117, %v3118
    %v3120 = vrot.slane %v3119, 4
    %v3121 = vadd.f32 %v3119, %v3120
    %v3122 = vrot.slane %v3121, 2
    %v3123 = vadd.f32 %v3121, %v3122
    %v3124 = vrot.slane %v3123, 1
    %v3125 = vadd.f32 %v3123, %v3124
    %v3126 = vsel %vm235, %v3082, 0.0
    %v3127 = vsel %vm470, %v3083, 0.0
    %v3128 = vadd.f32 %v3126, %v3127
    %v3129 = vrot.slane %v3128, 4
    %v3130 = vadd.f32 %v3128, %v3129
    %v3131 = vrot.slane %v3130, 2
    %v3132 = vadd.f32 %v3130, %v3131
    %v3133 = vrot.slane %v3132, 1
    %v3134 = vadd.f32 %v3132, %v3133
    %v3135 = vsel %vm235, %v3084, 0.0
    %v3136 = vsel %vm470, %v3085, 0.0
    %v3137 = vadd.f32 %v3135, %v3136
    %v3138 = vrot.slane %v3137, 4
    %v3139 = vadd.f32 %v3137, %v3138
    %v3140 = vrot.slane %v3139, 2
    %v3141 = vadd.f32 %v3139, %v3140
    %v3142 = vrot.slane %v3141, 1
    %v3143 = vadd.f32 %v3141, %v3142
    %v3144 = vsel %vm235, %v3086, 0.0
    %v3145 = vsel %vm470, %v3087, 0.0
    %v3146 = vadd.f32 %v3144, %v3145
    %v3147 = vrot.slane %v3146, 4
    %v3148 = vadd.f32 %v3146, %v3147
    %v3149 = vrot.slane %v3148, 2
    %v3150 = vadd.f32 %v3148, %v3149
    %v3151 = vrot.slane %v3150, 1
    %v3152 = vadd.f32 %v3150, %v3151
    %v3153 = vsel %vm235, %v3088, 0.0
    %v3154 = vsel %vm470, %v3089, 0.0
    %v3155 = vadd.f32 %v3153, %v3154
    %v3156 = vrot.slane %v3155, 4
    %v3157 = vadd.f32 %v3155, %v3156
    %v3158 = vrot.slane %v3157, 2
    %v3159 = vadd.f32 %v3157, %v3158
    %v3160 = vrot.slane %v3159, 1
    %v3161 = vadd.f32 %v3159, %v3160
    %v3170 = vsel %vm608, %v3107, %v3098
    %v3171 = vsel %vm610, %v3116, %v3170
    %v3172 = vsel %vm612, %v3125, %v3171
    %v3173 = vsel %vm614, %v3134, %v3172
    %v3174 = vsel %vm616, %v3143, %v3173
    %v3175 = vsel %vm618, %v3152, %v3174
    %v3176 = vsel %vm620, %v3161, %v3175
    %3178 = vrot.lane.b32.xlu0 %v2430, 64
    %v3179 = vpop.permute.xlu0 %3178
    %v3181 = vsel %vm235, %v3176, %v3179
    %v3183 = vsel %vm243, %v3181, 0
    %3185 = vmatprep.subr.mxu0 0.0
    %3186 = vmatpush1.msra.mxu0 %v59
    %3187 = vmatprep.subr.mxu0 0.0
    %3188 = vmatpush1.msra.mxu0 %v60
    %3189 = vmatprep.subr.mxu0 0.0
    %3190 = vmatpush1.msra.mxu0 %v61
    %3191 = vmatprep.subr.mxu0 0.0
    %3192 = vmatpush1.msra.mxu0 %v62
    %3193 = vmatprep.subr.mxu0 0.0
    %3194 = vmatpush1.msra.mxu0 %v63
    %3195 = vmatprep.subr.mxu0 0.0
    %3196 = vmatpush1.msra.mxu0 %v64
    %3197 = vmatprep.subr.mxu0 0.0
    %3198 = vmatpush1.msra.mxu0 %v65
    %3199 = vmatprep.subr.mxu0 0.0
    %3200 = vmatpush1.msra.mxu0 %v66
    %3201 = vmatprep.subr.mxu0 0.0
    %3202 = vmatpush1.msra.mxu0 0.0
    %3203 = vmatprep.subr.mxu0 0.0
    %3204 = vmatpush1.msra.mxu0 0.0
    %3205 = vmatprep.subr.mxu0 0.0
    %3206 = vmatpush1.msra.mxu0 0.0
    %3207 = vmatprep.subr.mxu0 0.0
    %3208 = vmatpush1.msra.mxu0 0.0
    %3209 = vmatprep.subr.mxu0 0.0
    %3210 = vmatpush1.msra.mxu0 0.0
    %3211 = vmatprep.subr.mxu0 0.0
    %3212 = vmatpush1.msra.mxu0 0.0
    %3213 = vmatprep.subr.mxu0 0.0
    %3214 = vmatpush1.msra.mxu0 0.0
    %3215 = vmatprep.subr.mxu0 0.0
    %3216 = vmatpush1.msra.mxu0 0.0
    %3217 = vmatprep.subr.mxu0 0.0
    %3218 = vmatpush1.msra.mxu0 0.0
    %3219 = vmatprep.subr.mxu0 0.0
    %3220 = vmatpush1.msra.mxu0 0.0
    %3221 = vmatprep.subr.mxu0 0.0
    %3222 = vmatpush1.msra.mxu0 0.0
    %3223 = vmatprep.subr.mxu0 0.0
    %3224 = vmatpush1.msra.mxu0 0.0
    %3225 = vmatprep.subr.mxu0 0.0
    %3226 = vmatpush1.msra.mxu0 0.0
    %3227 = vmatprep.subr.mxu0 0.0
    %3228 = vmatpush1.msra.mxu0 0.0
    %3229 = vmatprep.subr.mxu0 0.0
    %3230 = vmatpush1.msra.mxu0 0.0
    %3231 = vmatprep.subr.mxu0 0.0
    %3232 = vmatpush1.msra.mxu0 0.0
    %3233 = vmatprep.subr.mxu0 0.0
    %3234 = vmatpush1.msra.mxu0 0.0
    %3235 = vmatprep.subr.mxu0 0.0
    %3236 = vmatpush1.msra.mxu0 0.0
    %3237 = vmatprep.subr.mxu0 0.0
    %3238 = vmatpush1.msra.mxu0 0.0
    %3239 = vmatprep.subr.mxu0 0.0
    %3240 = vmatpush1.msra.mxu0 0.0
    %3241 = vmatprep.subr.mxu0 0.0
    %3242 = vmatpush1.msra.mxu0 0.0
    %3243 = vmatprep.subr.mxu0 0.0
    %3244 = vmatpush1.msra.mxu0 0.0
    %3245 = vmatprep.subr.mxu0 0.0
    %3246 = vmatpush1.msra.mxu0 0.0
    %3247 = vmatprep.subr.mxu0 0.0
    %3248 = vmatpush1.msra.mxu0 0.0
    %3249 = vmatprep.mubr.f32.mxu0 0.0
    %3250 = vmatmul.mubr.f32.gmra.mrb[0].mxu0 %v3183
    %v3251 = vpop.f32.mrb[0].mxu0
    %v3252 = vadd.f32 0.0, %v3251
    %v3253 = vpop.f32.mrb[0].mxu0
    %3254 = vdwg.mxu0
    %v3255 = vtanh.pop %v3252
    %s3256 = scalar_lea.vmem [#allocation2], 16
    %3257 = vst.msk [vmem:[%s3256] sm:$0xff] %vm235, %v3255
    %s3258 = scalar_lea.vmem %s0, 24
    %v3259 = vld [vmem:[%s3258] sm:$0xff]
    %3261 = vrot.lane.b32.xlu0 %v3255, 16
    %v3262 = vpop.permute.xlu0 %3261
    %3264 = vrot.lane.b32.xlu0 %v2328, 80
    %v3265 = vpop.permute.xlu0 %3264
    %v3267 = vsel %vm115, %v3259, %v3262
    %v3268 = vsel %vm117, %v3267, %v3265
    %v3270 = vsel %vm125, %v3268, 0
    %3272 = vmatprep.subr.mxu0 0.0
    %3273 = vmatpush1.msra.mxu0 %v39
    %3274 = vmatprep.subr.mxu0 0.0
    %3275 = vmatpush1.msra.mxu0 %v40
    %3276 = vmatprep.subr.mxu0 0.0
    %3277 = vmatpush1.msra.mxu0 %v41
    %3278 = vmatprep.subr.mxu0 0.0
    %3279 = vmatpush1.msra.mxu0 %v42
    %3280 = vmatprep.subr.mxu0 0.0
    %3281 = vmatpush1.msra.mxu0 %v43
    %3282 = vmatprep.subr.mxu0 0.0
    %3283 = vmatpush1.msra.mxu0 %v44
    %3284 = vmatprep.subr.mxu0 0.0
    %3285 = vmatpush1.msra.mxu0 %v45
    %3286 = vmatprep.subr.mxu0 0.0
    %3287 = vmatpush1.msra.mxu0 %v46
    %3288 = vmatprep.subr.mxu0 0.0
    %3289 = vmatpush1.msra.mxu0 %v47
    %3290 = vmatprep.subr.mxu0 0.0
    %3291 = vmatpush1.msra.mxu0 %v48
    %3292 = vmatprep.subr.mxu0 0.0
    %3293 = vmatpush1.msra.mxu0 0.0
    %3294 = vmatprep.subr.mxu0 0.0
    %3295 = vmatpush1.msra.mxu0 0.0
    %3296 = vmatprep.subr.mxu0 0.0
    %3297 = vmatpush1.msra.mxu0 0.0
    %3298 = vmatprep.subr.mxu0 0.0
    %3299 = vmatpush1.msra.mxu0 0.0
    %3300 = vmatprep.subr.mxu0 0.0
    %3301 = vmatpush1.msra.mxu0 0.0
    %3302 = vmatprep.subr.mxu0 0.0
    %3303 = vmatpush1.msra.mxu0 0.0
    %3304 = vmatprep.subr.mxu0 0.0
    %3305 = vmatpush1.msra.mxu0 0.0
    %3306 = vmatprep.subr.mxu0 0.0
    %3307 = vmatpush1.msra.mxu0 0.0
    %3308 = vmatprep.subr.mxu0 0.0
    %3309 = vmatpush1.msra.mxu0 0.0
    %3310 = vmatprep.subr.mxu0 0.0
    %3311 = vmatpush1.msra.mxu0 0.0
    %3312 = vmatprep.subr.mxu0 0.0
    %3313 = vmatpush1.msra.mxu0 0.0
    %3314 = vmatprep.subr.mxu0 0.0
    %3315 = vmatpush1.msra.mxu0 0.0
    %3316 = vmatprep.subr.mxu0 0.0
    %3317 = vmatpush1.msra.mxu0 0.0
    %3318 = vmatprep.subr.mxu0 0.0
    %3319 = vmatpush1.msra.mxu0 0.0
    %3320 = vmatprep.subr.mxu0 0.0
    %3321 = vmatpush1.msra.mxu0 0.0
    %3322 = vmatprep.subr.mxu0 0.0
    %3323 = vmatpush1.msra.mxu0 0.0
    %3324 = vmatprep.subr.mxu0 0.0
    %3325 = vmatpush1.msra.mxu0 0.0
    %3326 = vmatprep.subr.mxu0 0.0
    %3327 = vmatpush1.msra.mxu0 0.0
    %3328 = vmatprep.subr.mxu0 0.0
    %3329 = vmatpush1.msra.mxu0 0.0
    %3330 = vmatprep.subr.mxu0 0.0
    %3331 = vmatpush1.msra.mxu0 0.0
    %3332 = vmatprep.subr.mxu0 0.0
    %3333 = vmatpush1.msra.mxu0 0.0
    %3334 = vmatprep.subr.mxu0 0.0
    %3335 = vmatpush1.msra.mxu0 0.0
    %3336 = vmatprep.mubr.f32.mxu0 0.0
    %3337 = vmatmul.mubr.f32.gmra.mrb[0].mxu0 %v3270
    %v3338 = vpop.f32.mrb[0].mxu0
    %v3339 = vadd.f32 %v123, %v3338
    %v3340 = vpop.f32.mrb[0].mxu0
    %3341 = vdwg.mxu0
    %v3342 = vxor.u32 %v3339, 2147483648
    %v3343 = vmul.f32 %v3342, 1.442695
    %v3344 = vpow.pop %v3343
    %v3345 = vadd.f32 %v3344, 1.0
    %v3346 = vrcp.pop %v3345
    %v3347 = vmul.f32 1.0, %v3346
    %v3348 = vtanh.pop %v3339
    %v3349 = vmul.f32 %v3347, %v2322
    %3351 = vrot.lane.b32.xlu0 %v3348, 64
    %v3352 = vpop.permute.xlu0 %3351
    %v3354 = vmul.f32 %v3347, %v3352
    %3356 = vrot.lane.b32.xlu0 %v3354, 32
    %v3357 = vpop.permute.xlu0 %3356
    %v3359 = vadd.f32 %v3349, %v3357
    %v3360 = vtanh.pop %v3359
    %3362 = vrot.lane.b32.xlu0 %v3360, 64
    %v3363 = vpop.permute.xlu0 %3362
    %v3365 = vmul.f32 %v3347, %v3363
    %3367 = vrot.lane.b32.xlu0 %v3365, 32
    %v3368 = vpop.permute.xlu0 %3367
    %v3370 = vsel %vm235, %v3368, %v3179
    %v3372 = vsel %vm243, %v3370, 0
    %3374 = vmatprep.subr.mxu0 0.0
    %3375 = vmatpush1.msra.mxu0 %v50
    %3376 = vmatprep.subr.mxu0 0.0
    %3377 = vmatpush1.msra.mxu0 %v51
    %3378 = vmatprep.subr.mxu0 0.0
    %3379 = vmatpush1.msra.mxu0 %v52
    %3380 = vmatprep.subr.mxu0 0.0
    %3381 = vmatpush1.msra.mxu0 %v53
    %3382 = vmatprep.subr.mxu0 0.0
    %3383 = vmatpush1.msra.mxu0 %v54
    %3384 = vmatprep.subr.mxu0 0.0
    %3385 = vmatpush1.msra.mxu0 %v55
    %3386 = vmatprep.subr.mxu0 0.0
    %3387 = vmatpush1.msra.mxu0 %v56
    %3388 = vmatprep.subr.mxu0 0.0
    %3389 = vmatpush1.msra.mxu0 %v57
    %3390 = vmatprep.subr.mxu0 0.0
    %3391 = vmatpush1.msra.mxu0 0.0
    %3392 = vmatprep.subr.mxu0 0.0
    %3393 = vmatpush1.msra.mxu0 0.0
    %3394 = vmatprep.subr.mxu0 0.0
    %3395 = vmatpush1.msra.mxu0 0.0
    %3396 = vmatprep.subr.mxu0 0.0
    %3397 = vmatpush1.msra.mxu0 0.0
    %3398 = vmatprep.subr.mxu0 0.0
    %3399 = vmatpush1.msra.mxu0 0.0
    %3400 = vmatprep.subr.mxu0 0.0
    %3401 = vmatpush1.msra.mxu0 0.0
    %3402 = vmatprep.subr.mxu0 0.0
    %3403 = vmatpush1.msra.mxu0 0.0
    %3404 = vmatprep.subr.mxu0 0.0
    %3405 = vmatpush1.msra.mxu0 0.0
    %3406 = vmatprep.subr.mxu0 0.0
    %3407 = vmatpush1.msra.mxu0 0.0
    %3408 = vmatprep.subr.mxu0 0.0
    %3409 = vmatpush1.msra.mxu0 0.0
    %3410 = vmatprep.subr.mxu0 0.0
    %3411 = vmatpush1.msra.mxu0 0.0
    %3412 = vmatprep.subr.mxu0 0.0
    %3413 = vmatpush1.msra.mxu0 0.0
    %3414 = vmatprep.subr.mxu0 0.0
    %3415 = vmatpush1.msra.mxu0 0.0
    %3416 = vmatprep.subr.mxu0 0.0
    %3417 = vmatpush1.msra.mxu0 0.0
    %3418 = vmatprep.subr.mxu0 0.0
    %3419 = vmatpush1.msra.mxu0 0.0
    %3420 = vmatprep.subr.mxu0 0.0
    %3421 = vmatpush1.msra.mxu0 0.0
    %3422 = vmatprep.subr.mxu0 0.0
    %3423 = vmatpush1.msra.mxu0 0.0
    %3424 = vmatprep.subr.mxu0 0.0
    %3425 = vmatpush1.msra.mxu0 0.0
    %3426 = vmatprep.subr.mxu0 0.0
    %3427 = vmatpush1.msra.mxu0 0.0
    %3428 = vmatprep.subr.mxu0 0.0
    %3429 = vmatpush1.msra.mxu0 0.0
    %3430 = vmatprep.subr.mxu0 0.0
    %3431 = vmatpush1.msra.mxu0 0.0
    %3432 = vmatprep.subr.mxu0 0.0
    %3433 = vmatpush1.msra.mxu0 0.0
    %3434 = vmatprep.subr.mxu0 0.0
    %3435 = vmatpush1.msra.mxu0 0.0
    %3436 = vmatprep.subr.mxu0 0.0
    %3437 = vmatpush1.msra.mxu0 0.0
    %3438 = vmatprep.mubr.f32.mxu0 0.0
    %3439 = vmatmul.mubr.f32.gmra.mrb[0].mxu0 %v3372
    %v3440 = vpop.f32.mrb[0].mxu0
    %v3441 = vadd.f32 %v241, %v3440
    %v3442 = vpop.f32.mrb[0].mxu0
    %3443 = vdwg.mxu0
    %v3444 = vxor.u32 %v3441, 2147483648
    %v3445 = vmul.f32 %v3444, 1.442695
    %v3446 = vpow.pop %v3445
    %v3447 = vadd.f32 %v3446, 1.0
    %v3448 = vrcp.pop %v3447
    %v3449 = vmul.f32 1.0, %v3448
    %v3450 = vtanh.pop %v3441
    %v3451 = vmul.f32 %v3449, %v2424
    %3453 = vrot.lane.b32.xlu0 %v3450, 64
    %v3454 = vpop.permute.xlu0 %3453
    %v3456 = vmul.f32 %v3449, %v3454
    %3458 = vrot.lane.b32.xlu0 %v3456, 32
    %v3459 = vpop.permute.xlu0 %3458
    %v3461 = vadd.f32 %v3451, %v3459
    %v3462 = vtanh.pop %v3461
    %3464 = vrot.lane.b32.xlu0 %v3462, 64
    %v3465 = vpop.permute.xlu0 %3464
    %v3467 = vmul.f32 %v3449, %v3465
    %v3469 = vcombine.high %v3467, %v3467
    %v3471 = vunpack.c.l.s4 1966171168
    %v3472 = vunpack.c.0.s8 %v3471
    %v3473 = vlaneseq
    %v3474 = vshrl.u32 %v3473, 7
    %v3475 = vsub.s32 %v3472, %v3474
    %v3476 = vrot.slane %v3467, %v3475
    %v3478 = vunpack.c.l.s4 1966171168
    %v3479 = vunpack.c.0.s8 %v3478
    %v3480 = vlaneseq
    %v3481 = vshrl.u32 %v3480, 7
    %v3482 = vsub.s32 %v3479, %v3481
    %v3483 = vrot.slane %v3469, %v3482
    %v3484 = vcombine.high %v3476, %v3476
    %v3485 = vcombine.high %v3483, %v3483
    %v3487 = vunpack.c.l.s4 1966171168
    %v3488 = vunpack.c.0.s8 %v3487
    %v3489 = vlaneseq
    %v3490 = vshrl.u32 %v3489, 7
    %v3491 = vsub.s32 %v3488, %v3490
    %v3492 = vrot.slane %v3476, %v3491
    %v3494 = vunpack.c.l.s4 1966171168
    %v3495 = vunpack.c.0.s8 %v3494
    %v3496 = vlaneseq
    %v3497 = vshrl.u32 %v3496, 7
    %v3498 = vsub.s32 %v3495, %v3497
    %v3499 = vrot.slane %v3483, %v3498
    %v3501 = vunpack.c.l.s4 1966171168
    %v3502 = vunpack.c.0.s8 %v3501
    %v3503 = vlaneseq
    %v3504 = vshrl.u32 %v3503, 7
    %v3505 = vsub.s32 %v3502, %v3504
    %v3506 = vrot.slane %v3484, %v3505
    %v3508 = vunpack.c.l.s4 1966171168
    %v3509 = vunpack.c.0.s8 %v3508
    %v3510 = vlaneseq
    %v3511 = vshrl.u32 %v3510, 7
    %v3512 = vsub.s32 %v3509, %v3511
    %v3513 = vrot.slane %v3485, %v3512
    %v3514 = vcombine.high %v3492, %v3492
    %v3515 = vcombine.high %v3499, %v3499
    %v3516 = vcombine.high %v3506, %v3506
    %v3517 = vcombine.high %v3513, %v3513
    %v3518 = vlaneseq
    %v3519 = vshrl.u32 %v3518, 7
    %v3520 = vsub.s32 0, %v3519
    %v3521 = vrot.slane %v3492, %v3520
    %v3522 = vlaneseq
    %v3523 = vshrl.u32 %v3522, 7
    %v3524 = vsub.s32 0, %v3523
    %v3525 = vrot.slane %v3506, %v3524
    %v3526 = vlaneseq
    %v3527 = vshrl.u32 %v3526, 7
    %v3528 = vsub.s32 0, %v3527
    %v3529 = vrot.slane %v3514, %v3528
    %v3530 = vlaneseq
    %v3531 = vshrl.u32 %v3530, 7
    %v3532 = vsub.s32 0, %v3531
    %v3533 = vrot.slane %v3516, %v3532
    %v3534 = vlaneseq
    %v3535 = vshrl.u32 %v3534, 7
    %v3536 = vsub.s32 0, %v3535
    %v3537 = vrot.slane %v3499, %v3536
    %v3538 = vlaneseq
    %v3539 = vshrl.u32 %v3538, 7
    %v3540 = vsub.s32 0, %v3539
    %v3541 = vrot.slane %v3513, %v3540
    %v3542 = vlaneseq
    %v3543 = vshrl.u32 %v3542, 7
    %v3544 = vsub.s32 0, %v3543
    %v3545 = vrot.slane %v3515, %v3544
    %v3546 = vlaneseq
    %v3547 = vshrl.u32 %v3546, 7
    %v3548 = vsub.s32 0, %v3547
    %v3549 = vrot.slane %v3517, %v3548
    %3550 = vrot.lane.b32.xlu0 %v3521, 32
    %v3551 = vpop.permute.xlu0 %3550
    %3552 = vrot.lane.b32.xlu0 %v3525, 32
    %v3553 = vpop.permute.xlu0 %3552
    %3554 = vrot.lane.b32.xlu0 %v3529, 32
    %v3555 = vpop.permute.xlu0 %3554
    %3556 = vrot.lane.b32.xlu0 %v3533, 32
    %v3557 = vpop.permute.xlu0 %3556
    %3558 = vrot.lane.b32.xlu0 %v3537, 32
    %v3559 = vpop.permute.xlu0 %3558
    %3560 = vrot.lane.b32.xlu0 %v3541, 32
    %v3561 = vpop.permute.xlu0 %3560
    %3562 = vrot.lane.b32.xlu0 %v3545, 32
    %v3563 = vpop.permute.xlu0 %3562
    %3564 = vrot.lane.b32.xlu0 %v3549, 32
    %v3565 = vpop.permute.xlu0 %3564
    %v3574 = vmul.f32 %v83, %v3551
    %v3575 = vmul.f32 %v84, %v3551
    %v3576 = vmul.f32 %v85, %v3553
    %v3577 = vmul.f32 %v86, %v3553
    %v3578 = vmul.f32 %v87, %v3555
    %v3579 = vmul.f32 %v88, %v3555
    %v3580 = vmul.f32 %v89, %v3557
    %v3581 = vmul.f32 %v90, %v3557
    %v3582 = vmul.f32 %v91, %v3559
    %v3583 = vmul.f32 %v92, %v3559
    %v3584 = vmul.f32 %v93, %v3561
    %v3585 = vmul.f32 %v94, %v3561
    %v3586 = vmul.f32 %v95, %v3563
    %v3587 = vmul.f32 %v96, %v3563
    %v3588 = vmul.f32 %v97, %v3565
    %v3589 = vmul.f32 %v98, %v3565
    %v3590 = vsel %vm235, %v3574, 0.0
    %3591 = vadd.xlane.f32.xlu0 %v3590
    %v3592 = vpop.xlane.xlu0 %3591
    %v3593 = vsel %vm470, %v3575, 0.0
    %3594 = vadd.xlane.f32.xlu0 %v3593
    %v3595 = vpop.xlane.xlu0 %3594
    %v3596 = vsel %vm235, %v3576, 0.0
    %3597 = vadd.xlane.f32.xlu0 %v3596
    %v3598 = vpop.xlane.xlu0 %3597
    %v3599 = vsel %vm470, %v3577, 0.0
    %3600 = vadd.xlane.f32.xlu0 %v3599
    %v3601 = vpop.xlane.xlu0 %3600
    %v3602 = vsel %vm235, %v3578, 0.0
    %3603 = vadd.xlane.f32.xlu0 %v3602
    %v3604 = vpop.xlane.xlu0 %3603
    %v3605 = vsel %vm470, %v3579, 0.0
    %3606 = vadd.xlane.f32.xlu0 %v3605
    %v3607 = vpop.xlane.xlu0 %3606
    %v3608 = vsel %vm235, %v3580, 0.0
    %3609 = vadd.xlane.f32.xlu0 %v3608
    %v3610 = vpop.xlane.xlu0 %3609
    %v3611 = vsel %vm470, %v3581, 0.0
    %3612 = vadd.xlane.f32.xlu0 %v3611
    %v3613 = vpop.xlane.xlu0 %3612
    %v3614 = vsel %vm235, %v3582, 0.0
    %3615 = vadd.xlane.f32.xlu0 %v3614
    %v3616 = vpop.xlane.xlu0 %3615
    %v3617 = vsel %vm470, %v3583, 0.0
    %3618 = vadd.xlane.f32.xlu0 %v3617
    %v3619 = vpop.xlane.xlu0 %3618
    %v3620 = vsel %vm235, %v3584, 0.0
    %3621 = vadd.xlane.f32.xlu0 %v3620
    %v3622 = vpop.xlane.xlu0 %3621
    %v3623 = vsel %vm470, %v3585, 0.0
    %3624 = vadd.xlane.f32.xlu0 %v3623
    %v3625 = vpop.xlane.xlu0 %3624
    %v3626 = vsel %vm235, %v3586, 0.0
    %3627 = vadd.xlane.f32.xlu0 %v3626
    %v3628 = vpop.xlane.xlu0 %3627
    %v3629 = vsel %vm470, %v3587, 0.0
    %3630 = vadd.xlane.f32.xlu0 %v3629
    %v3631 = vpop.xlane.xlu0 %3630
    %v3632 = vsel %vm235, %v3588, 0.0
    %3633 = vadd.xlane.f32.xlu0 %v3632
    %v3634 = vpop.xlane.xlu0 %3633
    %v3635 = vsel %vm470, %v3589, 0.0
    %3636 = vadd.xlane.f32.xlu0 %v3635
    %v3637 = vpop.xlane.xlu0 %3636
    %v3654 = vlaneseq
    %v3655 = vshrl.u32 %v3654, 7
    %v3656 = vsub.s32 %v533, %v3655
    %v3657 = vrot.slane %v3592, %v3656
    %v3658 = vlaneseq
    %v3659 = vshrl.u32 %v3658, 7
    %v3660 = vsub.s32 %v538, %v3659
    %v3661 = vrot.slane %v3595, %v3660
    %v3662 = vsel %vm543, %v3661, %v3657
    %v3663 = vlaneseq
    %v3664 = vshrl.u32 %v3663, 7
    %v3665 = vsub.s32 %v533, %v3664
    %v3666 = vrot.slane %v3598, %v3665
    %v3667 = vlaneseq
    %v3668 = vshrl.u32 %v3667, 7
    %v3669 = vsub.s32 %v538, %v3668
    %v3670 = vrot.slane %v3601, %v3669
    %v3671 = vsel %vm543, %v3670, %v3666
    %v3672 = vlaneseq
    %v3673 = vshrl.u32 %v3672, 7
    %v3674 = vsub.s32 %v533, %v3673
    %v3675 = vrot.slane %v3604, %v3674
    %v3676 = vlaneseq
    %v3677 = vshrl.u32 %v3676, 7
    %v3678 = vsub.s32 %v538, %v3677
    %v3679 = vrot.slane %v3607, %v3678
    %v3680 = vsel %vm543, %v3679, %v3675
    %v3681 = vlaneseq
    %v3682 = vshrl.u32 %v3681, 7
    %v3683 = vsub.s32 %v533, %v3682
    %v3684 = vrot.slane %v3610, %v3683
    %v3685 = vlaneseq
    %v3686 = vshrl.u32 %v3685, 7
    %v3687 = vsub.s32 %v538, %v3686
    %v3688 = vrot.slane %v3613, %v3687
    %v3689 = vsel %vm543, %v3688, %v3684
    %v3690 = vlaneseq
    %v3691 = vshrl.u32 %v3690, 7
    %v3692 = vsub.s32 %v533, %v3691
    %v3693 = vrot.slane %v3616, %v3692
    %v3694 = vlaneseq
    %v3695 = vshrl.u32 %v3694, 7
    %v3696 = vsub.s32 %v538, %v3695
    %v3697 = vrot.slane %v3619, %v3696
    %v3698 = vsel %vm543, %v3697, %v3693
    %v3699 = vlaneseq
    %v3700 = vshrl.u32 %v3699, 7
    %v3701 = vsub.s32 %v533, %v3700
    %v3702 = vrot.slane %v3622, %v3701
    %v3703 = vlaneseq
    %v3704 = vshrl.u32 %v3703, 7
    %v3705 = vsub.s32 %v538, %v3704
    %v3706 = vrot.slane %v3625, %v3705
    %v3707 = vsel %vm543, %v3706, %v3702
    %v3708 = vlaneseq
    %v3709 = vshrl.u32 %v3708, 7
    %v3710 = vsub.s32 %v533, %v3709
    %v3711 = vrot.slane %v3628, %v3710
    %v3712 = vlaneseq
    %v3713 = vshrl.u32 %v3712, 7
    %v3714 = vsub.s32 %v538, %v3713
    %v3715 = vrot.slane %v3631, %v3714
    %v3716 = vsel %vm543, %v3715, %v3711
    %v3717 = vlaneseq
    %v3718 = vshrl.u32 %v3717, 7
    %v3719 = vsub.s32 %v533, %v3718
    %v3720 = vrot.slane %v3634, %v3719
    %v3721 = vlaneseq
    %v3722 = vshrl.u32 %v3721, 7
    %v3723 = vsub.s32 %v538, %v3722
    %v3724 = vrot.slane %v3637, %v3723
    %v3725 = vsel %vm543, %v3724, %v3720
    %v3726 = vsel %vm608, %v3671, %v3662
    %v3727 = vsel %vm610, %v3680, %v3726
    %v3728 = vsel %vm612, %v3689, %v3727
    %v3729 = vsel %vm614, %v3698, %v3728
    %v3730 = vsel %vm616, %v3707, %v3729
    %v3731 = vsel %vm618, %v3716, %v3730
    %v3732 = vsel %vm620, %v3725, %v3731
    %v3734 = vsel %vm623, %v3732, -inf
    %3735 = vmax.xlane.f32.xlu0 %v3734
    %v3736 = vpop.xlane.xlu0 %3735
    %v3738 = vlaneseq
    %v3739 = vshrl.u32 %v3738, 7
    %v3740 = vsub.s32 0, %v3739
    %v3741 = vrot.slane %v3736, %v3740
    %v3742 = vlaneseq
    %v3743 = vshrl.u32 %v3742, 7
    %v3744 = vsub.s32 1, %v3743
    %v3745 = vrot.slane %v3736, %v3744
    %v3746 = vlaneseq
    %v3747 = vshrl.u32 %v3746, 7
    %v3748 = vsub.s32 2, %v3747
    %v3749 = vrot.slane %v3736, %v3748
    %v3750 = vlaneseq
    %v3751 = vshrl.u32 %v3750, 7
    %v3752 = vsub.s32 3, %v3751
    %v3753 = vrot.slane %v3736, %v3752
    %v3754 = vlaneseq
    %v3755 = vshrl.u32 %v3754, 7
    %v3756 = vsub.s32 4, %v3755
    %v3757 = vrot.slane %v3736, %v3756
    %v3758 = vlaneseq
    %v3759 = vshrl.u32 %v3758, 7
    %v3760 = vsub.s32 5, %v3759
    %v3761 = vrot.slane %v3736, %v3760
    %v3762 = vlaneseq
    %v3763 = vshrl.u32 %v3762, 7
    %v3764 = vsub.s32 6, %v3763
    %v3765 = vrot.slane %v3736, %v3764
    %v3766 = vlaneseq
    %v3767 = vshrl.u32 %v3766, 7
    %v3768 = vsub.s32 7, %v3767
    %v3769 = vrot.slane %v3736, %v3768
    %v3778 = vsub.f32 %v3592, %v3741
    %v3779 = vsub.f32 %v3595, %v3741
    %v3780 = vsub.f32 %v3598, %v3745
    %v3781 = vsub.f32 %v3601, %v3745
    %v3782 = vsub.f32 %v3604, %v3749
    %v3783 = vsub.f32 %v3607, %v3749
    %v3784 = vsub.f32 %v3610, %v3753
    %v3785 = vsub.f32 %v3613, %v3753
    %v3786 = vsub.f32 %v3616, %v3757
    %v3787 = vsub.f32 %v3619, %v3757
    %v3788 = vsub.f32 %v3622, %v3761
    %v3789 = vsub.f32 %v3625, %v3761
    %v3790 = vsub.f32 %v3628, %v3765
    %v3791 = vsub.f32 %v3631, %v3765
    %v3792 = vsub.f32 %v3634, %v3769
    %v3793 = vsub.f32 %v3637, %v3769
    %v3794 = vmul.f32 %v3778, 1.442695
    %v3795 = vpow.pop %v3794
    %v3796 = vmul.f32 %v3779, 1.442695
    %v3797 = vpow.pop %v3796
    %v3798 = vmul.f32 %v3780, 1.442695
    %v3799 = vpow.pop %v3798
    %v3800 = vmul.f32 %v3781, 1.442695
    %v3801 = vpow.pop %v3800
    %v3802 = vmul.f32 %v3782, 1.442695
    %v3803 = vpow.pop %v3802
    %v3804 = vmul.f32 %v3783, 1.442695
    %v3805 = vpow.pop %v3804
    %v3806 = vmul.f32 %v3784, 1.442695
    %v3807 = vpow.pop %v3806
    %v3808 = vmul.f32 %v3785, 1.442695
    %v3809 = vpow.pop %v3808
    %v3810 = vmul.f32 %v3786, 1.442695
    %v3811 = vpow.pop %v3810
    %v3812 = vmul.f32 %v3787, 1.442695
    %v3813 = vpow.pop %v3812
    %v3814 = vmul.f32 %v3788, 1.442695
    %v3815 = vpow.pop %v3814
    %v3816 = vmul.f32 %v3789, 1.442695
    %v3817 = vpow.pop %v3816
    %v3818 = vmul.f32 %v3790, 1.442695
    %v3819 = vpow.pop %v3818
    %v3820 = vmul.f32 %v3791, 1.442695
    %v3821 = vpow.pop %v3820
    %v3822 = vmul.f32 %v3792, 1.442695
    %v3823 = vpow.pop %v3822
    %v3824 = vmul.f32 %v3793, 1.442695
    %v3825 = vpow.pop %v3824
    %3842 = vset.pattern.permute.xlu0 0
    %3843 = vperm.xlu0 %3842, %v3795
    %v3844 = vpop.permute.xlu0 %3843
    %3845 = vset.pattern.permute.xlu0 0
    %3846 = vperm.xlu0 %3845, %v3797
    %v3847 = vpop.permute.xlu0 %3846
    %3848 = vset.pattern.permute.xlu0 0
    %3849 = vperm.xlu0 %3848, %v3799
    %v3850 = vpop.permute.xlu0 %3849
    %3851 = vset.pattern.permute.xlu0 0
    %3852 = vperm.xlu0 %3851, %v3801
    %v3853 = vpop.permute.xlu0 %3852
    %3854 = vset.pattern.permute.xlu0 0
    %3855 = vperm.xlu0 %3854, %v3803
    %v3856 = vpop.permute.xlu0 %3855
    %3857 = vset.pattern.permute.xlu0 0
    %3858 = vperm.xlu0 %3857, %v3805
    %v3859 = vpop.permute.xlu0 %3858
    %3860 = vset.pattern.permute.xlu0 0
    %3861 = vperm.xlu0 %3860, %v3807
    %v3862 = vpop.permute.xlu0 %3861
    %3863 = vset.pattern.permute.xlu0 0
    %3864 = vperm.xlu0 %3863, %v3809
    %v3865 = vpop.permute.xlu0 %3864
    %3866 = vset.pattern.permute.xlu0 0
    %3867 = vperm.xlu0 %3866, %v3811
    %v3868 = vpop.permute.xlu0 %3867
    %3869 = vset.pattern.permute.xlu0 0
    %3870 = vperm.xlu0 %3869, %v3813
    %v3871 = vpop.permute.xlu0 %3870
    %3872 = vset.pattern.permute.xlu0 0
    %3873 = vperm.xlu0 %3872, %v3815
    %v3874 = vpop.permute.xlu0 %3873
    %3875 = vset.pattern.permute.xlu0 0
    %3876 = vperm.xlu0 %3875, %v3817
    %v3877 = vpop.permute.xlu0 %3876
    %3878 = vset.pattern.permute.xlu0 0
    %3879 = vperm.xlu0 %3878, %v3819
    %v3880 = vpop.permute.xlu0 %3879
    %3881 = vset.pattern.permute.xlu0 0
    %3882 = vperm.xlu0 %3881, %v3821
    %v3883 = vpop.permute.xlu0 %3882
    %3884 = vset.pattern.permute.xlu0 0
    %3885 = vperm.xlu0 %3884, %v3823
    %v3886 = vpop.permute.xlu0 %3885
    %3887 = vset.pattern.permute.xlu0 0
    %3888 = vperm.xlu0 %3887, %v3825
    %v3889 = vpop.permute.xlu0 %3888
    %v3890 = vlaneseq
    %v3891 = vshrl.u32 %v3890, 7
    %v3892 = vsub.s32 %v533, %v3891
    %v3893 = vrot.slane %v3844, %v3892
    %v3894 = vlaneseq
    %v3895 = vshrl.u32 %v3894, 7
    %v3896 = vsub.s32 %v538, %v3895
    %v3897 = vrot.slane %v3847, %v3896
    %v3898 = vsel %vm543, %v3897, %v3893
    %v3899 = vlaneseq
    %v3900 = vshrl.u32 %v3899, 7
    %v3901 = vsub.s32 %v533, %v3900
    %v3902 = vrot.slane %v3850, %v3901
    %v3903 = vlaneseq
    %v3904 = vshrl.u32 %v3903, 7
    %v3905 = vsub.s32 %v538, %v3904
    %v3906 = vrot.slane %v3853, %v3905
    %v3907 = vsel %vm543, %v3906, %v3902
    %v3908 = vlaneseq
    %v3909 = vshrl.u32 %v3908, 7
    %v3910 = vsub.s32 %v533, %v3909
    %v3911 = vrot.slane %v3856, %v3910
    %v3912 = vlaneseq
    %v3913 = vshrl.u32 %v3912, 7
    %v3914 = vsub.s32 %v538, %v3913
    %v3915 = vrot.slane %v3859, %v3914
    %v3916 = vsel %vm543, %v3915, %v3911
    %v3917 = vlaneseq
    %v3918 = vshrl.u32 %v3917, 7
    %v3919 = vsub.s32 %v533, %v3918
    %v3920 = vrot.slane %v3862, %v3919
    %v3921 = vlaneseq
    %v3922 = vshrl.u32 %v3921, 7
    %v3923 = vsub.s32 %v538, %v3922
    %v3924 = vrot.slane %v3865, %v3923
    %v3925 = vsel %vm543, %v3924, %v3920
    %v3926 = vlaneseq
    %v3927 = vshrl.u32 %v3926, 7
    %v3928 = vsub.s32 %v533, %v3927
    %v3929 = vrot.slane %v3868, %v3928
    %v3930 = vlaneseq
    %v3931 = vshrl.u32 %v3930, 7
    %v3932 = vsub.s32 %v538, %v3931
    %v3933 = vrot.slane %v3871, %v3932
    %v3934 = vsel %vm543, %v3933, %v3929
    %v3935 = vlaneseq
    %v3936 = vshrl.u32 %v3935, 7
    %v3937 = vsub.s32 %v533, %v3936
    %v3938 = vrot.slane %v3874, %v3937
    %v3939 = vlaneseq
    %v3940 = vshrl.u32 %v3939, 7
    %v3941 = vsub.s32 %v538, %v3940
    %v3942 = vrot.slane %v3877, %v3941
    %v3943 = vsel %vm543, %v3942, %v3938
    %v3944 = vlaneseq
    %v3945 = vshrl.u32 %v3944, 7
    %v3946 = vsub.s32 %v533, %v3945
    %v3947 = vrot.slane %v3880, %v3946
    %v3948 = vlaneseq
    %v3949 = vshrl.u32 %v3948, 7
    %v3950 = vsub.s32 %v538, %v3949
    %v3951 = vrot.slane %v3883, %v3950
    %v3952 = vsel %vm543, %v3951, %v3947
    %v3953 = vlaneseq
    %v3954 = vshrl.u32 %v3953, 7
    %v3955 = vsub.s32 %v533, %v3954
    %v3956 = vrot.slane %v3886, %v3955
    %v3957 = vlaneseq
    %v3958 = vshrl.u32 %v3957, 7
    %v3959 = vsub.s32 %v538, %v3958
    %v3960 = vrot.slane %v3889, %v3959
    %v3961 = vsel %vm543, %v3960, %v3956
    %v3962 = vsel %vm608, %v3907, %v3898
    %v3963 = vsel %vm610, %v3916, %v3962
    %v3964 = vsel %vm612, %v3925, %v3963
    %v3965 = vsel %vm614, %v3934, %v3964
    %v3966 = vsel %vm616, %v3943, %v3965
    %v3967 = vsel %vm618, %v3952, %v3966
    %v3968 = vsel %vm620, %v3961, %v3967
    %v3970 = vsel %vm623, %v3968, 0.0
    %3971 = vadd.xlane.f32.xlu0 %v3970
    %v3972 = vpop.xlane.xlu0 %3971
    %v3973 = vrcp.pop %v3972
    %v3975 = vlaneseq
    %v3976 = vshrl.u32 %v3975, 7
    %v3977 = vsub.s32 0, %v3976
    %v3978 = vrot.slane %v3973, %v3977
    %v3979 = vlaneseq
    %v3980 = vshrl.u32 %v3979, 7
    %v3981 = vsub.s32 1, %v3980
    %v3982 = vrot.slane %v3973, %v3981
    %v3983 = vlaneseq
    %v3984 = vshrl.u32 %v3983, 7
    %v3985 = vsub.s32 2, %v3984
    %v3986 = vrot.slane %v3973, %v3985
    %v3987 = vlaneseq
    %v3988 = vshrl.u32 %v3987, 7
    %v3989 = vsub.s32 3, %v3988
    %v3990 = vrot.slane %v3973, %v3989
    %v3991 = vlaneseq
    %v3992 = vshrl.u32 %v3991, 7
    %v3993 = vsub.s32 4, %v3992
    %v3994 = vrot.slane %v3973, %v3993
    %v3995 = vlaneseq
    %v3996 = vshrl.u32 %v3995, 7
    %v3997 = vsub.s32 5, %v3996
    %v3998 = vrot.slane %v3973, %v3997
    %v3999 = vlaneseq
    %v4000 = vshrl.u32 %v3999, 7
    %v4001 = vsub.s32 6, %v4000
    %v4002 = vrot.slane %v3973, %v4001
    %v4003 = vlaneseq
    %v4004 = vshrl.u32 %v4003, 7
    %v4005 = vsub.s32 7, %v4004
    %v4006 = vrot.slane %v3973, %v4005
    %v4015 = vmul.f32 %v3795, %v3978
    %v4016 = vmul.f32 %v3797, %v3978
    %v4017 = vmul.f32 %v3799, %v3982
    %v4018 = vmul.f32 %v3801, %v3982
    %v4019 = vmul.f32 %v3803, %v3986
    %v4020 = vmul.f32 %v3805, %v3986
    %v4021 = vmul.f32 %v3807, %v3990
    %v4022 = vmul.f32 %v3809, %v3990
    %v4023 = vmul.f32 %v3811, %v3994
    %v4024 = vmul.f32 %v3813, %v3994
    %v4025 = vmul.f32 %v3815, %v3998
    %v4026 = vmul.f32 %v3817, %v3998
    %v4027 = vmul.f32 %v3819, %v4002
    %v4028 = vmul.f32 %v3821, %v4002
    %v4029 = vmul.f32 %v3823, %v4006
    %v4030 = vmul.f32 %v3825, %v4006
    %4032 = vset.pattern.permute.xlu0 0
    %4033 = vperm.xlu0 %4032, %v4015
    %v4034 = vpop.permute.xlu0 %4033
    %4037 = vset.pattern.permute.xlu0 0
    %4038 = vperm.xlu0 %4037, %v4016
    %v4039 = vpop.permute.xlu0 %4038
    %4042 = vset.pattern.permute.xlu0 0
    %4043 = vperm.xlu0 %4042, %v4017
    %v4044 = vpop.permute.xlu0 %4043
    %4047 = vset.pattern.permute.xlu0 0
    %4048 = vperm.xlu0 %4047, %v4018
    %v4049 = vpop.permute.xlu0 %4048
    %4052 = vset.pattern.permute.xlu0 0
    %4053 = vperm.xlu0 %4052, %v4019
    %v4054 = vpop.permute.xlu0 %4053
    %4057 = vset.pattern.permute.xlu0 0
    %4058 = vperm.xlu0 %4057, %v4020
    %v4059 = vpop.permute.xlu0 %4058
    %4062 = vset.pattern.permute.xlu0 0
    %4063 = vperm.xlu0 %4062, %v4021
    %v4064 = vpop.permute.xlu0 %4063
    %4067 = vset.pattern.permute.xlu0 0
    %4068 = vperm.xlu0 %4067, %v4022
    %v4069 = vpop.permute.xlu0 %4068
    %4072 = vset.pattern.permute.xlu0 0
    %4073 = vperm.xlu0 %4072, %v4023
    %v4074 = vpop.permute.xlu0 %4073
    %4077 = vset.pattern.permute.xlu0 0
    %4078 = vperm.xlu0 %4077, %v4024
    %v4079 = vpop.permute.xlu0 %4078
    %4082 = vset.pattern.permute.xlu0 0
    %4083 = vperm.xlu0 %4082, %v4025
    %v4084 = vpop.permute.xlu0 %4083
    %4087 = vset.pattern.permute.xlu0 0
    %4088 = vperm.xlu0 %4087, %v4026
    %v4089 = vpop.permute.xlu0 %4088
    %4092 = vset.pattern.permute.xlu0 0
    %4093 = vperm.xlu0 %4092, %v4027
    %v4094 = vpop.permute.xlu0 %4093
    %4097 = vset.pattern.permute.xlu0 0
    %4098 = vperm.xlu0 %4097, %v4028
    %v4099 = vpop.permute.xlu0 %4098
    %4102 = vset.pattern.permute.xlu0 0
    %4103 = vperm.xlu0 %4102, %v4029
    %v4104 = vpop.permute.xlu0 %4103
    %4107 = vset.pattern.permute.xlu0 0
    %4108 = vperm.xlu0 %4107, %v4030
    %v4109 = vpop.permute.xlu0 %4108
    %v4111 = vmul.f32 %v4034, %v67
    %v4112 = vmul.f32 %v4039, %v68
    %v4113 = vmul.f32 %v4044, %v69
    %v4114 = vmul.f32 %v4049, %v70
    %v4115 = vmul.f32 %v4054, %v71
    %v4116 = vmul.f32 %v4059, %v72
    %v4117 = vmul.f32 %v4064, %v73
    %v4118 = vmul.f32 %v4069, %v74
    %v4119 = vmul.f32 %v4074, %v75
    %v4120 = vmul.f32 %v4079, %v76
    %v4121 = vmul.f32 %v4084, %v77
    %v4122 = vmul.f32 %v4089, %v78
    %v4123 = vmul.f32 %v4094, %v79
    %v4124 = vmul.f32 %v4099, %v80
    %v4125 = vmul.f32 %v4104, %v81
    %v4126 = vmul.f32 %v4109, %v82
    %v4127 = vsel %vm235, %v4111, 0.0
    %v4128 = vsel %vm470, %v4112, 0.0
    %v4129 = vadd.f32 %v4127, %v4128
    %v4130 = vrot.slane %v4129, 4
    %v4131 = vadd.f32 %v4129, %v4130
    %v4132 = vrot.slane %v4131, 2
    %v4133 = vadd.f32 %v4131, %v4132
    %v4134 = vrot.slane %v4133, 1
    %v4135 = vadd.f32 %v4133, %v4134
    %v4136 = vsel %vm235, %v4113, 0.0
    %v4137 = vsel %vm470, %v4114, 0.0
    %v4138 = vadd.f32 %v4136, %v4137
    %v4139 = vrot.slane %v4138, 4
    %v4140 = vadd.f32 %v4138, %v4139
    %v4141 = vrot.slane %v4140, 2
    %v4142 = vadd.f32 %v4140, %v4141
    %v4143 = vrot.slane %v4142, 1
    %v4144 = vadd.f32 %v4142, %v4143
    %v4145 = vsel %vm235, %v4115, 0.0
    %v4146 = vsel %vm470, %v4116, 0.0
    %v4147 = vadd.f32 %v4145, %v4146
    %v4148 = vrot.slane %v4147, 4
    %v4149 = vadd.f32 %v4147, %v4148
    %v4150 = vrot.slane %v4149, 2
    %v4151 = vadd.f32 %v4149, %v4150
    %v4152 = vrot.slane %v4151, 1
    %v4153 = vadd.f32 %v4151, %v4152
    %v4154 = vsel %vm235, %v4117, 0.0
    %v4155 = vsel %vm470, %v4118, 0.0
    %v4156 = vadd.f32 %v4154, %v4155
    %v4157 = vrot.slane %v4156, 4
    %v4158 = vadd.f32 %v4156, %v4157
    %v4159 = vrot.slane %v4158, 2
    %v4160 = vadd.f32 %v4158, %v4159
    %v4161 = vrot.slane %v4160, 1
    %v4162 = vadd.f32 %v4160, %v4161
    %v4163 = vsel %vm235, %v4119, 0.0
    %v4164 = vsel %vm470, %v4120, 0.0
    %v4165 = vadd.f32 %v4163, %v4164
    %v4166 = vrot.slane %v4165, 4
    %v4167 = vadd.f32 %v4165, %v4166
    %v4168 = vrot.slane %v4167, 2
    %v4169 = vadd.f32 %v4167, %v4168
    %v4170 = vrot.slane %v4169, 1
    %v4171 = vadd.f32 %v4169, %v4170
    %v4172 = vsel %vm235, %v4121, 0.0
    %v4173 = vsel %vm470, %v4122, 0.0
    %v4174 = vadd.f32 %v4172, %v4173
    %v4175 = vrot.slane %v4174, 4
    %v4176 = vadd.f32 %v4174, %v4175
    %v4177 = vrot.slane %v4176, 2
    %v4178 = vadd.f32 %v4176, %v4177
    %v4179 = vrot.slane %v4178, 1
    %v4180 = vadd.f32 %v4178, %v4179
    %v4181 = vsel %vm235, %v4123, 0.0
    %v4182 = vsel %vm470, %v4124, 0.0
    %v4183 = vadd.f32 %v4181, %v4182
    %v4184 = vrot.slane %v4183, 4
    %v4185 = vadd.f32 %v4183, %v4184
    %v4186 = vrot.slane %v4185, 2
    %v4187 = vadd.f32 %v4185, %v4186
    %v4188 = vrot.slane %v4187, 1
    %v4189 = vadd.f32 %v4187, %v4188
    %v4190 = vsel %vm235, %v4125, 0.0
    %v4191 = vsel %vm470, %v4126, 0.0
    %v4192 = vadd.f32 %v4190, %v4191
    %v4193 = vrot.slane %v4192, 4
    %v4194 = vadd.f32 %v4192, %v4193
    %v4195 = vrot.slane %v4194, 2
    %v4196 = vadd.f32 %v4194, %v4195
    %v4197 = vrot.slane %v4196, 1
    %v4198 = vadd.f32 %v4196, %v4197
    %v4207 = vsel %vm608, %v4144, %v4135
    %v4208 = vsel %vm610, %v4153, %v4207
    %v4209 = vsel %vm612, %v4162, %v4208
    %v4210 = vsel %vm614, %v4171, %v4209
    %v4211 = vsel %vm616, %v4180, %v4210
    %v4212 = vsel %vm618, %v4189, %v4211
    %v4213 = vsel %vm620, %v4198, %v4212
    %4215 = vrot.lane.b32.xlu0 %v3467, 64
    %v4216 = vpop.permute.xlu0 %4215
    %v4218 = vsel %vm235, %v4213, %v4216
    %v4220 = vsel %vm243, %v4218, 0
    %4222 = vmatprep.subr.mxu0 0.0
    %4223 = vmatpush1.msra.mxu0 %v59
    %4224 = vmatprep.subr.mxu0 0.0
    %4225 = vmatpush1.msra.mxu0 %v60
    %4226 = vmatprep.subr.mxu0 0.0
    %4227 = vmatpush1.msra.mxu0 %v61
    %4228 = vmatprep.subr.mxu0 0.0
    %4229 = vmatpush1.msra.mxu0 %v62
    %4230 = vmatprep.subr.mxu0 0.0
    %4231 = vmatpush1.msra.mxu0 %v63
    %4232 = vmatprep.subr.mxu0 0.0
    %4233 = vmatpush1.msra.mxu0 %v64
    %4234 = vmatprep.subr.mxu0 0.0
    %4235 = vmatpush1.msra.mxu0 %v65
    %4236 = vmatprep.subr.mxu0 0.0
    %4237 = vmatpush1.msra.mxu0 %v66
    %4238 = vmatprep.subr.mxu0 0.0
    %4239 = vmatpush1.msra.mxu0 0.0
    %4240 = vmatprep.subr.mxu0 0.0
    %4241 = vmatpush1.msra.mxu0 0.0
    %4242 = vmatprep.subr.mxu0 0.0
    %4243 = vmatpush1.msra.mxu0 0.0
    %4244 = vmatprep.subr.mxu0 0.0
    %4245 = vmatpush1.msra.mxu0 0.0
    %4246 = vmatprep.subr.mxu0 0.0
    %4247 = vmatpush1.msra.mxu0 0.0
    %4248 = vmatprep.subr.mxu0 0.0
    %4249 = vmatpush1.msra.mxu0 0.0
    %4250 = vmatprep.subr.mxu0 0.0
    %4251 = vmatpush1.msra.mxu0 0.0
    %4252 = vmatprep.subr.mxu0 0.0
    %4253 = vmatpush1.msra.mxu0 0.0
    %4254 = vmatprep.subr.mxu0 0.0
    %4255 = vmatpush1.msra.mxu0 0.0
    %4256 = vmatprep.subr.mxu0 0.0
    %4257 = vmatpush1.msra.mxu0 0.0
    %4258 = vmatprep.subr.mxu0 0.0
    %4259 = vmatpush1.msra.mxu0 0.0
    %4260 = vmatprep.subr.mxu0 0.0
    %4261 = vmatpush1.msra.mxu0 0.0
    %4262 = vmatprep.subr.mxu0 0.0
    %4263 = vmatpush1.msra.mxu0 0.0
    %4264 = vmatprep.subr.mxu0 0.0
    %4265 = vmatpush1.msra.mxu0 0.0
    %4266 = vmatprep.subr.mxu0 0.0
    %4267 = vmatpush1.msra.mxu0 0.0
    %4268 = vmatprep.subr.mxu0 0.0
    %4269 = vmatpush1.msra.mxu0 0.0
    %4270 = vmatprep.subr.mxu0 0.0
    %4271 = vmatpush1.msra.mxu0 0.0
    %4272 = vmatprep.subr.mxu0 0.0
    %4273 = vmatpush1.msra.mxu0 0.0
    %4274 = vmatprep.subr.mxu0 0.0
    %4275 = vmatpush1.msra.mxu0 0.0
    %4276 = vmatprep.subr.mxu0 0.0
    %4277 = vmatpush1.msra.mxu0 0.0
    %4278 = vmatprep.subr.mxu0 0.0
    %4279 = vmatpush1.msra.mxu0 0.0
    %4280 = vmatprep.subr.mxu0 0.0
    %4281 = vmatpush1.msra.mxu0 0.0
    %4282 = vmatprep.subr.mxu0 0.0
    %4283 = vmatpush1.msra.mxu0 0.0
    %4284 = vmatprep.subr.mxu0 0.0
    %4285 = vmatpush1.msra.mxu0 0.0
    %4286 = vmatprep.mubr.f32.mxu0 0.0
    %4287 = vmatmul.mubr.f32.gmra.mrb[0].mxu0 %v4220
    %v4288 = vpop.f32.mrb[0].mxu0
    %v4289 = vadd.f32 0.0, %v4288
    %v4290 = vpop.f32.mrb[0].mxu0
    %4291 = vdwg.mxu0
    %v4292 = vtanh.pop %v4289
    %s4293 = scalar_lea.vmem [#allocation2], 24
    %4294 = vst.msk [vmem:[%s4293] sm:$0xff] %vm235, %v4292
    // Predicated region
    $region46: #{tpu_custom_call.1} parent=1 // pred_check
      _
    $region47: #{tpu_custom_call.1} parent=1 // pred_check_branch
      %4296 = sbr.rel (0) target = $region49
    $region48: #{tpu_custom_call.1} parent=1 // pred_region
      %s4298 = ssub.s32 512, 512
      %4299 = vsyncadd [#allocation3], %s4298
      %s4300 = sshll.u32 [#allocation2], 4
      %s4301 = int_to_ptr.vmem [resolvable:$true] %s4300
      %4306 = dma.vmem_to_hbm [thread:$0]  %s4301, 512, %s11, [#allocation3], 128, 128, 8
    $region49: #{tpu_custom_call.1} parent=1 // pred_fallthru
      _
    // Predicated region
    $region50: #{tpu_custom_call.1} parent=1 // pred_check
      _
    $region51: #{tpu_custom_call.1} parent=1 // pred_check_branch
      %4308 = sbr.rel (0) target = $region53
    $region52: #{tpu_custom_call.1} parent=1 // pred_region
      %4309 = dma.done [#allocation3], 512
    $region53: #{tpu_custom_call.1} parent=1 // pred_fallthru
      _
    %4310 = vsyncpa [#allocation3], 1

</llo_original>
